<compile_context>
chip_gen: v6e
topology: v6e:2x2x1
jax: 0.10.0
libtpu: 0.0.40
codegen_flags: <defaults>
</compile_context>

<pallas_src>
import jax
import jax.numpy as jnp
from jax.experimental import pallas as pl
from jax.experimental.pallas import tpu as pltpu


def _round_up(x, m):
    return (x + m - 1) // m * m


def _vmem_capacity_bytes():
    try:
        return int(pltpu.get_tpu_info().vmem_capacity_bytes)
    except Exception:
        return 64 * 1024 * 1024


def _pick_deconv_rows(h, w8, cin, cols, cap, itemsize):
    budget = min(int(cap * 0.35), 24 << 20)
    per_row = w8 * (2 * cin * itemsize + 2 * cols * itemsize + 6 * cols)
    tr = int(max(1, min(budget // max(per_row, 1), h, 512)))
    while h % tr:          # largest divisor of h that fits the budget
        tr -= 1
    return tr


def _pick_conv_rows(h_out, wp, cc, co, cap, itemsize):
    budget = min(int(cap * 0.45), 48 << 20)
    fixed = (2 * 9 * cc * co * itemsize          # double-buffered weight slab
             + 2 * 2 * wp * cc * itemsize        # double-buffered halo block
             + (2 << 20))                        # misc headroom
    per_row = wp * (3 * cc * itemsize            # 2x main dbuf + 1x scratch
                    + 2 * co * itemsize          # out dbuf
                    + 3 * co * 4)                # f32 acc/part temporaries
    th = (budget - fixed) // max(per_row, 1)
    th = int(max(2, min(th, 256, _round_up(h_out, 2))))
    return th - (th % 2)


# ---------------------------------------------------------------------------
# Kernel 1: ConvTranspose2d(Cin, Cin//2, k=2, s=2) + BN + ReLU.
# For each output-row parity di, the deconv is one matmul over input pixels:
#   (tr*W8, Cin) @ (Cin, 2*Cup_p) -> (tr*W8, 2*Cup_p), columns ordered (dj, c).
# The output array (B, H, 2, W8, 2*Cup_p) is row-major bit-identical to the
# interleaved NHWC map (B, 2H, 2*W8, Cup_p), so no transpose pass is needed.
# BN scale is folded into the weights; the kernel adds bias (f32) + ReLU.
# ---------------------------------------------------------------------------
def _deconv_bn_relu_kernel(x_ref, w_ref, b_ref, o_ref):
    _, tr, w8, cin = x_ref.shape
    cols = o_ref.shape[-1]
    x2 = x_ref[0].reshape(tr * w8, cin)                 # layout-trivial: w8 % 8 == 0
    y = jnp.dot(x2, w_ref[0], preferred_element_type=jnp.float32)
    y = jnp.maximum(y + b_ref[...], 0.0)
    o_ref[0, :, 0, :, :] = y.reshape(tr, w8, cols).astype(o_ref.dtype)


def deconv_bn_relu(x4, w_mat, bias, *, tile_r, vmem_limit):
    """x4: (B, H, W8, Cin); w_mat: (2, Cin, 2*Cup_p); bias: (1, 2*Cup_p) f32.
    Returns (B, H, 2, W8, 2*Cup_p) in x4.dtype."""
    b, h, w8, cin = x4.shape
    cols = w_mat.shape[2]
    assert h % tile_r == 0 and w8 % 8 == 0 and cols % 128 == 0
    n_rt = h // tile_r

    ib = x4.dtype.itemsize
    flops = 2 * b * h * w8 * cin * 2 * cols
    bytes_accessed = int(ib * (b * h * w8 * cin + 2 * cin * cols
                               + b * h * 2 * w8 * cols) + 4 * cols)

    return pl.pallas_call(
        _deconv_bn_relu_kernel,
        out_shape=jax.ShapeDtypeStruct((b, h, 2, w8, cols), x4.dtype),
        grid=(b, n_rt, 2),
        in_specs=[
            pl.BlockSpec((1, tile_r, w8, cin), lambda bi, t, di: (bi, t, 0, 0)),
            pl.BlockSpec((1, cin, cols), lambda bi, t, di: (di, 0, 0)),
            pl.BlockSpec((1, cols), lambda bi, t, di: (0, 0)),
        ],
        out_specs=pl.BlockSpec((1, tile_r, 1, w8, cols),
                               lambda bi, t, di: (bi, t, di, 0, 0)),
        compiler_params=pltpu.CompilerParams(
            dimension_semantics=("parallel", "parallel", "arbitrary"),
            vmem_limit_bytes=vmem_limit),
        cost_estimate=pl.CostEstimate(flops=flops, transcendentals=0,
                                      bytes_accessed=bytes_accessed),
    )(x4, w_mat, bias)


# ---------------------------------------------------------------------------
# Kernel 2: Conv2d(Ccat, Cout, k=3, s=1, p=1) + BN + ReLU on the pre-built,
# spatially padded, channel-concatenated activation (channels = [up, skip, 0]).
# Per grid step (batch b, row tile t): stitch TH main rows + 2 halo rows into
# a contiguous VMEM window, flatten (layout-trivially, wp % 8 == 0), and run
# 9 tap matmuls with full K = Ccat_p; kx shift via pltpu.roll on the partial.
# ---------------------------------------------------------------------------
def _conv3x3_bn_relu_kernel(x_ref, halo_ref, w_ref, b_ref, o_ref, cbuf):
    th = o_ref.shape[1]
    wp = o_ref.shape[2]
    co = o_ref.shape[3]
    cc = x_ref.shape[3]
    m = th * wp

    # Stitch main rows + halo rows into one contiguous window.
    cbuf[pl.ds(0, th)] = x_ref[0]
    cbuf[pl.ds(th, 2)] = halo_ref[0]

    c2d = cbuf[...].reshape((th + 2) * wp, cc)          # layout-trivial
    slab = [c2d[ky * wp:ky * wp + m] for ky in range(3)]

    # Bias-initialized accumulator + 9 tap matmuls (single chain per kx).
    acc = jnp.broadcast_to(b_ref[...], (m, co))
    for kx in range(3):
        part = jnp.dot(slab[0], w_ref[kx], preferred_element_type=jnp.float32)
        part = part + jnp.dot(slab[1], w_ref[3 + kx],
                              preferred_element_type=jnp.float32)
        part = part + jnp.dot(slab[2], w_ref[6 + kx],
                              preferred_element_type=jnp.float32)
        if kx:
            # acc[f] needs part[f + kx]: rotate by -kx (as positive m - kx).
            # Wrap-around only lands in the discarded right-pad columns
            # (guaranteed by wp >= w_out + 2, asserted in the wrapper).
            part = pltpu.roll(part, m - kx, 0)
        acc = acc + part

    o_ref[0] = jnp.maximum(acc, 0.0).reshape(th, wp, co).astype(o_ref.dtype)


def conv3x3_bn_relu(cat_pad, w9, bias, *, tile_h, vmem_limit):
    b, rows, wp, cc = cat_pad.shape
    co = w9.shape[2]
    th = tile_h
    assert th % 2 == 0 and wp % 8 == 0 and cc % 128 == 0 and co % 128 == 0
    n_t = (rows - 2) // th
    assert rows == n_t * th + 2
    hout_p = n_t * th

    ib = cat_pad.dtype.itemsize
    flops = 2 * 9 * b * hout_p * wp * cc * co
    bytes_accessed = int(ib * (b * rows * wp * cc + b * hout_p * wp * co
                               + 9 * cc * co) + 4 * co)

    main_map = lambda bi, ti: (bi, ti, 0, 0)
    halo_map = lambda bi, ti: (bi, (ti + 1) * (th // 2), 0, 0)

    return pl.pallas_call(
        _conv3x3_bn_relu_kernel,
        out_shape=jax.ShapeDtypeStruct((b, hout_p, wp, co), cat_pad.dtype),
        grid=(b, n_t),
        in_specs=[
            pl.BlockSpec((1, th, wp, cc), main_map),
            pl.BlockSpec((1, 2, wp, cc), halo_map),
            pl.BlockSpec((9, cc, co), lambda bi, ti: (0, 0, 0)),
            pl.BlockSpec((1, co), lambda bi, ti: (0, 0)),
        ],
        out_specs=pl.BlockSpec((1, th, wp, co), main_map),
        scratch_shapes=[pltpu.VMEM((th + 2, wp, cc), cat_pad.dtype)],
        compiler_params=pltpu.CompilerParams(
            dimension_semantics=("parallel", "parallel"),
            vmem_limit_bytes=vmem_limit),
        cost_estimate=pl.CostEstimate(flops=flops, transcendentals=0,
                                      bytes_accessed=bytes_accessed),
    )(cat_pad, cat_pad, w9, bias)


# ---------------------------------------------------------------------------
# Full UpBlock forward.  decoder_feat: (B, in_ch, H, W) NCHW,
# skip_feat: (B, skip_ch, 2H, 2W) NCHW  ->  (B, out_ch, 2H, 2W) NCHW (f32).
# compute_dtype=bf16 by default (MXU-native, f32 accumulation); pass
# jnp.float32 to reproduce full-precision reference numerics.
# ---------------------------------------------------------------------------
def up_block_forward(decoder_feat, skip_feat, params, *,
                     compute_dtype=jnp.bfloat16):
    eps = 1e-5
    b, c_in, h, w = decoder_feat.shape
    c_up = c_in // 2
    c_skip = skip_feat.shape[1]
    c_out = params["conv_w"].shape[0]
    h_out, w_out = 2 * h, 2 * w
    itemsize = jnp.dtype(compute_dtype).itemsize

    cap = _vmem_capacity_bytes()
    vmem_limit = int(min(cap * 0.7, 100 * 1024 * 1024))

    c_up_p = _round_up(c_up, 64)                 # 2*c_up_p is a multiple of 128
    c_out_p = _round_up(c_out, 128)              # lane-dense output stores
    c_cat_p = _round_up(c_up_p + c_skip, 128)    # single concat K dim
    w8 = _round_up(w, 8)
    assert (2 * c_up_p) % 128 == 0 and c_cat_p % 128 == 0 and c_out_p % 128 == 0

    # ---- stage 1: ConvTranspose2d(k=2, s=2) + BN + ReLU -------------------
    s1 = params["bn1_g"] / jnp.sqrt(params["bn1_var"] + eps)            # (Cup,)
    t1 = params["bn1_b"] + (params["deconv_b"] - params["bn1_mean"]) * s1

    # deconv_w: (Cin, Cup, 2, 2) -> per-di weight (2, Cin, 2*Cup_p), cols (dj, c)
    wd = jnp.transpose(params["deconv_w"], (2, 3, 0, 1)) * s1            # (di,dj,Cin,Cup)
    wd = jnp.pad(wd, ((0, 0), (0, 0), (0, 0), (0, c_up_p - c_up)))
    w_mat = jnp.transpose(wd, (0, 2, 1, 3)).reshape(2, c_in, 2 * c_up_p)
    w_mat = w_mat.astype(compute_dtype)
    bias1 = jnp.pad(t1, (0, c_up_p - c_up))
    bias1 = jnp.tile(bias1, 2).reshape(1, 2 * c_up_p).astype(jnp.float32)

    x_nhwc = jnp.transpose(decoder_feat, (0, 2, 3, 1)).astype(compute_dtype)
    if w8 != w:
        x_nhwc = jnp.pad(x_nhwc, ((0, 0), (0, 0), (0, w8 - w), (0, 0)))

    tr = _pick_deconv_rows(h, w8, c_in, 2 * c_up_p, cap, itemsize)
    o5 = deconv_bn_relu(x_nhwc, w_mat, bias1, tile_r=tr, vmem_limit=vmem_limit)
    # (B, H, 2, W8, 2*Cup_p) is bit-identical (row-major) to the interleaved
    # NHWC upsampled map (B, 2H, 2*W8, Cup_p): free reshape, no transpose pass.
    up = o5.reshape(b, h_out, 2 * w8, c_up_p)
    if 2 * w8 != w_out:
        up = up[:, :, :w_out, :]

    # ---- stage 2: concat([up, skip]) -> Conv3x3 + BN + ReLU ---------------
    wp = _round_up(w_out + 2, 8)                 # padded row width (8-aligned)
    assert wp >= w_out + 2                       # roll wrap-around safety
    th = _pick_conv_rows(h_out, wp, c_cat_p, c_out_p, cap, itemsize)
    n_t = -(-h_out // th)
    h_out_p = n_t * th

    s2 = params["bn2_g"] / jnp.sqrt(params["bn2_var"] + eps)            # (Cout,)
    t2 = params["bn2_b"] + (params["conv_b"] - params["bn2_mean"]) * s2
    wc = params["conv_w"] * s2[:, None, None, None]                     # (Cout,Ccat,3,3)
    wc9 = jnp.transpose(wc, (2, 3, 1, 0)).reshape(9, c_skip + c_up, c_out)
    # cat channel order in this implementation: [up (c_up_p), skip (c_skip), 0-pad]
    w_up = jnp.pad(wc9[:, c_skip:, :],
                   ((0, 0), (0, c_up_p - c_up), (0, c_out_p - c_out)))
    w_sk = jnp.pad(wc9[:, :c_skip, :],
                   ((0, 0), (0, c_cat_p - c_up_p - c_skip), (0, c_out_p - c_out)))
    w9 = jnp.concatenate([w_up, w_sk], axis=1).astype(compute_dtype)
    bias2 = jnp.pad(t2, (0, c_out_p - c_out)).reshape(1, c_out_p)
    bias2 = bias2.astype(jnp.float32)

    skip_nhwc = jnp.transpose(skip_feat, (0, 2, 3, 1)).astype(compute_dtype)
    cat = jnp.concatenate([up, skip_nhwc], axis=-1)
    cat_pad = jnp.pad(cat, ((0, 0),
                            (1, h_out_p + 1 - h_out),
                            (1, wp - w_out - 1),
                            (0, c_cat_p - c_up_p - c_skip)))

    out = conv3x3_bn_relu(cat_pad, w9, bias2, tile_h=th, vmem_limit=vmem_limit)
    out = out[:, :h_out, :w_out, :c_out]
    return jnp.transpose(out, (0, 3, 1, 2)).astype(jnp.float32)          # NCHW


# ---------------------------------------------------------------------------
# Plain-JAX reference (inference-mode BN), for a numerical sanity check.
# ---------------------------------------------------------------------------
def up_block_reference(decoder_feat, skip_feat, params):
    eps = 1e-5
    hp = jax.lax.Precision.HIGHEST
    x = decoder_feat.astype(jnp.float32)
    n, _, h, w = x.shape
    wd = params["deconv_w"]                                  # (Cin, Cup, 2, 2)
    y = jnp.einsum("nihw,iode->nohdwe", x, wd, precision=hp)
    y = y.reshape(n, wd.shape[1], 2 * h, 2 * w)
    y = y + params["deconv_b"][None, :, None, None]
    s1 = params["bn1_g"] / jnp.sqrt(params["bn1_var"] + eps)
    y = (y - params["bn1_mean"][None, :, None, None]) * s1[None, :, None, None] \
        + params["bn1_b"][None, :, None, None]
    up = jnp.maximum(y, 0.0)

    fused = jnp.concatenate([skip_feat.astype(jnp.float32), up], axis=1)
    z = jax.lax.conv_general_dilated(
        fused, params["conv_w"], window_strides=(1, 1),
        padding=((1, 1), (1, 1)),
        dimension_numbers=("NCHW", "OIHW", "NCHW"), precision=hp)
    z = z + params["conv_b"][None, :, None, None]
    s2 = params["bn2_g"] / jnp.sqrt(params["bn2_var"] + eps)
    z = (z - params["bn2_mean"][None, :, None, None]) * s2[None, :, None, None] \
        + params["bn2_b"][None, :, None, None]
    return jnp.maximum(z, 0.0)


if __name__ == "__main__":
    B, in_ch, skip_ch, out_ch = 2, 8, 4, 8
    H = W = 8                                    # decoder spatial; skip is 2H x 2W
    Cup = in_ch // 2
    Ccat = Cup + skip_ch

    key = jax.random.PRNGKey(0)
    ks = jax.random.split(key, 14)
    params = {
        "deconv_w": 0.1 * jax.random.normal(ks[0], (in_ch, Cup, 2, 2), jnp.float32),
        "deconv_b": 0.1 * jax.random.normal(ks[1], (Cup,), jnp.float32),
        "bn1_g": 1.0 + 0.1 * jax.random.normal(ks[2], (Cup,), jnp.float32),
        "bn1_b": 0.1 * jax.random.normal(ks[3], (Cup,), jnp.float32),
        "bn1_mean": 0.1 * jax.random.normal(ks[4], (Cup,), jnp.float32),
        "bn1_var": jax.random.uniform(ks[5], (Cup,), jnp.float32, 0.5, 1.5),
        "conv_w": 0.1 * jax.random.normal(ks[6], (out_ch, Ccat, 3, 3), jnp.float32),
        "conv_b": 0.1 * jax.random.normal(ks[7], (out_ch,), jnp.float32),
        "bn2_g": 1.0 + 0.1 * jax.random.normal(ks[8], (out_ch,), jnp.float32),
        "bn2_b": 0.1 * jax.random.normal(ks[9], (out_ch,), jnp.float32),
        "bn2_mean": 0.1 * jax.random.normal(ks[10], (out_ch,), jnp.float32),
        "bn2_var": jax.random.uniform(ks[11], (out_ch,), jnp.float32, 0.5, 1.5),
    }

    decoder_feat = jax.random.normal(ks[12], (B, in_ch, H, W), jnp.float32)
    skip_feat = jax.random.normal(ks[13], (B, skip_ch, 2 * H, 2 * W), jnp.float32)

    out = jax.jit(up_block_forward)(decoder_feat, skip_feat, params)
    out = jax.block_until_ready(out)
    assert out.shape == (B, out_ch, 2 * H, 2 * W), out.shape
    assert bool(jnp.all(jnp.isfinite(out)))

    ref = up_block_reference(decoder_feat, skip_feat, params)
    max_err = float(jnp.max(jnp.abs(out - ref)))
    assert bool(jnp.allclose(out, ref, rtol=5e-2, atol=5e-2)), max_err

    print("KERNEL_OK")
</pallas_src>

<mosaic_0001>
module attributes {stable_mosaic.version = 11 : i64} {
  func.func @_deconv_bn_relu_kernel(%arg0: i32, %arg1: i32, %arg2: i32, %arg3: memref<1x8x8x8xbf16, #tpu.memory_space<vmem>>, %arg4: memref<1x8x128xbf16, #tpu.memory_space<vmem>>, %arg5: memref<1x128xf32, #tpu.memory_space<vmem>>, %arg6: memref<1x8x1x8x128xbf16, #tpu.memory_space<vmem>>) attributes {dimension_semantics = [#tpu.dimension_semantics<parallel>, #tpu.dimension_semantics<parallel>, #tpu.dimension_semantics<arbitrary>], iteration_bounds = array<i64: 2, 1, 2>, scalar_prefetch = 0 : i64, scratch_operands = 0 : i64, tpu.core_type = #tpu.core_type<tc>, window_params = [{transform_indices = @transform_0, window_bounds = array<i64: 1, 8, 8, 8>}, {transform_indices = @transform_1, window_bounds = array<i64: 1, 8, 128>}, {pipeline_mode = #tpu.pipeline_mode<synchronous>, transform_indices = @transform_2, window_bounds = array<i64: 1, 128>}, {transform_indices = @transform_3, window_bounds = array<i64: 1, 8, 1, 8, 128>}]} {
    %c0 = arith.constant 0 : index
    %c0_0 = arith.constant 0 : index
    %c0_1 = arith.constant 0 : index
    %c0_2 = arith.constant 0 : index
    %0 = vector.load %arg3[%c0, %c0_0, %c0_1, %c0_2] : memref<1x8x8x8xbf16, #tpu.memory_space<vmem>>, vector<1x8x8x8xbf16>
    %1 = vector.shape_cast %0 : vector<1x8x8x8xbf16> to vector<8x8x8xbf16>
    %2 = vector.shape_cast %1 : vector<8x8x8xbf16> to vector<64x8xbf16>
    %c0_3 = arith.constant 0 : index
    %c0_4 = arith.constant 0 : index
    %c0_5 = arith.constant 0 : index
    %3 = vector.load %arg4[%c0_3, %c0_4, %c0_5] : memref<1x8x128xbf16, #tpu.memory_space<vmem>>, vector<1x8x128xbf16>
    %4 = vector.shape_cast %3 : vector<1x8x128xbf16> to vector<8x128xbf16>
    %cst = arith.constant dense<0.000000e+00> : vector<64x128xf32>
    %5 = tpu.matmul %2, %4, %cst {dimension_numbers = #tpu.dot_dimension_numbers<[1], [0], [0], [1], [0, 0, 1, 1], [], []>} : vector<64x8xbf16>, vector<8x128xbf16>, vector<64x128xf32> -> vector<64x128xf32>
    %c0_6 = arith.constant 0 : index
    %c0_7 = arith.constant 0 : index
    %6 = vector.load %arg5[%c0_6, %c0_7] : memref<1x128xf32, #tpu.memory_space<vmem>>, vector<1x128xf32>
    %7 = vector.broadcast %6 : vector<1x128xf32> to vector<64x128xf32>
    %8 = arith.addf %5, %7 : vector<64x128xf32>
    %cst_8 = arith.constant 0.000000e+00 : f32
    %9 = vector.broadcast %cst_8 : f32 to vector<64x128xf32>
    %10 = arith.maximumf %8, %9 : vector<64x128xf32>
    %11 = vector.shape_cast %10 : vector<64x128xf32> to vector<8x8x128xf32>
    %12 = arith.truncf %11 : vector<8x8x128xf32> to vector<8x8x128xbf16>
    %c0_9 = arith.constant 0 : index
    %c0_10 = arith.constant 0 : index
    %c0_11 = arith.constant 0 : index
    %c0_12 = arith.constant 0 : index
    %c0_13 = arith.constant 0 : index
    %13 = vector.load %arg6[%c0_9, %c0_10, %c0_11, %c0_12, %c0_13] : memref<1x8x1x8x128xbf16, #tpu.memory_space<vmem>>, vector<1x8x1x8x128xbf16>
    %14 = vector.shape_cast %13 : vector<1x8x1x8x128xbf16> to vector<8x8x128xbf16>
    %15 = vector.shape_cast %12 : vector<8x8x128xbf16> to vector<1x8x1x8x128xbf16>
    tpu.vector_store %arg6[%c0_9, %c0_10, %c0_11, %c0_12, %c0_13], %15 {strides = array<i32>} : memref<1x8x1x8x128xbf16, #tpu.memory_space<vmem>>, vector<1x8x1x8x128xbf16>,
    return
  }
  func.func @transform_0(%arg0: i32, %arg1: i32, %arg2: i32) -> (i32, i32, i32, i32) {
    %c0_i32 = arith.constant 0 : i32
    %c0_i32_0 = arith.constant 0 : i32
    %c0_i32_1 = arith.constant 0 : i32
    return %arg0, %arg1, %c0_i32, %c0_i32_0 : i32, i32, i32, i32
  }
  func.func @transform_1(%arg0: i32, %arg1: i32, %arg2: i32) -> (i32, i32, i32) {
    %c0_i32 = arith.constant 0 : i32
    %c0_i32_0 = arith.constant 0 : i32
    %c0_i32_1 = arith.constant 0 : i32
    return %arg2, %c0_i32, %c0_i32_0 : i32, i32, i32
  }
  func.func @transform_2(%arg0: i32, %arg1: i32, %arg2: i32) -> (i32, i32) {
    %c0_i32 = arith.constant 0 : i32
    %c0_i32_0 = arith.constant 0 : i32
    %c0_i32_1 = arith.constant 0 : i32
    return %c0_i32, %c0_i32_0 : i32, i32
  }
  func.func @transform_3(%arg0: i32, %arg1: i32, %arg2: i32) -> (i32, i32, i32, i32, i32) {
    %c0_i32 = arith.constant 0 : i32
    %c0_i32_0 = arith.constant 0 : i32
    %c0_i32_1 = arith.constant 0 : i32
    return %arg0, %arg1, %arg2, %c0_i32, %c0_i32_0 : i32, i32, i32, i32, i32
  }
}

module attributes {stable_mosaic.version = 11 : i64} {
  func.func @_conv3x3_bn_relu_kernel(%arg0: i32, %arg1: i32, %arg2: memref<1x16x24x128xbf16, #tpu.memory_space<vmem>>, %arg3: memref<1x2x24x128xbf16, #tpu.memory_space<vmem>>, %arg4: memref<9x128x128xbf16, #tpu.memory_space<vmem>>, %arg5: memref<1x128xf32, #tpu.memory_space<vmem>>, %arg6: memref<1x16x24x128xbf16, #tpu.memory_space<vmem>>, %arg7: memref<18x24x128xbf16, #tpu.memory_space<vmem>>) attributes {dimension_semantics = [#tpu.dimension_semantics<parallel>, #tpu.dimension_semantics<parallel>], iteration_bounds = array<i64: 2, 1>, scalar_prefetch = 0 : i64, scratch_operands = 1 : i64, tpu.core_type = #tpu.core_type<tc>, window_params = [{transform_indices = @transform_0, window_bounds = array<i64: 1, 16, 24, 128>}, {transform_indices = @transform_1, window_bounds = array<i64: 1, 2, 24, 128>}, {pipeline_mode = #tpu.pipeline_mode<synchronous>, transform_indices = @transform_2, window_bounds = array<i64: 9, 128, 128>}, {pipeline_mode = #tpu.pipeline_mode<synchronous>, transform_indices = @transform_3, window_bounds = array<i64: 1, 128>}, {transform_indices = @transform_4, window_bounds = array<i64: 1, 16, 24, 128>}]} {
    %c0 = arith.constant 0 : index
    %c0_0 = arith.constant 0 : index
    %c0_1 = arith.constant 0 : index
    %c0_2 = arith.constant 0 : index
    %0 = vector.load %arg2[%c0, %c0_0, %c0_1, %c0_2] : memref<1x16x24x128xbf16, #tpu.memory_space<vmem>>, vector<1x16x24x128xbf16>
    %1 = vector.shape_cast %0 : vector<1x16x24x128xbf16> to vector<16x24x128xbf16>
    %c0_3 = arith.constant 0 : index
    %c0_4 = arith.constant 0 : index
    %c0_5 = arith.constant 0 : index
    %2 = vector.load %arg7[%c0_3, %c0_4, %c0_5] : memref<18x24x128xbf16, #tpu.memory_space<vmem>>, vector<16x24x128xbf16>
    tpu.vector_store %arg7[%c0_3, %c0_4, %c0_5], %1 {strides = array<i32>} : memref<18x24x128xbf16, #tpu.memory_space<vmem>>, vector<16x24x128xbf16>,
    %c0_6 = arith.constant 0 : index
    %c0_7 = arith.constant 0 : index
    %c0_8 = arith.constant 0 : index
    %c0_9 = arith.constant 0 : index
    %3 = vector.load %arg3[%c0_6, %c0_7, %c0_8, %c0_9] : memref<1x2x24x128xbf16, #tpu.memory_space<vmem>>, vector<1x2x24x128xbf16>
    %4 = vector.shape_cast %3 : vector<1x2x24x128xbf16> to vector<2x24x128xbf16>
    %c16 = arith.constant 16 : index
    %c0_10 = arith.constant 0 : index
    %c0_11 = arith.constant 0 : index
    %5 = vector.load %arg7[%c16, %c0_10, %c0_11] : memref<18x24x128xbf16, #tpu.memory_space<vmem>>, vector<2x24x128xbf16>
    tpu.vector_store %arg7[%c16, %c0_10, %c0_11], %4 {strides = array<i32>} : memref<18x24x128xbf16, #tpu.memory_space<vmem>>, vector<2x24x128xbf16>,
    %c0_12 = arith.constant 0 : index
    %c0_13 = arith.constant 0 : index
    %c0_14 = arith.constant 0 : index
    %6 = vector.load %arg7[%c0_12, %c0_13, %c0_14] : memref<18x24x128xbf16, #tpu.memory_space<vmem>>, vector<18x24x128xbf16>
    %7 = vector.shape_cast %6 : vector<18x24x128xbf16> to vector<432x128xbf16>
    %8 = vector.extract_strided_slice %7 {offsets = [0, 0], sizes = [384, 128], strides = [1, 1]} : vector<432x128xbf16> to vector<384x128xbf16>
    %9 = vector.extract_strided_slice %7 {offsets = [24, 0], sizes = [384, 128], strides = [1, 1]} : vector<432x128xbf16> to vector<384x128xbf16>
    %10 = vector.extract_strided_slice %7 {offsets = [48, 0], sizes = [384, 128], strides = [1, 1]} : vector<432x128xbf16> to vector<384x128xbf16>
    %c0_15 = arith.constant 0 : index
    %c0_16 = arith.constant 0 : index
    %11 = vector.load %arg5[%c0_15, %c0_16] : memref<1x128xf32, #tpu.memory_space<vmem>>, vector<1x128xf32>
    %12 = vector.shape_cast %11 : vector<1x128xf32> to vector<1x128xf32>
    %13 = vector.broadcast %12 : vector<1x128xf32> to vector<384x128xf32>
    %c0_17 = arith.constant 0 : index
    %c0_18 = arith.constant 0 : index
    %c0_19 = arith.constant 0 : index
    %14 = vector.load %arg4[%c0_17, %c0_18, %c0_19] : memref<9x128x128xbf16, #tpu.memory_space<vmem>>, vector<1x128x128xbf16>
    %15 = vector.shape_cast %14 : vector<1x128x128xbf16> to vector<128x128xbf16>
    %cst = arith.constant dense<0.000000e+00> : vector<384x128xf32>
    %16 = tpu.matmul %8, %15, %cst {dimension_numbers = #tpu.dot_dimension_numbers<[1], [0], [0], [1], [0, 0, 1, 1], [], []>} : vector<384x128xbf16>, vector<128x128xbf16>, vector<384x128xf32> -> vector<384x128xf32>
    %c3 = arith.constant 3 : index
    %c0_20 = arith.constant 0 : index
    %c0_21 = arith.constant 0 : index
    %17 = vector.load %arg4[%c3, %c0_20, %c0_21] : memref<9x128x128xbf16, #tpu.memory_space<vmem>>, vector<1x128x128xbf16>
    %18 = vector.shape_cast %17 : vector<1x128x128xbf16> to vector<128x128xbf16>
    %cst_22 = arith.constant dense<0.000000e+00> : vector<384x128xf32>
    %19 = tpu.matmul %9, %18, %cst_22 {dimension_numbers = #tpu.dot_dimension_numbers<[1], [0], [0], [1], [0, 0, 1, 1], [], []>} : vector<384x128xbf16>, vector<128x128xbf16>, vector<384x128xf32> -> vector<384x128xf32>
    %20 = arith.addf %16, %19 : vector<384x128xf32>
    %c6 = arith.constant 6 : index
    %c0_23 = arith.constant 0 : index
    %c0_24 = arith.constant 0 : index
    %21 = vector.load %arg4[%c6, %c0_23, %c0_24] : memref<9x128x128xbf16, #tpu.memory_space<vmem>>, vector<1x128x128xbf16>
    %22 = vector.shape_cast %21 : vector<1x128x128xbf16> to vector<128x128xbf16>
    %cst_25 = arith.constant dense<0.000000e+00> : vector<384x128xf32>
    %23 = tpu.matmul %10, %22, %cst_25 {dimension_numbers = #tpu.dot_dimension_numbers<[1], [0], [0], [1], [0, 0, 1, 1], [], []>} : vector<384x128xbf16>, vector<128x128xbf16>, vector<384x128xf32> -> vector<384x128xf32>
    %24 = arith.addf %20, %23 : vector<384x128xf32>
    %25 = arith.addf %13, %24 : vector<384x128xf32>
    %c1 = arith.constant 1 : index
    %c0_26 = arith.constant 0 : index
    %c0_27 = arith.constant 0 : index
    %26 = vector.load %arg4[%c1, %c0_26, %c0_27] : memref<9x128x128xbf16, #tpu.memory_space<vmem>>, vector<1x128x128xbf16>
    %27 = vector.shape_cast %26 : vector<1x128x128xbf16> to vector<128x128xbf16>
    %cst_28 = arith.constant dense<0.000000e+00> : vector<384x128xf32>
    %28 = tpu.matmul %8, %27, %cst_28 {dimension_numbers = #tpu.dot_dimension_numbers<[1], [0], [0], [1], [0, 0, 1, 1], [], []>} : vector<384x128xbf16>, vector<128x128xbf16>, vector<384x128xf32> -> vector<384x128xf32>
    %c4 = arith.constant 4 : index
    %c0_29 = arith.constant 0 : index
    %c0_30 = arith.constant 0 : index
    %29 = vector.load %arg4[%c4, %c0_29, %c0_30] : memref<9x128x128xbf16, #tpu.memory_space<vmem>>, vector<1x128x128xbf16>
    %30 = vector.shape_cast %29 : vector<1x128x128xbf16> to vector<128x128xbf16>
    %cst_31 = arith.constant dense<0.000000e+00> : vector<384x128xf32>
    %31 = tpu.matmul %9, %30, %cst_31 {dimension_numbers = #tpu.dot_dimension_numbers<[1], [0], [0], [1], [0, 0, 1, 1], [], []>} : vector<384x128xbf16>, vector<128x128xbf16>, vector<384x128xf32> -> vector<384x128xf32>
    %32 = arith.addf %28, %31 : vector<384x128xf32>
    %c7 = arith.constant 7 : index
    %c0_32 = arith.constant 0 : index
    %c0_33 = arith.constant 0 : index
    %33 = vector.load %arg4[%c7, %c0_32, %c0_33] : memref<9x128x128xbf16, #tpu.memory_space<vmem>>, vector<1x128x128xbf16>
    %34 = vector.shape_cast %33 : vector<1x128x128xbf16> to vector<128x128xbf16>
    %cst_34 = arith.constant dense<0.000000e+00> : vector<384x128xf32>
    %35 = tpu.matmul %10, %34, %cst_34 {dimension_numbers = #tpu.dot_dimension_numbers<[1], [0], [0], [1], [0, 0, 1, 1], [], []>} : vector<384x128xbf16>, vector<128x128xbf16>, vector<384x128xf32> -> vector<384x128xf32>
    %36 = arith.addf %32, %35 : vector<384x128xf32>
    %c383_i32 = arith.constant 383 : i32
    %37 = tpu.dynamic_rotate %36 by %c383_i32 dim 0 : vector<384x128xf32>, i32 -> vector<384x128xf32>
    %38 = arith.addf %25, %37 : vector<384x128xf32>
    %c2 = arith.constant 2 : index
    %c0_35 = arith.constant 0 : index
    %c0_36 = arith.constant 0 : index
    %39 = vector.load %arg4[%c2, %c0_35, %c0_36] : memref<9x128x128xbf16, #tpu.memory_space<vmem>>, vector<1x128x128xbf16>
    %40 = vector.shape_cast %39 : vector<1x128x128xbf16> to vector<128x128xbf16>
    %cst_37 = arith.constant dense<0.000000e+00> : vector<384x128xf32>
    %41 = tpu.matmul %8, %40, %cst_37 {dimension_numbers = #tpu.dot_dimension_numbers<[1], [0], [0], [1], [0, 0, 1, 1], [], []>} : vector<384x128xbf16>, vector<128x128xbf16>, vector<384x128xf32> -> vector<384x128xf32>
    %c5 = arith.constant 5 : index
    %c0_38 = arith.constant 0 : index
    %c0_39 = arith.constant 0 : index
    %42 = vector.load %arg4[%c5, %c0_38, %c0_39] : memref<9x128x128xbf16, #tpu.memory_space<vmem>>, vector<1x128x128xbf16>
    %43 = vector.shape_cast %42 : vector<1x128x128xbf16> to vector<128x128xbf16>
    %cst_40 = arith.constant dense<0.000000e+00> : vector<384x128xf32>
    %44 = tpu.matmul %9, %43, %cst_40 {dimension_numbers = #tpu.dot_dimension_numbers<[1], [0], [0], [1], [0, 0, 1, 1], [], []>} : vector<384x128xbf16>, vector<128x128xbf16>, vector<384x128xf32> -> vector<384x128xf32>
    %45 = arith.addf %41, %44 : vector<384x128xf32>
    %c8 = arith.constant 8 : index
    %c0_41 = arith.constant 0 : index
    %c0_42 = arith.constant 0 : index
    %46 = vector.load %arg4[%c8, %c0_41, %c0_42] : memref<9x128x128xbf16, #tpu.memory_space<vmem>>, vector<1x128x128xbf16>
    %47 = vector.shape_cast %46 : vector<1x128x128xbf16> to vector<128x128xbf16>
    %cst_43 = arith.constant dense<0.000000e+00> : vector<384x128xf32>
    %48 = tpu.matmul %10, %47, %cst_43 {dimension_numbers = #tpu.dot_dimension_numbers<[1], [0], [0], [1], [0, 0, 1, 1], [], []>} : vector<384x128xbf16>, vector<128x128xbf16>, vector<384x128xf32> -> vector<384x128xf32>
    %49 = arith.addf %45, %48 : vector<384x128xf32>
    %c382_i32 = arith.constant 382 : i32
    %50 = tpu.dynamic_rotate %49 by %c382_i32 dim 0 : vector<384x128xf32>, i32 -> vector<384x128xf32>
    %51 = arith.addf %38, %50 : vector<384x128xf32>
    %cst_44 = arith.constant 0.000000e+00 : f32
    %52 = vector.broadcast %cst_44 : f32 to vector<384x128xf32>
    %53 = arith.maximumf %51, %52 : vector<384x128xf32>
    %54 = vector.shape_cast %53 : vector<384x128xf32> to vector<16x24x128xf32>
    %55 = arith.truncf %54 : vector<16x24x128xf32> to vector<16x24x128xbf16>
    %c0_45 = arith.constant 0 : index
    %c0_46 = arith.constant 0 : index
    %c0_47 = arith.constant 0 : index
    %c0_48 = arith.constant 0 : index
    %56 = vector.load %arg6[%c0_45, %c0_46, %c0_47, %c0_48] : memref<1x16x24x128xbf16, #tpu.memory_space<vmem>>, vector<1x16x24x128xbf16>
    %57 = vector.shape_cast %56 : vector<1x16x24x128xbf16> to vector<16x24x128xbf16>
    %58 = vector.shape_cast %55 : vector<16x24x128xbf16> to vector<1x16x24x128xbf16>
    tpu.vector_store %arg6[%c0_45, %c0_46, %c0_47, %c0_48], %58 {strides = array<i32>} : memref<1x16x24x128xbf16, #tpu.memory_space<vmem>>, vector<1x16x24x128xbf16>,
    return
  }
  func.func @transform_0(%arg0: i32, %arg1: i32) -> (i32, i32, i32, i32) {
    %c0_i32 = arith.constant 0 : i32
    %c0_i32_0 = arith.constant 0 : i32
    %c0_i32_1 = arith.constant 0 : i32
    return %arg0, %arg1, %c0_i32, %c0_i32_0 : i32, i32, i32, i32
  }
  func.func @transform_1(%arg0: i32, %arg1: i32) -> (i32, i32, i32, i32) {
    %c1_i32 = arith.constant 1 : i32
    %0 = arith.addi %arg1, %c1_i32 : i32
    %c8_i32 = arith.constant 8 : i32
    %1 = arith.muli %0, %c8_i32 : i32
    %c0_i32 = arith.constant 0 : i32
    %c0_i32_0 = arith.constant 0 : i32
    %c0_i32_1 = arith.constant 0 : i32
    return %arg0, %1, %c0_i32, %c0_i32_0 : i32, i32, i32, i32
  }
  func.func @transform_2(%arg0: i32, %arg1: i32) -> (i32, i32, i32) {
    %c0_i32 = arith.constant 0 : i32
    %c0_i32_0 = arith.constant 0 : i32
    %c0_i32_1 = arith.constant 0 : i32
    %c0_i32_2 = arith.constant 0 : i32
    return %c0_i32, %c0_i32_0, %c0_i32_1 : i32, i32, i32
  }
  func.func @transform_3(%arg0: i32, %arg1: i32) -> (i32, i32) {
    %c0_i32 = arith.constant 0 : i32
    %c0_i32_0 = arith.constant 0 : i32
    %c0_i32_1 = arith.constant 0 : i32
    return %c0_i32, %c0_i32_0 : i32, i32
  }
  func.func @transform_4(%arg0: i32, %arg1: i32) -> (i32, i32, i32, i32) {
    %c0_i32 = arith.constant 0 : i32
    %c0_i32_0 = arith.constant 0 : i32
    %c0_i32_1 = arith.constant 0 : i32
    return %arg0, %arg1, %c0_i32, %c0_i32_0 : i32, i32, i32, i32
  }
}

</mosaic_0001>

<llo_original>
// kernel: tile.8
$region0: #{tile.8}
  #allocation0 [shape = 's32[1]{0}', space=sflag, size = 0x4, scoped, tag = 'scoped memory for tile.8']
  %s0 = inlined_call_operand.vmem [shape: f32[64], index: 0, kind: input, shape index: {}]
  %s1 = inlined_call_operand.vmem [shape: f32[2,64], index: 1, kind: output, shape index: {}]
  // Predicated region
  $region2: #{tile.8} parent=0 // pred_check
    _
  $region3: #{tile.8} parent=0 // pred_check_branch
    %3 = sbr.rel (0) target = $region5
  $region4: #{tile.8} parent=0 // pred_region
    _
  $region5: #{tile.8} parent=0 // pred_fallthru
    _
  %v4 = vld [vmem:[%s0] ss:$0 sm:$0xff]
  %5 = vst [vmem:[%s1] sm:$0x3] %v4

// kernel: tile.9
$region0: #{tile.9}
  %s0 = inlined_call_operand.vmem [shape: f32[2,64], index: 0, kind: input, shape index: {}]
  %s1 = inlined_call_operand.vmem [shape: f32[1,128], index: 1, kind: output, shape index: {}]
  $region1: #{tile.9} parent=0
    #allocation0 [shape = 'u8[4096]{0}', space=vmem, size = 0x1000, scoped, tag = 'scoped mem for output reshape']
    #allocation1 [shape = 'u8[4096]{0}', space=vmem, size = 0x1000, scoped, tag = 'scoped mem for input reshape']
    %s3 = sshll.u32 1, 2
    %s4 = ssub.s32 %s3, 1
    %v5 = vld [vmem:[%s0] sm:%s4]
    %6 = vst [vmem:[#allocation1] sm:%s4] %v5
    %v7 = vld [vmem:[#allocation1] sm:$0x1]
    %vm8 = vcmask 523264
    %9 = vst.msk [vmem:[#allocation0] sm:$0x1] %vm8, %v7
    %s10 = scalar_lea.vmem [#allocation1], 1
    %v11 = vld [vmem:[%s10] sm:$0x1]
    %12 = vrot.lane.b32.xlu0 %v11, 64
    %v13 = vpop.permute.xlu0 %12
    %vm14 = vcmask 1048064
    %15 = vst.msk [vmem:[#allocation0] sm:$0x1] %vm14, %v13
    %s17 = sshll.u32 1, 1
    %s18 = ssub.s32 %s17, 1
    %v20 = vld [vmem:[#allocation0] sm:%s18]
    %s21 = sshll.u32 1, 1
    %s22 = ssub.s32 %s21, 1
    %23 = vst [vmem:[%s1] sm:%s22] %v20

// kernel: up_block_forward.2
$region0: #{up_block_forward.2}
  #allocation0 [shape = 'u32[]', space=smem, size = 0x4, offset = 0x4, fixed_abs, tag = 'smem constant byte address 0x4 - core index']
  #allocation1 [shape = 'u32[144,128]{1,0:T(1,128)}', space=vmem, size = 0x12000, scoped, tag = 'internal scratch']
  %s0 = inlined_call_operand.vmem [shape: bf16[2,8,8,8], index: 0, kind: input, shape index: {}]
  %s1 = inlined_call_operand.vmem [shape: bf16[2,8,128], index: 1, kind: input, shape index: {}]
  %s2 = inlined_call_operand.vmem [shape: f32[1,128], index: 2, kind: input, shape index: {}]
  %s3 = inlined_call_operand.vmem [shape: bf16[2,8,2,8,128], index: 3, kind: output, shape index: {}]
  %s4 = sld [smem:[#allocation0]]
  $region82: #{up_block_forward.2} parent=0
    _
  %s6 = ssub.s32 1, %s4
  %s7 = scalar_select 0, %s6, %s4
  $region1: #{up_block_forward.2} parent=0
    #allocation2 [shape = 'u8[32768]{0}', space=vmem, size = 0x8000, scoped, tag = 'output window, operand 0']
    loop: start=0, step=1, limit=6
    $region2: #{up_block_forward.2} parent=1 // loop_pre_header
      _
    $region3: #{up_block_forward.2} parent=1 // loop_header
      %s9 = sphi 0, %s13
      %p10 = scmp.ge.s32.totalorder %s9, 6
      %s16 = sphi 0, %s35
      %s17 = sphi 0, %s31
      %s18 = sphi 0, %s27
      %s19 = sphi 0, %s16
      %s20 = sphi 0, %s17
      %s21 = sphi 0, %s18
      %s22 = sphi 0, %s19
      %s23 = sphi 0, %s20
      %s24 = sphi 0, %s21
      %s40 = sphi 0, %s42
      %s43 = sphi 0, %s40
      %s44 = sphi 0, %s43
      %s60 = sphi 0, %s44
      %s66 = sphi 0, %s68
      %s69 = sphi 0, %s66
      %s70 = sphi 0, %s69
      %s86 = sphi 0, %s70
      %s90 = sphi 0, %s90
      %s92 = sphi 0, %s90
      %s93 = sphi 0, %s92
      %s107 = sphi 0, %s93
      %s117 = sphi 0, %s119
      %s120 = sphi 0, %s117
      %s121 = sphi 0, %s120
      %s137 = sphi 0, %s121
    $region4: #{up_block_forward.2} parent=1 // loop_header_branch
      %12 = sbr.rel (%p10) target = $region8
    $region5: #{up_block_forward.2} parent=1 // loop_body
      %s14 = ssub.s32 %s9, 1
      %s15 = ssub.s32 %s9, 2
      %s25 = sadd.s32 1, %s18
      %p26 = scmp.ge.s32.totalorder %s25, 2
      %s27 = scalar_select %p26, 0, %s25
      %s28 = sadd.s32 1, %s17
      %s29 = scalar_select %p26, %s28, %s17
      %p30 = scmp.ge.s32.totalorder %s29, 1
      %s31 = scalar_select %p30, 0, %s29
      %s32 = sadd.s32 1, %s16
      %s33 = scalar_select %p30, %s32, %s16
      %p34 = scmp.ge.s32.totalorder %s33, 2
      %s35 = scalar_select %p34, 0, %s33
      %s36 = ssub.s32 %s16, %s35
      %s37 = ssub.s32 %s17, %s31
      %s38 = sor.u32 %s36, %s37
      %p39 = scmp.eq.s32.totalorder %s38, 0
      %s41 = sadd.s32 %s40, 1
      %s42 = scalar_select %p39, %s40, %s41
      %p45 = pneg %p39
      %p46 = scmp.eq.s32.totalorder %s9, 3
      %p47 = por %p45, %p46
      %p48 = scmp.ne.s32.totalorder %s40, %s43
      %p49 = scmp.eq.s32.totalorder %s9, 0
      %p50 = por %p48, %p49
      %p51 = scmp.ne.s32.totalorder %s40, %s43
      %p52 = scmp.eq.s32.totalorder %s14, 3
      %p53 = por %p51, %p52
      %p54 = scmp.ne.s32.totalorder %s43, %s44
      %p55 = scmp.eq.s32.totalorder %s14, 0
      %p56 = por %p54, %p55
      %p57 = scmp.ne.s32.totalorder %s43, %s44
      %p58 = scmp.eq.s32.totalorder %s15, 3
      %p59 = por %p57, %p58
      %p61 = scmp.ne.s32.totalorder %s44, %s60
      %p62 = scmp.eq.s32.totalorder %s15, 0
      %p63 = por %p61, %p62
      %s64 = ssub.s32 %s18, %s27
      %p65 = scmp.eq.s32.totalorder %s64, 0
      %s67 = sadd.s32 %s66, 1
      %s68 = scalar_select %p65, %s66, %s67
      %p71 = pneg %p65
      %p72 = scmp.eq.s32.totalorder %s9, 3
      %p73 = por %p71, %p72
      %p74 = scmp.ne.s32.totalorder %s66, %s69
      %p75 = scmp.eq.s32.totalorder %s9, 0
      %p76 = por %p74, %p75
      %p77 = scmp.ne.s32.totalorder %s66, %s69
      %p78 = scmp.eq.s32.totalorder %s14, 3
      %p79 = por %p77, %p78
      %p80 = scmp.ne.s32.totalorder %s69, %s70
      %p81 = scmp.eq.s32.totalorder %s14, 0
      %p82 = por %p80, %p81
      %p83 = scmp.ne.s32.totalorder %s69, %s70
      %p84 = scmp.eq.s32.totalorder %s15, 3
      %p85 = por %p83, %p84
      %p87 = scmp.ne.s32.totalorder %s70, %s86
      %p88 = scmp.eq.s32.totalorder %s15, 0
      %p89 = por %p87, %p88
      %s91 = sadd.s32 %s90, 1
      %p94 = scmp.eq.s32.totalorder %s9, 3
      %p95 = scmp.ne.s32.totalorder %s90, %s92
      %p96 = scmp.eq.s32.totalorder %s9, 0
      %p97 = por %p95, %p96
      %p98 = scmp.ne.s32.totalorder %s90, %s92
      %p99 = scmp.eq.s32.totalorder %s14, 3
      %p100 = por %p98, %p99
      %p101 = scmp.ne.s32.totalorder %s92, %s93
      %p102 = scmp.eq.s32.totalorder %s14, 0
      %p103 = por %p101, %p102
      %p104 = scmp.ne.s32.totalorder %s92, %s93
      %p105 = scmp.eq.s32.totalorder %s15, 3
      %p106 = por %p104, %p105
      %p108 = scmp.ne.s32.totalorder %s93, %s107
      %p109 = scmp.eq.s32.totalorder %s15, 0
      %p110 = por %p108, %p109
      %s111 = ssub.s32 %s16, %s35
      %s112 = ssub.s32 %s17, %s31
      %s113 = sor.u32 %s111, %s112
      %s114 = ssub.s32 %s18, %s27
      %s115 = sor.u32 %s113, %s114
      %p116 = scmp.eq.s32.totalorder %s115, 0
      %s118 = sadd.s32 %s117, 1
      %s119 = scalar_select %p116, %s117, %s118
      %p122 = pneg %p116
      %p123 = scmp.eq.s32.totalorder %s9, 3
      %p124 = por %p122, %p123
      %p125 = scmp.ne.s32.totalorder %s117, %s120
      %p126 = scmp.eq.s32.totalorder %s9, 0
      %p127 = por %p125, %p126
      %p128 = scmp.ne.s32.totalorder %s117, %s120
      %p129 = scmp.eq.s32.totalorder %s14, 3
      %p130 = por %p128, %p129
      %p131 = scmp.ne.s32.totalorder %s120, %s121
      %p132 = scmp.eq.s32.totalorder %s14, 0
      %p133 = por %p131, %p132
      %p134 = scmp.ne.s32.totalorder %s120, %s121
      %p135 = scmp.eq.s32.totalorder %s15, 3
      %p136 = por %p134, %p135
      %p138 = scmp.ne.s32.totalorder %s121, %s137
      %p139 = scmp.eq.s32.totalorder %s15, 0
      %p140 = por %p138, %p139
      %p141 = scmp.le.s32.totalorder 1, %s9
      %p142 = scmp.lt.s32.totalorder %s9, 5
      %p143 = pnand %p141, %p142
      %p144 = pneg %p143
      // Predicated region
      $region9: #{up_block_forward.2} parent=5 // pred_check
        _
      $region10: #{up_block_forward.2} parent=5 // pred_check_branch
        %146 = sbr.rel (%p143) target = $region12
      $region11: #{up_block_forward.2} parent=5 // pred_region
        %s147 = ssub.s32 %s9, 1
        // Predicated region
        $region13: #{up_block_forward.2} parent=11 // pred_check
          %p148 = pneg %p103
        $region14: #{up_block_forward.2} parent=11 // pred_check_branch
          %150 = sbr.rel (%p148) target = $region16
        $region15: #{up_block_forward.2} parent=11 // pred_region
          _
        $region16: #{up_block_forward.2} parent=11 // pred_fallthru
          _
      $region12: #{up_block_forward.2} parent=5 // pred_fallthru
        _
      %p151 = scmp.lt.s32.totalorder %s9, 4
      // Predicated region
      $region17: #{up_block_forward.2} parent=5 // pred_check
        %p152 = pneg %p151
      $region18: #{up_block_forward.2} parent=5 // pred_check_branch
        %154 = sbr.rel (%p152) target = $region20
      $region19: #{up_block_forward.2} parent=5 // pred_region
        // Predicated region
        $region21: #{up_block_forward.2} parent=19 // pred_check
          %p155 = pneg %p50
        $region22: #{up_block_forward.2} parent=19 // pred_check_branch
          %157 = sbr.rel (%p155) target = $region24
        $region23: #{up_block_forward.2} parent=19 // pred_region
          %s158 = smul.u32 8, %s17
          %p159 = scmp.lt.s32.totalorder %s16, 1
          %s160 = scalar_select %p159, %s16, 1
          %p161 = scmp.lt.s32.totalorder %s158, 7
          %s162 = scalar_select %p161, %s158, 7
          %s163 = smul.addr %s160, 8
          %s164 = sadd.s32 %s162, %s163
          %s165 = smul.addr %s164, 4
          %s166 = scalar_lea.vmem %s0, %s165
          %s167 = smul.u32 8, %s17
        $region24: #{up_block_forward.2} parent=19 // pred_fallthru
          _
        // Predicated region
        $region25: #{up_block_forward.2} parent=19 // pred_check
          %p168 = pneg %p76
        $region26: #{up_block_forward.2} parent=19 // pred_check_branch
          %170 = sbr.rel (%p168) target = $region28
        $region27: #{up_block_forward.2} parent=19 // pred_region
          %p171 = scmp.lt.s32.totalorder %s18, 1
          %s172 = scalar_select %p171, %s18, 1
          %s173 = smul.addr %s172, 4
          %s174 = scalar_lea.vmem %s1, %s173
        $region28: #{up_block_forward.2} parent=19 // pred_fallthru
          _
      $region20: #{up_block_forward.2} parent=5 // pred_fallthru
        _
      %p175 = scmp.le.s32.totalorder 1, %s9
      %p176 = scmp.lt.s32.totalorder %s9, 5
      %p177 = pnand %p175, %p176
      %p178 = pneg %p177
      // Predicated region
      $region29: #{up_block_forward.2} parent=5 // pred_check
        _
      $region30: #{up_block_forward.2} parent=5 // pred_check_branch
        %180 = sbr.rel (%p177) target = $region32
      $region31: #{up_block_forward.2} parent=5 // pred_region
        %s181 = ssub.s32 %s9, 1
        %s182 = smul.u32 8, %s20
        %p183 = scmp.lt.s32.totalorder %s19, 1
        %s184 = scalar_select %p183, %s19, 1
        %p185 = scmp.lt.s32.totalorder %s182, 7
        %s186 = scalar_select %p185, %s182, 7
        %s187 = smul.addr %s184, 8
        %s188 = sadd.s32 %s186, %s187
        %s189 = smul.addr %s188, 4
        %s190 = scalar_lea.vmem %s0, %s189
        %p191 = pneg %p56
        %p192 = pneg %p53
        %p193 = scmp.lt.s32.totalorder %s21, 1
        %s194 = scalar_select %p193, %s21, 1
        %s195 = smul.addr %s194, 4
        %s196 = scalar_lea.vmem %s1, %s195
        %p197 = pneg %p82
        %p198 = pneg %p79
        %p199 = pneg %p103
        %p200 = pneg %p100
        %p201 = pneg %p133
        %p202 = pneg %p130
        %s203 = sand.u32 %s120, 1
        %s204 = sand.u32 %s120, 1
        %s205 = smul.addr %s204, 32
        %s206 = scalar_lea.vmem [#allocation2], %s205
        %s207 = smul.u32 8, %s20
        %p208 = scmp.lt.s32.totalorder %s19, 1
        %s209 = scalar_select %p208, %s19, 1
        %p210 = scmp.lt.s32.totalorder %s207, 7
        %s211 = scalar_select %p210, %s207, 7
        %s212 = smul.addr %s209, 8
        %s213 = sadd.s32 %s211, %s212
        %s214 = smul.addr %s213, 4
        %s215 = scalar_lea.vmem %s0, %s214
        %s216 = smul.u32 8, %s20
        %p217 = scmp.lt.s32.totalorder %s21, 1
        %s218 = scalar_select %p217, %s21, 1
        %s219 = smul.addr %s218, 4
        %s220 = scalar_lea.vmem %s1, %s219
        %s221 = smul.u32 8, %s20
        %v223 = vld [vmem:[%s215] sm:$0xf]
        %v224 = vld [vmem:[%s215 + $0x4] sm:$0xf]
        %v225 = vld [vmem:[%s215 + $0x8] sm:$0xf]
        %v226 = vld [vmem:[%s215 + $0xc] sm:$0xf]
        %v227 = vld [vmem:[%s215 + $0x10] sm:$0xf]
        %v228 = vld [vmem:[%s215 + $0x14] sm:$0xf]
        %v229 = vld [vmem:[%s215 + $0x18] sm:$0xf]
        %v230 = vld [vmem:[%s215 + $0x1c] sm:$0xf]
        %v231 = vld [vmem:[%s220] sm:$0xf]
        %v232 = vld [vmem:[%s2] sm:$0x1]
        %v234 = vlaneseq
        %v235 = vshrl.u32 %v234, 7
        %v236 = vsub.s32 0, %v235
        %v237 = vrot.slane %v232, %v236
        %v247 = vunpack.c.l.b16 %v223
        %v248 = vunpack.c.l.b16 %v224
        %v249 = vunpack.c.l.b16 %v225
        %v250 = vunpack.c.l.b16 %v226
        %v251 = vunpack.c.l.b16 %v227
        %v252 = vunpack.c.l.b16 %v228
        %v253 = vunpack.c.l.b16 %v229
        %v254 = vunpack.c.l.b16 %v230
        %v255 = vpack.c.b16 %v248, %v247
        %v256 = vpack.c.b16 %v250, %v249
        %v257 = vpack.c.b16 %v252, %v251
        %v258 = vpack.c.b16 %v254, %v253
        %vm259 = vcmask 64512
        %v261 = vsel %vm259, %v255, 0
        %v264 = vsel %vm259, %v256, 0
        %v267 = vsel %vm259, %v257, 0
        %v270 = vsel %vm259, %v258, 0
        %vm272 = vcmask 1043456
        %v274 = vsel %vm272, %v231, 0
        %276 = vmatprep.subr.bf16.mxu0 0
        %277 = vmatpush1.bf16.msra.mxu0 0
        %278 = vmatprep.subr.bf16.mxu0 0
        %279 = vmatpush1.bf16.msra.mxu0 0
        %280 = vmatprep.subr.bf16.mxu0 0
        %281 = vmatpush1.bf16.msra.mxu0 0
        %282 = vmatprep.subr.bf16.mxu0 0
        %283 = vmatpush1.bf16.msra.mxu0 0
        %284 = vmatprep.subr.bf16.mxu0 0
        %285 = vmatpush1.bf16.msra.mxu0 0
        %286 = vmatprep.subr.bf16.mxu0 0
        %287 = vmatpush1.bf16.msra.mxu0 0
        %288 = vmatprep.subr.bf16.mxu0 0
        %289 = vmatpush1.bf16.msra.mxu0 0
        %290 = vmatprep.subr.bf16.mxu0 0
        %291 = vmatpush1.bf16.msra.mxu0 %v274
        %292 = vmatprep.subr.bf16.mxu0 0
        %293 = vmatpush2.bf16.msra.mxu0 0
        %294 = vmatprep.subr.bf16.mxu0 0
        %295 = vmatpush2.bf16.msra.mxu0 0
        %296 = vmatprep.subr.bf16.mxu0 0
        %297 = vmatpush2.bf16.msra.mxu0 0
        %298 = vmatprep.subr.bf16.mxu0 0
        %299 = vmatpush2.bf16.msra.mxu0 0
        %300 = vmatprep.subr.bf16.mxu0 0
        %301 = vmatpush2.bf16.msra.mxu0 0
        %302 = vmatprep.subr.bf16.mxu0 0
        %303 = vmatpush2.bf16.msra.mxu0 0
        %304 = vmatprep.subr.bf16.mxu0 0
        %305 = vmatpush2.bf16.msra.mxu0 0
        %306 = vmatprep.subr.bf16.mxu0 0
        %307 = vmatpush2.bf16.msra.mxu0 0
        %308 = vmatprep.mubr.bf16.mxu0 0
        %309 = vmatmul.mubr.bf16.gmra.mxu0 %v261
        %v310 = vpop.f32.mrf.mxu0
        %v311 = vadd.f32 %v237, %v310
        %v312 = vpop.f32.mrf.mxu0
        %v313 = vpop.f32.mrf.mxu0
        %v314 = vadd.f32 %v237, %v313
        %v315 = vpop.f32.mrf.mxu0
        %316 = vmatprep.mubr.bf16.mxu0 0
        %317 = vmatmul.mubr.bf16.gmra.mxu0 %v264
        %v318 = vpop.f32.mrf.mxu0
        %v319 = vadd.f32 %v237, %v318
        %v320 = vpop.f32.mrf.mxu0
        %v321 = vpop.f32.mrf.mxu0
        %v322 = vadd.f32 %v237, %v321
        %v323 = vpop.f32.mrf.mxu0
        %324 = vmatprep.mubr.bf16.mxu0 0
        %325 = vmatmul.mubr.bf16.gmra.mxu0 %v267
        %v326 = vpop.f32.mrf.mxu0
        %v327 = vadd.f32 %v237, %v326
        %v328 = vpop.f32.mrf.mxu0
        %v329 = vpop.f32.mrf.mxu0
        %v330 = vadd.f32 %v237, %v329
        %v331 = vpop.f32.mrf.mxu0
        %332 = vmatprep.mubr.bf16.mxu0 0
        %333 = vmatmul.mubr.bf16.gmra.mxu0 %v270
        %v334 = vpop.f32.mrf.mxu0
        %v335 = vadd.f32 %v237, %v334
        %v336 = vpop.f32.mrf.mxu0
        %v337 = vpop.f32.mrf.mxu0
        %v338 = vadd.f32 %v237, %v337
        %v339 = vpop.f32.mrf.mxu0
        %340 = vdwg.mxu0
        %v341 = vmax.f32 %v311, 0.0
        %v342 = vmax.f32 %v314, 0.0
        %v343 = vmax.f32 %v319, 0.0
        %v344 = vmax.f32 %v322, 0.0
        %v345 = vmax.f32 %v327, 0.0
        %v346 = vmax.f32 %v330, 0.0
        %v347 = vmax.f32 %v335, 0.0
        %v348 = vmax.f32 %v338, 0.0
        %v349 = vpack.c.bf16 %v341, %v341
        %v350 = vpack.c.bf16 %v342, %v342
        %v351 = vpack.c.bf16 %v343, %v343
        %v352 = vpack.c.bf16 %v344, %v344
        %v353 = vpack.c.bf16 %v345, %v345
        %v354 = vpack.c.bf16 %v346, %v346
        %v355 = vpack.c.bf16 %v347, %v347
        %v356 = vpack.c.bf16 %v348, %v348
        %357 = vst [vmem:[%s206] sm:$0xf] %v349
        %358 = vst [vmem:[%s206 + $0x4] sm:$0xf] %v350
        %359 = vst [vmem:[%s206 + $0x8] sm:$0xf] %v351
        %360 = vst [vmem:[%s206 + $0xc] sm:$0xf] %v352
        %361 = vst [vmem:[%s206 + $0x10] sm:$0xf] %v353
        %362 = vst [vmem:[%s206 + $0x14] sm:$0xf] %v354
        %363 = vst [vmem:[%s206 + $0x18] sm:$0xf] %v355
        %364 = vst [vmem:[%s206 + $0x1c] sm:$0xf] %v356
        %s365 = sand.u32 %s120, 1
        %s366 = sand.u32 %s120, 1
        %s367 = smul.addr %s366, 32
        %s368 = scalar_lea.vmem [#allocation2], %s367
        // Predicated region
        $region33: #{up_block_forward.2} parent=31 // pred_check
          %p369 = pneg %p130
        $region34: #{up_block_forward.2} parent=31 // pred_check_branch
          %371 = sbr.rel (%p369) target = $region36
        $region35: #{up_block_forward.2} parent=31 // pred_region
          %s372 = smul.u32 8, %s20
          %s373 = smul.addr %s372, 2
          %s374 = sadd.s32 %s21, %s373
          %s375 = smul.addr %s19, 16
          %s376 = sadd.s32 %s374, %s375
          %s377 = smul.addr %s376, 4
          %s378 = scalar_lea.vmem %s3, %s377
          // Predicated region
          $region37: #{up_block_forward.2} parent=35 // pred_check
            _
          $region38: #{up_block_forward.2} parent=35 // pred_check_branch
            %380 = sbr.rel (0) target = $region40
          $region39: #{up_block_forward.2} parent=35 // pred_region
            // Predicated region
            $region41: #{up_block_forward.2} parent=39 // pred_check
              _
            $region42: #{up_block_forward.2} parent=39 // pred_check_branch
              %382 = sbr.rel target = $region44
            $region43: #{up_block_forward.2} parent=39 // pred_region
              // Predicated region
              $region56: #{up_block_forward.2} parent=43 // pred_check
                _
              $region57: #{up_block_forward.2} parent=43 // pred_check_branch
                %412 = sbr.rel (0) target = $region59
              $region58: #{up_block_forward.2} parent=43 // pred_region
                loop: start=0, step=1, limit=1
                $region60: #{up_block_forward.2} parent=58 // loop_pre_header
                  _
                $region61: #{up_block_forward.2} parent=58 // loop_header
                  %s414 = sphi 0, %s418
                  %p415 = scmp.ge.s32.totalorder %s414, 1
                  %s419 = sphi %s368, %s368
                  %s420 = sphi %s378, %s378
                $region62: #{up_block_forward.2} parent=58 // loop_header_branch
                  %417 = sbr.rel (%p415) target = $region66
                $region63: #{up_block_forward.2} parent=58 // loop_body
                  _
                $region64: #{up_block_forward.2} parent=58 // loop_footer
                  %s418 = sadd.s32 1, %s414
                $region65: #{up_block_forward.2} parent=58 // loop_footer_branch
                  %413 = sbr.rel target = $region61
                $region66: #{up_block_forward.2} parent=58 // loop_exit
                  _
                %s422 = ssub.s32 16, 1
                loop: start=0, step=1, limit=1
                $region67: #{up_block_forward.2} parent=58 // loop_pre_header
                  _
                $region68: #{up_block_forward.2} parent=58 // loop_header
                  %s424 = sphi 0, %s428
                  %p425 = scmp.ge.s32.totalorder %s424, 1
                  %s429 = sphi %s368, %s368
                  %s430 = sphi %s378, %s378
                $region69: #{up_block_forward.2} parent=58 // loop_header_branch
                  %427 = sbr.rel (%p425) target = $region73
                $region70: #{up_block_forward.2} parent=58 // loop_body
                  %v431 = vld [vmem:[%s429] sm:%s422]
                  %432 = vst [vmem:[%s430] sm:%s422] %v431
                  %v433 = vld [vmem:[%s429 + $0x4] sm:%s422]
                  %434 = vst [vmem:[%s430 + $0x8] sm:%s422] %v433
                  %v435 = vld [vmem:[%s429 + $0x8] sm:%s422]
                  %436 = vst [vmem:[%s430 + $0x10] sm:%s422] %v435
                  %v437 = vld [vmem:[%s429 + $0xc] sm:%s422]
                  %438 = vst [vmem:[%s430 + $0x18] sm:%s422] %v437
                  %v439 = vld [vmem:[%s429 + $0x10] sm:%s422]
                  %440 = vst [vmem:[%s430 + $0x20] sm:%s422] %v439
                  %v441 = vld [vmem:[%s429 + $0x14] sm:%s422]
                  %442 = vst [vmem:[%s430 + $0x28] sm:%s422] %v441
                  %v443 = vld [vmem:[%s429 + $0x18] sm:%s422]
                  %444 = vst [vmem:[%s430 + $0x30] sm:%s422] %v443
                  %v445 = vld [vmem:[%s429 + $0x1c] sm:%s422]
                  %446 = vst [vmem:[%s430 + $0x38] sm:%s422] %v445
                $region71: #{up_block_forward.2} parent=58 // loop_footer
                  %s428 = sadd.s32 1, %s424
                $region72: #{up_block_forward.2} parent=58 // loop_footer_branch
                  %423 = sbr.rel target = $region68
                $region73: #{up_block_forward.2} parent=58 // loop_exit
                  _
              $region59: #{up_block_forward.2} parent=43 // pred_fallthru
                _
            $region44: #{up_block_forward.2} parent=39 // pred_fallthru
              _
            // Predicated region
            $region45: #{up_block_forward.2} parent=39 // pred_check
              _
            $region46: #{up_block_forward.2} parent=39 // pred_check_branch
              %384 = sbr.rel (0) target = $region48
            $region47: #{up_block_forward.2} parent=39 // pred_region
              %s386 = ssub.s32 16, 1
              loop: start=0, step=1, limit=1
              $region49: #{up_block_forward.2} parent=47 // loop_pre_header
                _
              $region50: #{up_block_forward.2} parent=47 // loop_header
                %s388 = sphi 0, %s392
                %p389 = scmp.ge.s32.totalorder %s388, 1
                %s393 = sphi %s368, %s368
                %s394 = sphi %s378, %s378
              $region51: #{up_block_forward.2} parent=47 // loop_header_branch
                %391 = sbr.rel (%p389) target = $region55
              $region52: #{up_block_forward.2} parent=47 // loop_body
                %v395 = vld [vmem:[%s393] sm:%s386]
                %396 = vst [vmem:[%s394] sm:%s386] %v395
                %v397 = vld [vmem:[%s393 + $0x4] sm:%s386]
                %398 = vst [vmem:[%s394 + $0x8] sm:%s386] %v397
                %v399 = vld [vmem:[%s393 + $0x8] sm:%s386]
                %400 = vst [vmem:[%s394 + $0x10] sm:%s386] %v399
                %v401 = vld [vmem:[%s393 + $0xc] sm:%s386]
                %402 = vst [vmem:[%s394 + $0x18] sm:%s386] %v401
                %v403 = vld [vmem:[%s393 + $0x10] sm:%s386]
                %404 = vst [vmem:[%s394 + $0x20] sm:%s386] %v403
                %v405 = vld [vmem:[%s393 + $0x14] sm:%s386]
                %406 = vst [vmem:[%s394 + $0x28] sm:%s386] %v405
                %v407 = vld [vmem:[%s393 + $0x18] sm:%s386]
                %408 = vst [vmem:[%s394 + $0x30] sm:%s386] %v407
                %v409 = vld [vmem:[%s393 + $0x1c] sm:%s386]
                %410 = vst [vmem:[%s394 + $0x38] sm:%s386] %v409
              $region53: #{up_block_forward.2} parent=47 // loop_footer
                %s392 = sadd.s32 1, %s388
              $region54: #{up_block_forward.2} parent=47 // loop_footer_branch
                %387 = sbr.rel target = $region50
              $region55: #{up_block_forward.2} parent=47 // loop_exit
                _
            $region48: #{up_block_forward.2} parent=39 // pred_fallthru
              _
          $region40: #{up_block_forward.2} parent=35 // pred_fallthru
            _
          %447 = vnop
        $region36: #{up_block_forward.2} parent=31 // pred_fallthru
          _
      $region32: #{up_block_forward.2} parent=5 // pred_fallthru
        _
      %p448 = scmp.le.s32.totalorder 2, %s9
      // Predicated region
      $region74: #{up_block_forward.2} parent=5 // pred_check
        %p449 = pneg %p448
      $region75: #{up_block_forward.2} parent=5 // pred_check_branch
        %451 = sbr.rel (%p449) target = $region77
      $region76: #{up_block_forward.2} parent=5 // pred_region
        %s452 = ssub.s32 %s9, 2
        // Predicated region
        $region78: #{up_block_forward.2} parent=76 // pred_check
          %p453 = pneg %p136
        $region79: #{up_block_forward.2} parent=76 // pred_check_branch
          %455 = sbr.rel (%p453) target = $region81
        $region80: #{up_block_forward.2} parent=76 // pred_region
          %s456 = sand.u32 %s121, 1
          %s457 = sand.u32 %s121, 1
          %s458 = smul.addr %s457, 32
          %s459 = scalar_lea.vmem [#allocation2], %s458
        $region81: #{up_block_forward.2} parent=76 // pred_fallthru
          _
      $region77: #{up_block_forward.2} parent=5 // pred_fallthru
        _
    $region6: #{up_block_forward.2} parent=1 // loop_footer
      %s13 = sadd.s32 1, %s9
    $region7: #{up_block_forward.2} parent=1 // loop_footer_branch
      %8 = sbr.rel target = $region3
    $region8: #{up_block_forward.2} parent=1 // loop_exit
      _

// kernel: up_block_forward.3
$region0: #{up_block_forward.3}
  #allocation0 [shape = 'u32[]', space=smem, size = 0x4, offset = 0x4, fixed_abs, tag = 'smem constant byte address 0x4 - core index']
  #allocation1 [shape = 'u32[144,128]{1,0:T(1,128)}', space=vmem, size = 0x12000, scoped, tag = 'internal scratch']
  #allocation2 [shape = 'bf16[18,24,128]{2,1,0:T(8,128)(2,1)}', space=vmem, size = 0x1b000, scoped, tag = 'scratch operand']
  %s0 = inlined_call_operand.vmem [shape: bf16[2,18,24,128], index: 0, kind: input, shape index: {}, may-alias: {0,1}]
  %s1 = inlined_call_operand.vmem [shape: bf16[2,18,24,128], index: 1, kind: input, shape index: {}, may-alias: {0,1}]
  %s2 = inlined_call_operand.vmem [shape: bf16[9,128,128], index: 2, kind: input, shape index: {}]
  %s3 = inlined_call_operand.vmem [shape: f32[1,128], index: 3, kind: input, shape index: {}]
  %s4 = inlined_call_operand.vmem [shape: bf16[2,16,24,128], index: 4, kind: output, shape index: {}]
  %s5 = sld [smem:[#allocation0]]
  $region49: #{up_block_forward.3} parent=0
    _
  %s7 = ssub.s32 1, %s5
  %s8 = scalar_select 0, %s7, %s5
  loop: start=0, step=1, limit=4
  $region2: #{up_block_forward.3} parent=0 // loop_pre_header
    _
  $region3: #{up_block_forward.3} parent=0 // loop_header
    %s10 = sphi 0, %s14
    %p11 = scmp.ge.s32.totalorder %s10, 4
    %s17 = sphi 0, %s29
    %s18 = sphi 0, %s25
    %s19 = sphi 0, %s17
    %s20 = sphi 0, %s18
    %s21 = sphi 0, %s19
    %s22 = sphi 0, %s20
    %s34 = sphi 0, %s36
    %s37 = sphi 0, %s34
    %s38 = sphi 0, %s37
    %s54 = sphi 0, %s38
    %s66 = sphi 0, %s68
    %s69 = sphi 0, %s66
    %s70 = sphi 0, %s69
    %s86 = sphi 0, %s70
    %s90 = sphi 0, %s90
    %s92 = sphi 0, %s90
    %s93 = sphi 0, %s92
    %s107 = sphi 0, %s93
    %s111 = sphi 0, %s111
    %s113 = sphi 0, %s111
    %s114 = sphi 0, %s113
    %s128 = sphi 0, %s114
    %s136 = sphi 0, %s138
    %s139 = sphi 0, %s136
    %s140 = sphi 0, %s139
    %s156 = sphi 0, %s140
  $region4: #{up_block_forward.3} parent=0 // loop_header_branch
    %13 = sbr.rel (%p11) target = $region8
  $region5: #{up_block_forward.3} parent=0 // loop_body
    %s15 = ssub.s32 %s10, 1
    %s16 = ssub.s32 %s10, 2
    %s23 = sadd.s32 1, %s18
    %p24 = scmp.ge.s32.totalorder %s23, 1
    %s25 = scalar_select %p24, 0, %s23
    %s26 = sadd.s32 1, %s17
    %s27 = scalar_select %p24, %s26, %s17
    %p28 = scmp.ge.s32.totalorder %s27, 2
    %s29 = scalar_select %p28, 0, %s27
    %s30 = ssub.s32 %s17, %s29
    %s31 = ssub.s32 %s18, %s25
    %s32 = sor.u32 %s30, %s31
    %p33 = scmp.eq.s32.totalorder %s32, 0
    %s35 = sadd.s32 %s34, 1
    %s36 = scalar_select %p33, %s34, %s35
    %p39 = pneg %p33
    %p40 = scmp.eq.s32.totalorder %s10, 1
    %p41 = por %p39, %p40
    %p42 = scmp.ne.s32.totalorder %s34, %s37
    %p43 = scmp.eq.s32.totalorder %s10, 0
    %p44 = por %p42, %p43
    %p45 = scmp.ne.s32.totalorder %s34, %s37
    %p46 = scmp.eq.s32.totalorder %s15, 1
    %p47 = por %p45, %p46
    %p48 = scmp.ne.s32.totalorder %s37, %s38
    %p49 = scmp.eq.s32.totalorder %s15, 0
    %p50 = por %p48, %p49
    %p51 = scmp.ne.s32.totalorder %s37, %s38
    %p52 = scmp.eq.s32.totalorder %s16, 1
    %p53 = por %p51, %p52
    %p55 = scmp.ne.s32.totalorder %s38, %s54
    %p56 = scmp.eq.s32.totalorder %s16, 0
    %p57 = por %p55, %p56
    %s58 = sadd.s32 %s18, 1
    %s59 = smul.u32 %s58, 8
    %s60 = sadd.s32 %s25, 1
    %s61 = smul.u32 %s60, 8
    %s62 = ssub.s32 %s17, %s29
    %s63 = ssub.s32 %s59, %s61
    %s64 = sor.u32 %s62, %s63
    %p65 = scmp.eq.s32.totalorder %s64, 0
    %s67 = sadd.s32 %s66, 1
    %s68 = scalar_select %p65, %s66, %s67
    %p71 = pneg %p65
    %p72 = scmp.eq.s32.totalorder %s10, 1
    %p73 = por %p71, %p72
    %p74 = scmp.ne.s32.totalorder %s66, %s69
    %p75 = scmp.eq.s32.totalorder %s10, 0
    %p76 = por %p74, %p75
    %p77 = scmp.ne.s32.totalorder %s66, %s69
    %p78 = scmp.eq.s32.totalorder %s15, 1
    %p79 = por %p77, %p78
    %p80 = scmp.ne.s32.totalorder %s69, %s70
    %p81 = scmp.eq.s32.totalorder %s15, 0
    %p82 = por %p80, %p81
    %p83 = scmp.ne.s32.totalorder %s69, %s70
    %p84 = scmp.eq.s32.totalorder %s16, 1
    %p85 = por %p83, %p84
    %p87 = scmp.ne.s32.totalorder %s70, %s86
    %p88 = scmp.eq.s32.totalorder %s16, 0
    %p89 = por %p87, %p88
    %s91 = sadd.s32 %s90, 1
    %p94 = scmp.eq.s32.totalorder %s10, 1
    %p95 = scmp.ne.s32.totalorder %s90, %s92
    %p96 = scmp.eq.s32.totalorder %s10, 0
    %p97 = por %p95, %p96
    %p98 = scmp.ne.s32.totalorder %s90, %s92
    %p99 = scmp.eq.s32.totalorder %s15, 1
    %p100 = por %p98, %p99
    %p101 = scmp.ne.s32.totalorder %s92, %s93
    %p102 = scmp.eq.s32.totalorder %s15, 0
    %p103 = por %p101, %p102
    %p104 = scmp.ne.s32.totalorder %s92, %s93
    %p105 = scmp.eq.s32.totalorder %s16, 1
    %p106 = por %p104, %p105
    %p108 = scmp.ne.s32.totalorder %s93, %s107
    %p109 = scmp.eq.s32.totalorder %s16, 0
    %p110 = por %p108, %p109
    %s112 = sadd.s32 %s111, 1
    %p115 = scmp.eq.s32.totalorder %s10, 1
    %p116 = scmp.ne.s32.totalorder %s111, %s113
    %p117 = scmp.eq.s32.totalorder %s10, 0
    %p118 = por %p116, %p117
    %p119 = scmp.ne.s32.totalorder %s111, %s113
    %p120 = scmp.eq.s32.totalorder %s15, 1
    %p121 = por %p119, %p120
    %p122 = scmp.ne.s32.totalorder %s113, %s114
    %p123 = scmp.eq.s32.totalorder %s15, 0
    %p124 = por %p122, %p123
    %p125 = scmp.ne.s32.totalorder %s113, %s114
    %p126 = scmp.eq.s32.totalorder %s16, 1
    %p127 = por %p125, %p126
    %p129 = scmp.ne.s32.totalorder %s114, %s128
    %p130 = scmp.eq.s32.totalorder %s16, 0
    %p131 = por %p129, %p130
    %s132 = ssub.s32 %s17, %s29
    %s133 = ssub.s32 %s18, %s25
    %s134 = sor.u32 %s132, %s133
    %p135 = scmp.eq.s32.totalorder %s134, 0
    %s137 = sadd.s32 %s136, 1
    %s138 = scalar_select %p135, %s136, %s137
    %p141 = pneg %p135
    %p142 = scmp.eq.s32.totalorder %s10, 1
    %p143 = por %p141, %p142
    %p144 = scmp.ne.s32.totalorder %s136, %s139
    %p145 = scmp.eq.s32.totalorder %s10, 0
    %p146 = por %p144, %p145
    %p147 = scmp.ne.s32.totalorder %s136, %s139
    %p148 = scmp.eq.s32.totalorder %s15, 1
    %p149 = por %p147, %p148
    %p150 = scmp.ne.s32.totalorder %s139, %s140
    %p151 = scmp.eq.s32.totalorder %s15, 0
    %p152 = por %p150, %p151
    %p153 = scmp.ne.s32.totalorder %s139, %s140
    %p154 = scmp.eq.s32.totalorder %s16, 1
    %p155 = por %p153, %p154
    %p157 = scmp.ne.s32.totalorder %s140, %s156
    %p158 = scmp.eq.s32.totalorder %s16, 0
    %p159 = por %p157, %p158
    %p160 = scmp.le.s32.totalorder 1, %s10
    %p161 = scmp.lt.s32.totalorder %s10, 3
    %p162 = pnand %p160, %p161
    %p163 = pneg %p162
    // Predicated region
    $region9: #{up_block_forward.3} parent=5 // pred_check
      _
    $region10: #{up_block_forward.3} parent=5 // pred_check_branch
      %165 = sbr.rel (%p162) target = $region12
    $region11: #{up_block_forward.3} parent=5 // pred_region
      %s166 = ssub.s32 %s10, 1
      // Predicated region
      $region13: #{up_block_forward.3} parent=11 // pred_check
        %p167 = pneg %p103
      $region14: #{up_block_forward.3} parent=11 // pred_check_branch
        %169 = sbr.rel (%p167) target = $region16
      $region15: #{up_block_forward.3} parent=11 // pred_region
        _
      $region16: #{up_block_forward.3} parent=11 // pred_fallthru
        _
      // Predicated region
      $region17: #{up_block_forward.3} parent=11 // pred_check
        %p170 = pneg %p124
      $region18: #{up_block_forward.3} parent=11 // pred_check_branch
        %172 = sbr.rel (%p170) target = $region20
      $region19: #{up_block_forward.3} parent=11 // pred_region
        _
      $region20: #{up_block_forward.3} parent=11 // pred_fallthru
        _
    $region12: #{up_block_forward.3} parent=5 // pred_fallthru
      _
    %p173 = scmp.lt.s32.totalorder %s10, 2
    // Predicated region
    $region21: #{up_block_forward.3} parent=5 // pred_check
      %p174 = pneg %p173
    $region22: #{up_block_forward.3} parent=5 // pred_check_branch
      %176 = sbr.rel (%p174) target = $region24
    $region23: #{up_block_forward.3} parent=5 // pred_region
      // Predicated region
      $region25: #{up_block_forward.3} parent=23 // pred_check
        %p177 = pneg %p44
      $region26: #{up_block_forward.3} parent=23 // pred_check_branch
        %179 = sbr.rel (%p177) target = $region28
      $region27: #{up_block_forward.3} parent=23 // pred_region
        %s180 = smul.u32 16, %s18
        %s181 = ssub.s32 18, %s180
        %p182 = scmp.lt.s32.totalorder %s181, 16
        %s183 = scalar_select %p182, %s181, 16
        %s184 = smul.u32 64, %s183
        %s185 = smul.u32 %s184, 3
        %p186 = scmp.lt.s32.totalorder %s17, 1
        %s187 = scalar_select %p186, %s17, 1
        %p188 = scmp.lt.s32.totalorder %s180, 17
        %s189 = scalar_select %p188, %s180, 17
        %s190 = smul.addr %s189, 3
        %s191 = smul.addr %s187, 54
        %s192 = sadd.s32 %s190, %s191
        %s193 = smul.addr %s192, 4
        %s194 = scalar_lea.vmem %s0, %s193
        %s195 = smul.u32 16, %s18
        %s196 = ssub.s32 18, %s195
        %p197 = scmp.lt.s32.totalorder %s196, 16
        %s198 = scalar_select %p197, %s196, 16
        %s199 = smul.u32 64, %s198
        %s200 = smul.u32 %s199, 3
      $region28: #{up_block_forward.3} parent=23 // pred_fallthru
        _
      // Predicated region
      $region29: #{up_block_forward.3} parent=23 // pred_check
        %p201 = pneg %p76
      $region30: #{up_block_forward.3} parent=23 // pred_check_branch
        %203 = sbr.rel (%p201) target = $region32
      $region31: #{up_block_forward.3} parent=23 // pred_region
        %s204 = sadd.s32 %s18, 1
        %s205 = smul.u32 %s204, 8
        %s206 = smul.u32 2, %s205
        %p207 = scmp.lt.s32.totalorder %s17, 1
        %s208 = scalar_select %p207, %s17, 1
        %p209 = scmp.lt.s32.totalorder %s206, 17
        %s210 = scalar_select %p209, %s206, 17
        %s211 = smul.addr %s210, 3
        %s212 = smul.addr %s208, 54
        %s213 = sadd.s32 %s211, %s212
        %s214 = smul.addr %s213, 4
        %s215 = scalar_lea.vmem %s1, %s214
        %s216 = sadd.s32 %s18, 1
        %s217 = smul.u32 %s216, 8
        %s218 = smul.u32 2, %s217
      $region32: #{up_block_forward.3} parent=23 // pred_fallthru
        _
    $region24: #{up_block_forward.3} parent=5 // pred_fallthru
      _
    %p219 = scmp.le.s32.totalorder 1, %s10
    %p220 = scmp.lt.s32.totalorder %s10, 3
    %p221 = pnand %p219, %p220
    %p222 = pneg %p221
    // Predicated region
    $region33: #{up_block_forward.3} parent=5 // pred_check
      _
    $region34: #{up_block_forward.3} parent=5 // pred_check_branch
      %224 = sbr.rel (%p221) target = $region36
    $region35: #{up_block_forward.3} parent=5 // pred_region
      %s225 = ssub.s32 %s10, 1
      %s226 = smul.u32 16, %s20
      %s227 = ssub.s32 18, %s226
      %p228 = scmp.lt.s32.totalorder %s227, 16
      %s229 = scalar_select %p228, %s227, 16
      %s230 = smul.u32 64, %s229
      %s231 = smul.u32 %s230, 3
      %p232 = scmp.lt.s32.totalorder %s19, 1
      %s233 = scalar_select %p232, %s19, 1
      %p234 = scmp.lt.s32.totalorder %s226, 17
      %s235 = scalar_select %p234, %s226, 17
      %s236 = smul.addr %s235, 3
      %s237 = smul.addr %s233, 54
      %s238 = sadd.s32 %s236, %s237
      %s239 = smul.addr %s238, 4
      %s240 = scalar_lea.vmem %s0, %s239
      %p241 = pneg %p50
      %p242 = pneg %p47
      %s243 = sadd.s32 %s20, 1
      %s244 = smul.u32 %s243, 8
      %s245 = smul.u32 2, %s244
      %p246 = scmp.lt.s32.totalorder %s19, 1
      %s247 = scalar_select %p246, %s19, 1
      %p248 = scmp.lt.s32.totalorder %s245, 17
      %s249 = scalar_select %p248, %s245, 17
      %s250 = smul.addr %s249, 3
      %s251 = smul.addr %s247, 54
      %s252 = sadd.s32 %s250, %s251
      %s253 = smul.addr %s252, 4
      %s254 = scalar_lea.vmem %s1, %s253
      %p255 = pneg %p82
      %p256 = pneg %p79
      %p257 = pneg %p103
      %p258 = pneg %p100
      %p259 = pneg %p124
      %p260 = pneg %p121
      %p261 = pneg %p152
      %p262 = pneg %p149
      %s263 = smul.u32 16, %s20
      %p264 = scmp.lt.s32.totalorder %s19, 1
      %s265 = scalar_select %p264, %s19, 1
      %p266 = scmp.lt.s32.totalorder %s263, 15
      %s267 = scalar_select %p266, %s263, 15
      %s268 = smul.addr %s267, 3
      %s269 = smul.addr %s265, 48
      %s270 = sadd.s32 %s268, %s269
      %s271 = smul.addr %s270, 4
      %s272 = scalar_lea.vmem %s4, %s271
      %s273 = smul.u32 16, %s20
      %s274 = ssub.s32 18, %s273
      %p275 = scmp.lt.s32.totalorder %s274, 16
      %s276 = scalar_select %p275, %s274, 16
      %s277 = smul.u32 64, %s276
      %s278 = smul.u32 %s277, 3
      %p279 = scmp.lt.s32.totalorder %s19, 1
      %s280 = scalar_select %p279, %s19, 1
      %p281 = scmp.lt.s32.totalorder %s273, 17
      %s282 = scalar_select %p281, %s273, 17
      %s283 = smul.addr %s282, 3
      %s284 = smul.addr %s280, 54
      %s285 = sadd.s32 %s283, %s284
      %s286 = smul.addr %s285, 4
      %s287 = scalar_lea.vmem %s0, %s286
      %s288 = smul.u32 16, %s20
      %s289 = ssub.s32 18, %s288
      %p290 = scmp.lt.s32.totalorder %s289, 16
      %s291 = scalar_select %p290, %s289, 16
      %s292 = smul.u32 64, %s291
      %s293 = smul.u32 %s292, 3
      %s294 = sadd.s32 %s20, 1
      %s295 = smul.u32 %s294, 8
      %s296 = smul.u32 2, %s295
      %p297 = scmp.lt.s32.totalorder %s19, 1
      %s298 = scalar_select %p297, %s19, 1
      %p299 = scmp.lt.s32.totalorder %s296, 17
      %s300 = scalar_select %p299, %s296, 17
      %s301 = smul.addr %s300, 3
      %s302 = smul.addr %s298, 54
      %s303 = sadd.s32 %s301, %s302
      %s304 = smul.addr %s303, 4
      %s305 = scalar_lea.vmem %s1, %s304
      %s306 = sadd.s32 %s20, 1
      %s307 = smul.u32 %s306, 8
      %s308 = smul.u32 2, %s307
      %s309 = smul.u32 16, %s20
      %p310 = scmp.lt.s32.totalorder %s19, 1
      %s311 = scalar_select %p310, %s19, 1
      %p312 = scmp.lt.s32.totalorder %s309, 15
      %s313 = scalar_select %p312, %s309, 15
      %s314 = smul.addr %s313, 3
      %s315 = smul.addr %s311, 48
      %s316 = sadd.s32 %s314, %s315
      %s317 = smul.addr %s316, 4
      %s318 = scalar_lea.vmem %s4, %s317
      %s319 = smul.u32 16, %s20
      %v321 = vld [vmem:[%s287] sm:$0xf]
      %v322 = vld [vmem:[%s287 + $0x4] sm:$0xf]
      %v323 = vld [vmem:[%s287 + $0x8] sm:$0xf]
      %v324 = vld [vmem:[%s287 + $0xc] sm:$0xf]
      %v325 = vld [vmem:[%s287 + $0x10] sm:$0xf]
      %v326 = vld [vmem:[%s287 + $0x14] sm:$0xf]
      %v327 = vld [vmem:[%s287 + $0x18] sm:$0xf]
      %v328 = vld [vmem:[%s287 + $0x1c] sm:$0xf]
      %v329 = vld [vmem:[%s287 + $0x20] sm:$0xf]
      %v330 = vld [vmem:[%s287 + $0x24] sm:$0xf]
      %v331 = vld [vmem:[%s287 + $0x28] sm:$0xf]
      %v332 = vld [vmem:[%s287 + $0x2c] sm:$0xf]
      %v333 = vld [vmem:[%s287 + $0x30] sm:$0xf]
      %v334 = vld [vmem:[%s287 + $0x34] sm:$0xf]
      %v335 = vld [vmem:[%s287 + $0x38] sm:$0xf]
      %v336 = vld [vmem:[%s287 + $0x3c] sm:$0xf]
      %v337 = vld [vmem:[%s287 + $0x40] sm:$0xf]
      %v338 = vld [vmem:[%s287 + $0x44] sm:$0xf]
      %v339 = vld [vmem:[%s287 + $0x48] sm:$0xf]
      %v340 = vld [vmem:[%s287 + $0x4c] sm:$0xf]
      %v341 = vld [vmem:[%s287 + $0x50] sm:$0xf]
      %v342 = vld [vmem:[%s287 + $0x54] sm:$0xf]
      %v343 = vld [vmem:[%s287 + $0x58] sm:$0xf]
      %v344 = vld [vmem:[%s287 + $0x5c] sm:$0xf]
      %v345 = vld [vmem:[%s287 + $0x60] sm:$0xf]
      %v346 = vld [vmem:[%s287 + $0x64] sm:$0xf]
      %v347 = vld [vmem:[%s287 + $0x68] sm:$0xf]
      %v348 = vld [vmem:[%s287 + $0x6c] sm:$0xf]
      %v349 = vld [vmem:[%s287 + $0x70] sm:$0xf]
      %v350 = vld [vmem:[%s287 + $0x74] sm:$0xf]
      %v351 = vld [vmem:[%s287 + $0x78] sm:$0xf]
      %v352 = vld [vmem:[%s287 + $0x7c] sm:$0xf]
      %v353 = vld [vmem:[%s287 + $0x80] sm:$0xf]
      %v354 = vld [vmem:[%s287 + $0x84] sm:$0xf]
      %v355 = vld [vmem:[%s287 + $0x88] sm:$0xf]
      %v356 = vld [vmem:[%s287 + $0x8c] sm:$0xf]
      %v357 = vld [vmem:[%s287 + $0x90] sm:$0xf]
      %v358 = vld [vmem:[%s287 + $0x94] sm:$0xf]
      %v359 = vld [vmem:[%s287 + $0x98] sm:$0xf]
      %v360 = vld [vmem:[%s287 + $0x9c] sm:$0xf]
      %v361 = vld [vmem:[%s287 + $0xa0] sm:$0xf]
      %v362 = vld [vmem:[%s287 + $0xa4] sm:$0xf]
      %v363 = vld [vmem:[%s287 + $0xa8] sm:$0xf]
      %v364 = vld [vmem:[%s287 + $0xac] sm:$0xf]
      %v365 = vld [vmem:[%s287 + $0xb0] sm:$0xf]
      %v366 = vld [vmem:[%s287 + $0xb4] sm:$0xf]
      %v367 = vld [vmem:[%s287 + $0xb8] sm:$0xf]
      %v368 = vld [vmem:[%s287 + $0xbc] sm:$0xf]
      %369 = vst [vmem:[#allocation2] sm:$0xf] %v321
      %370 = vst [vmem:[#allocation2 + $0x4] sm:$0xf] %v322
      %371 = vst [vmem:[#allocation2 + $0x8] sm:$0xf] %v323
      %372 = vst [vmem:[#allocation2 + $0xc] sm:$0xf] %v324
      %373 = vst [vmem:[#allocation2 + $0x10] sm:$0xf] %v325
      %374 = vst [vmem:[#allocation2 + $0x14] sm:$0xf] %v326
      %375 = vst [vmem:[#allocation2 + $0x18] sm:$0xf] %v327
      %376 = vst [vmem:[#allocation2 + $0x1c] sm:$0xf] %v328
      %377 = vst [vmem:[#allocation2 + $0x20] sm:$0xf] %v329
      %378 = vst [vmem:[#allocation2 + $0x24] sm:$0xf] %v330
      %379 = vst [vmem:[#allocation2 + $0x28] sm:$0xf] %v331
      %380 = vst [vmem:[#allocation2 + $0x2c] sm:$0xf] %v332
      %381 = vst [vmem:[#allocation2 + $0x30] sm:$0xf] %v333
      %382 = vst [vmem:[#allocation2 + $0x34] sm:$0xf] %v334
      %383 = vst [vmem:[#allocation2 + $0x38] sm:$0xf] %v335
      %384 = vst [vmem:[#allocation2 + $0x3c] sm:$0xf] %v336
      %385 = vst [vmem:[#allocation2 + $0x40] sm:$0xf] %v337
      %386 = vst [vmem:[#allocation2 + $0x44] sm:$0xf] %v338
      %387 = vst [vmem:[#allocation2 + $0x48] sm:$0xf] %v339
      %388 = vst [vmem:[#allocation2 + $0x4c] sm:$0xf] %v340
      %389 = vst [vmem:[#allocation2 + $0x50] sm:$0xf] %v341
      %390 = vst [vmem:[#allocation2 + $0x54] sm:$0xf] %v342
      %391 = vst [vmem:[#allocation2 + $0x58] sm:$0xf] %v343
      %392 = vst [vmem:[#allocation2 + $0x5c] sm:$0xf] %v344
      %393 = vst [vmem:[#allocation2 + $0x60] sm:$0xf] %v345
      %394 = vst [vmem:[#allocation2 + $0x64] sm:$0xf] %v346
      %395 = vst [vmem:[#allocation2 + $0x68] sm:$0xf] %v347
      %396 = vst [vmem:[#allocation2 + $0x6c] sm:$0xf] %v348
      %397 = vst [vmem:[#allocation2 + $0x70] sm:$0xf] %v349
      %398 = vst [vmem:[#allocation2 + $0x74] sm:$0xf] %v350
      %399 = vst [vmem:[#allocation2 + $0x78] sm:$0xf] %v351
      %400 = vst [vmem:[#allocation2 + $0x7c] sm:$0xf] %v352
      %401 = vst [vmem:[#allocation2 + $0x80] sm:$0xf] %v353
      %402 = vst [vmem:[#allocation2 + $0x84] sm:$0xf] %v354
      %403 = vst [vmem:[#allocation2 + $0x88] sm:$0xf] %v355
      %404 = vst [vmem:[#allocation2 + $0x8c] sm:$0xf] %v356
      %405 = vst [vmem:[#allocation2 + $0x90] sm:$0xf] %v357
      %406 = vst [vmem:[#allocation2 + $0x94] sm:$0xf] %v358
      %407 = vst [vmem:[#allocation2 + $0x98] sm:$0xf] %v359
      %408 = vst [vmem:[#allocation2 + $0x9c] sm:$0xf] %v360
      %409 = vst [vmem:[#allocation2 + $0xa0] sm:$0xf] %v361
      %410 = vst [vmem:[#allocation2 + $0xa4] sm:$0xf] %v362
      %411 = vst [vmem:[#allocation2 + $0xa8] sm:$0xf] %v363
      %412 = vst [vmem:[#allocation2 + $0xac] sm:$0xf] %v364
      %413 = vst [vmem:[#allocation2 + $0xb0] sm:$0xf] %v365
      %414 = vst [vmem:[#allocation2 + $0xb4] sm:$0xf] %v366
      %415 = vst [vmem:[#allocation2 + $0xb8] sm:$0xf] %v367
      %416 = vst [vmem:[#allocation2 + $0xbc] sm:$0xf] %v368
      %v417 = vld [vmem:[%s305] sm:$0xf]
      %v418 = vld [vmem:[%s305 + $0x4] sm:$0xf]
      %v419 = vld [vmem:[%s305 + $0x8] sm:$0xf]
      %v420 = vld [vmem:[%s305 + $0xc] sm:$0xf]
      %v421 = vld [vmem:[%s305 + $0x10] sm:$0xf]
      %v422 = vld [vmem:[%s305 + $0x14] sm:$0xf]
      %s423 = scalar_lea.vmem [#allocation2], 192
      %424 = vst [vmem:[%s423] sm:$0xf] %v417
      %425 = vst [vmem:[%s423 + $0x4] sm:$0xf] %v418
      %426 = vst [vmem:[%s423 + $0x8] sm:$0xf] %v419
      %427 = vst [vmem:[%s423 + $0xc] sm:$0xf] %v420
      %428 = vst [vmem:[%s423 + $0x10] sm:$0xf] %v421
      %429 = vst [vmem:[%s423 + $0x14] sm:$0xf] %v422
      %v430 = vld [vmem:[#allocation2] sm:$0xf]
      %v431 = vld [vmem:[#allocation2 + $0x4] sm:$0xf]
      %v432 = vld [vmem:[#allocation2 + $0x8] sm:$0xf]
      %v433 = vld [vmem:[#allocation2 + $0xc] sm:$0xf]
      %v434 = vld [vmem:[#allocation2 + $0x10] sm:$0xf]
      %v435 = vld [vmem:[#allocation2 + $0x14] sm:$0xf]
      %v436 = vld [vmem:[#allocation2 + $0x18] sm:$0xf]
      %v437 = vld [vmem:[#allocation2 + $0x1c] sm:$0xf]
      %v438 = vld [vmem:[#allocation2 + $0x20] sm:$0xf]
      %v439 = vld [vmem:[#allocation2 + $0x24] sm:$0xf]
      %v440 = vld [vmem:[#allocation2 + $0x28] sm:$0xf]
      %v441 = vld [vmem:[#allocation2 + $0x2c] sm:$0xf]
      %v442 = vld [vmem:[#allocation2 + $0x30] sm:$0xf]
      %v443 = vld [vmem:[#allocation2 + $0x34] sm:$0xf]
      %v444 = vld [vmem:[#allocation2 + $0x38] sm:$0xf]
      %v445 = vld [vmem:[#allocation2 + $0x3c] sm:$0xf]
      %v446 = vld [vmem:[#allocation2 + $0x40] sm:$0xf]
      %v447 = vld [vmem:[#allocation2 + $0x44] sm:$0xf]
      %v448 = vld [vmem:[#allocation2 + $0x48] sm:$0xf]
      %v449 = vld [vmem:[#allocation2 + $0x4c] sm:$0xf]
      %v450 = vld [vmem:[#allocation2 + $0x50] sm:$0xf]
      %v451 = vld [vmem:[#allocation2 + $0x54] sm:$0xf]
      %v452 = vld [vmem:[#allocation2 + $0x58] sm:$0xf]
      %v453 = vld [vmem:[#allocation2 + $0x5c] sm:$0xf]
      %v454 = vld [vmem:[#allocation2 + $0x60] sm:$0xf]
      %v455 = vld [vmem:[#allocation2 + $0x64] sm:$0xf]
      %v456 = vld [vmem:[#allocation2 + $0x68] sm:$0xf]
      %v457 = vld [vmem:[#allocation2 + $0x6c] sm:$0xf]
      %v458 = vld [vmem:[#allocation2 + $0x70] sm:$0xf]
      %v459 = vld [vmem:[#allocation2 + $0x74] sm:$0xf]
      %v460 = vld [vmem:[#allocation2 + $0x78] sm:$0xf]
      %v461 = vld [vmem:[#allocation2 + $0x7c] sm:$0xf]
      %v462 = vld [vmem:[#allocation2 + $0x80] sm:$0xf]
      %v463 = vld [vmem:[#allocation2 + $0x84] sm:$0xf]
      %v464 = vld [vmem:[#allocation2 + $0x88] sm:$0xf]
      %v465 = vld [vmem:[#allocation2 + $0x8c] sm:$0xf]
      %v466 = vld [vmem:[#allocation2 + $0x90] sm:$0xf]
      %v467 = vld [vmem:[#allocation2 + $0x94] sm:$0xf]
      %v468 = vld [vmem:[#allocation2 + $0x98] sm:$0xf]
      %v469 = vld [vmem:[#allocation2 + $0x9c] sm:$0xf]
      %v470 = vld [vmem:[#allocation2 + $0xa0] sm:$0xf]
      %v471 = vld [vmem:[#allocation2 + $0xa4] sm:$0xf]
      %v472 = vld [vmem:[#allocation2 + $0xa8] sm:$0xf]
      %v473 = vld [vmem:[#allocation2 + $0xac] sm:$0xf]
      %v474 = vld [vmem:[#allocation2 + $0xb0] sm:$0xf]
      %v475 = vld [vmem:[#allocation2 + $0xb4] sm:$0xf]
      %v476 = vld [vmem:[#allocation2 + $0xb8] sm:$0xf]
      %v477 = vld [vmem:[#allocation2 + $0xbc] sm:$0xf]
      %v478 = vld [vmem:[#allocation2 + $0xc0] sm:$0xf]
      %v479 = vld [vmem:[#allocation2 + $0xc4] sm:$0xf]
      %v480 = vld [vmem:[#allocation2 + $0xc8] sm:$0xf]
      %v481 = vld [vmem:[#allocation2 + $0xcc] sm:$0xf]
      %v482 = vld [vmem:[#allocation2 + $0xd0] sm:$0xf]
      %v483 = vld [vmem:[#allocation2 + $0xd4] sm:$0xf]
      %v484 = vld [vmem:[%s3] sm:$0x1]
      %v486 = vlaneseq
      %v487 = vshrl.u32 %v486, 7
      %v488 = vsub.s32 0, %v487
      %v489 = vrot.slane %v484, %v488
      %v491 = vld [vmem:[%s2] sm:$0xf]
      %v492 = vld [vmem:[%s2 + $0x4] sm:$0xf]
      %v493 = vld [vmem:[%s2 + $0x8] sm:$0xf]
      %v494 = vld [vmem:[%s2 + $0xc] sm:$0xf]
      %v495 = vld [vmem:[%s2 + $0x10] sm:$0xf]
      %v496 = vld [vmem:[%s2 + $0x14] sm:$0xf]
      %v497 = vld [vmem:[%s2 + $0x18] sm:$0xf]
      %v498 = vld [vmem:[%s2 + $0x1c] sm:$0xf]
      %v499 = vld [vmem:[%s2 + $0x20] sm:$0xf]
      %v500 = vld [vmem:[%s2 + $0x24] sm:$0xf]
      %v501 = vld [vmem:[%s2 + $0x28] sm:$0xf]
      %v502 = vld [vmem:[%s2 + $0x2c] sm:$0xf]
      %v503 = vld [vmem:[%s2 + $0x30] sm:$0xf]
      %v504 = vld [vmem:[%s2 + $0x34] sm:$0xf]
      %v505 = vld [vmem:[%s2 + $0x38] sm:$0xf]
      %v506 = vld [vmem:[%s2 + $0x3c] sm:$0xf]
      %s507 = scalar_lea.vmem %s2, 192
      %v508 = vld [vmem:[%s507] sm:$0xf]
      %v509 = vld [vmem:[%s507 + $0x4] sm:$0xf]
      %v510 = vld [vmem:[%s507 + $0x8] sm:$0xf]
      %v511 = vld [vmem:[%s507 + $0xc] sm:$0xf]
      %v512 = vld [vmem:[%s507 + $0x10] sm:$0xf]
      %v513 = vld [vmem:[%s507 + $0x14] sm:$0xf]
      %v514 = vld [vmem:[%s507 + $0x18] sm:$0xf]
      %v515 = vld [vmem:[%s507 + $0x1c] sm:$0xf]
      %v516 = vld [vmem:[%s507 + $0x20] sm:$0xf]
      %v517 = vld [vmem:[%s507 + $0x24] sm:$0xf]
      %v518 = vld [vmem:[%s507 + $0x28] sm:$0xf]
      %v519 = vld [vmem:[%s507 + $0x2c] sm:$0xf]
      %v520 = vld [vmem:[%s507 + $0x30] sm:$0xf]
      %v521 = vld [vmem:[%s507 + $0x34] sm:$0xf]
      %v522 = vld [vmem:[%s507 + $0x38] sm:$0xf]
      %v523 = vld [vmem:[%s507 + $0x3c] sm:$0xf]
      %v572 = vunpack.c.l.b16 %v433
      %v573 = vunpack.c.l.b16 %v434
      %v574 = vunpack.c.l.b16 %v435
      %v575 = vunpack.c.l.b16 %v436
      %v576 = vunpack.c.l.b16 %v437
      %v577 = vunpack.c.l.b16 %v438
      %v578 = vunpack.c.l.b16 %v439
      %v579 = vunpack.c.l.b16 %v440
      %v580 = vunpack.c.l.b16 %v441
      %v581 = vunpack.c.l.b16 %v442
      %v582 = vunpack.c.l.b16 %v443
      %v583 = vunpack.c.l.b16 %v444
      %v584 = vunpack.c.l.b16 %v445
      %v585 = vunpack.c.l.b16 %v446
      %v586 = vunpack.c.l.b16 %v447
      %v587 = vunpack.c.l.b16 %v448
      %v588 = vunpack.c.l.b16 %v449
      %v589 = vunpack.c.l.b16 %v450
      %v590 = vunpack.c.l.b16 %v451
      %v591 = vunpack.c.l.b16 %v452
      %v592 = vunpack.c.l.b16 %v453
      %v593 = vunpack.c.l.b16 %v454
      %v594 = vunpack.c.l.b16 %v455
      %v595 = vunpack.c.l.b16 %v456
      %v596 = vunpack.c.l.b16 %v457
      %v597 = vunpack.c.l.b16 %v458
      %v598 = vunpack.c.l.b16 %v459
      %v599 = vunpack.c.l.b16 %v460
      %v600 = vunpack.c.l.b16 %v461
      %v601 = vunpack.c.l.b16 %v462
      %v602 = vunpack.c.l.b16 %v463
      %v603 = vunpack.c.l.b16 %v464
      %v604 = vunpack.c.l.b16 %v465
      %v605 = vunpack.c.l.b16 %v466
      %v606 = vunpack.c.l.b16 %v467
      %v607 = vunpack.c.l.b16 %v468
      %v608 = vunpack.c.l.b16 %v469
      %v609 = vunpack.c.l.b16 %v470
      %v610 = vunpack.c.l.b16 %v471
      %v611 = vunpack.c.l.b16 %v472
      %v612 = vunpack.c.l.b16 %v473
      %v613 = vunpack.c.l.b16 %v474
      %v614 = vunpack.c.l.b16 %v475
      %v615 = vunpack.c.l.b16 %v476
      %v616 = vunpack.c.l.b16 %v477
      %v617 = vunpack.c.l.b16 %v478
      %v618 = vunpack.c.l.b16 %v479
      %v619 = vunpack.c.l.b16 %v480
      %v620 = vpack.c.b16 %v573, %v572
      %v621 = vpack.c.b16 %v575, %v574
      %v622 = vpack.c.b16 %v577, %v576
      %v623 = vpack.c.b16 %v579, %v578
      %v624 = vpack.c.b16 %v581, %v580
      %v625 = vpack.c.b16 %v583, %v582
      %v626 = vpack.c.b16 %v585, %v584
      %v627 = vpack.c.b16 %v587, %v586
      %v628 = vpack.c.b16 %v589, %v588
      %v629 = vpack.c.b16 %v591, %v590
      %v630 = vpack.c.b16 %v593, %v592
      %v631 = vpack.c.b16 %v595, %v594
      %v632 = vpack.c.b16 %v597, %v596
      %v633 = vpack.c.b16 %v599, %v598
      %v634 = vpack.c.b16 %v601, %v600
      %v635 = vpack.c.b16 %v603, %v602
      %v636 = vpack.c.b16 %v605, %v604
      %v637 = vpack.c.b16 %v607, %v606
      %v638 = vpack.c.b16 %v609, %v608
      %v639 = vpack.c.b16 %v611, %v610
      %v640 = vpack.c.b16 %v613, %v612
      %v641 = vpack.c.b16 %v615, %v614
      %v642 = vpack.c.b16 %v617, %v616
      %v643 = vpack.c.b16 %v619, %v618
      %v684 = vunpack.c.l.b16 %v508
      %v685 = vunpack.c.l.b16 %v509
      %v686 = vunpack.c.l.b16 %v510
      %v687 = vunpack.c.l.b16 %v511
      %v688 = vunpack.c.l.b16 %v512
      %v689 = vunpack.c.l.b16 %v513
      %v690 = vunpack.c.l.b16 %v514
      %v691 = vunpack.c.l.b16 %v515
      %v692 = vunpack.c.l.b16 %v516
      %v693 = vunpack.c.l.b16 %v517
      %v694 = vunpack.c.l.b16 %v518
      %v695 = vunpack.c.l.b16 %v519
      %v696 = vunpack.c.l.b16 %v520
      %v697 = vunpack.c.l.b16 %v521
      %v698 = vunpack.c.l.b16 %v522
      %v699 = vunpack.c.l.b16 %v523
      %v700 = vpack.c.b16 %v685, %v684
      %v701 = vpack.c.b16 %v687, %v686
      %v702 = vpack.c.b16 %v689, %v688
      %v703 = vpack.c.b16 %v691, %v690
      %v704 = vpack.c.b16 %v693, %v692
      %v705 = vpack.c.b16 %v695, %v694
      %v706 = vpack.c.b16 %v697, %v696
      %v707 = vpack.c.b16 %v699, %v698
      %716 = vmatprep.subr.bf16.mxu0 0
      %717 = vmatpush1.bf16.msra.mxu0 %v707
      %718 = vmatprep.subr.bf16.mxu0 0
      %719 = vmatpush1.bf16.msra.mxu0 %v706
      %720 = vmatprep.subr.bf16.mxu0 0
      %721 = vmatpush1.bf16.msra.mxu0 %v705
      %722 = vmatprep.subr.bf16.mxu0 0
      %723 = vmatpush1.bf16.msra.mxu0 %v704
      %724 = vmatprep.subr.bf16.mxu0 0
      %725 = vmatpush1.bf16.msra.mxu0 %v703
      %726 = vmatprep.subr.bf16.mxu0 0
      %727 = vmatpush1.bf16.msra.mxu0 %v702
      %728 = vmatprep.subr.bf16.mxu0 0
      %729 = vmatpush1.bf16.msra.mxu0 %v701
      %730 = vmatprep.subr.bf16.mxu0 0
      %731 = vmatpush1.bf16.msra.mxu0 %v700
      %732 = vmatprep.subr.bf16.mxu0 0
      %733 = vmatpush2.bf16.msra.mxu0 0
      %734 = vmatprep.subr.bf16.mxu0 0
      %735 = vmatpush2.bf16.msra.mxu0 0
      %736 = vmatprep.subr.bf16.mxu0 0
      %737 = vmatpush2.bf16.msra.mxu0 0
      %738 = vmatprep.subr.bf16.mxu0 0
      %739 = vmatpush2.bf16.msra.mxu0 0
      %740 = vmatprep.subr.bf16.mxu0 0
      %741 = vmatpush2.bf16.msra.mxu0 0
      %742 = vmatprep.subr.bf16.mxu0 0
      %743 = vmatpush2.bf16.msra.mxu0 0
      %744 = vmatprep.subr.bf16.mxu0 0
      %745 = vmatpush2.bf16.msra.mxu0 0
      %746 = vmatprep.subr.bf16.mxu0 0
      %747 = vmatpush2.bf16.msra.mxu0 0
      %748 = vmatprep.mubr.bf16.mxu0 0
      %749 = vmatmul.mubr.bf16.gmra.mxu0 %v620
      %v750 = vpop.f32.mrf.mxu0
      %v751 = vadd.f32 0.0, %v750
      %v752 = vpop.f32.mrf.mxu0
      %v753 = vpop.f32.mrf.mxu0
      %v754 = vadd.f32 0.0, %v753
      %v755 = vpop.f32.mrf.mxu0
      %756 = vmatprep.mubr.bf16.mxu0 0
      %757 = vmatmul.mubr.bf16.gmra.mxu0 %v621
      %v758 = vpop.f32.mrf.mxu0
      %v759 = vadd.f32 0.0, %v758
      %v760 = vpop.f32.mrf.mxu0
      %v761 = vpop.f32.mrf.mxu0
      %v762 = vadd.f32 0.0, %v761
      %v763 = vpop.f32.mrf.mxu0
      %764 = vmatprep.mubr.bf16.mxu0 0
      %765 = vmatmul.mubr.bf16.gmra.mxu0 %v622
      %v766 = vpop.f32.mrf.mxu0
      %v767 = vadd.f32 0.0, %v766
      %v768 = vpop.f32.mrf.mxu0
      %v769 = vpop.f32.mrf.mxu0
      %v770 = vadd.f32 0.0, %v769
      %v771 = vpop.f32.mrf.mxu0
      %772 = vmatprep.mubr.bf16.mxu0 0
      %773 = vmatmul.mubr.bf16.gmra.mxu0 %v623
      %v774 = vpop.f32.mrf.mxu0
      %v775 = vadd.f32 0.0, %v774
      %v776 = vpop.f32.mrf.mxu0
      %v777 = vpop.f32.mrf.mxu0
      %v778 = vadd.f32 0.0, %v777
      %v779 = vpop.f32.mrf.mxu0
      %780 = vmatprep.mubr.bf16.mxu0 0
      %781 = vmatmul.mubr.bf16.gmra.mxu0 %v624
      %v782 = vpop.f32.mrf.mxu0
      %v783 = vadd.f32 0.0, %v782
      %v784 = vpop.f32.mrf.mxu0
      %v785 = vpop.f32.mrf.mxu0
      %v786 = vadd.f32 0.0, %v785
      %v787 = vpop.f32.mrf.mxu0
      %788 = vmatprep.mubr.bf16.mxu0 0
      %789 = vmatmul.mubr.bf16.gmra.mxu0 %v625
      %v790 = vpop.f32.mrf.mxu0
      %v791 = vadd.f32 0.0, %v790
      %v792 = vpop.f32.mrf.mxu0
      %v793 = vpop.f32.mrf.mxu0
      %v794 = vadd.f32 0.0, %v793
      %v795 = vpop.f32.mrf.mxu0
      %796 = vmatprep.mubr.bf16.mxu0 0
      %797 = vmatmul.mubr.bf16.gmra.mxu0 %v626
      %v798 = vpop.f32.mrf.mxu0
      %v799 = vadd.f32 0.0, %v798
      %v800 = vpop.f32.mrf.mxu0
      %v801 = vpop.f32.mrf.mxu0
      %v802 = vadd.f32 0.0, %v801
      %v803 = vpop.f32.mrf.mxu0
      %804 = vmatprep.mubr.bf16.mxu0 0
      %805 = vmatmul.mubr.bf16.gmra.mxu0 %v627
      %v806 = vpop.f32.mrf.mxu0
      %v807 = vadd.f32 0.0, %v806
      %v808 = vpop.f32.mrf.mxu0
      %v809 = vpop.f32.mrf.mxu0
      %v810 = vadd.f32 0.0, %v809
      %v811 = vpop.f32.mrf.mxu0
      %812 = vmatprep.mubr.bf16.mxu0 0
      %813 = vmatmul.mubr.bf16.gmra.mxu0 %v628
      %v814 = vpop.f32.mrf.mxu0
      %v815 = vadd.f32 0.0, %v814
      %v816 = vpop.f32.mrf.mxu0
      %v817 = vpop.f32.mrf.mxu0
      %v818 = vadd.f32 0.0, %v817
      %v819 = vpop.f32.mrf.mxu0
      %820 = vmatprep.mubr.bf16.mxu0 0
      %821 = vmatmul.mubr.bf16.gmra.mxu0 %v629
      %v822 = vpop.f32.mrf.mxu0
      %v823 = vadd.f32 0.0, %v822
      %v824 = vpop.f32.mrf.mxu0
      %v825 = vpop.f32.mrf.mxu0
      %v826 = vadd.f32 0.0, %v825
      %v827 = vpop.f32.mrf.mxu0
      %828 = vmatprep.mubr.bf16.mxu0 0
      %829 = vmatmul.mubr.bf16.gmra.mxu0 %v630
      %v830 = vpop.f32.mrf.mxu0
      %v831 = vadd.f32 0.0, %v830
      %v832 = vpop.f32.mrf.mxu0
      %v833 = vpop.f32.mrf.mxu0
      %v834 = vadd.f32 0.0, %v833
      %v835 = vpop.f32.mrf.mxu0
      %836 = vmatprep.mubr.bf16.mxu0 0
      %837 = vmatmul.mubr.bf16.gmra.mxu0 %v631
      %v838 = vpop.f32.mrf.mxu0
      %v839 = vadd.f32 0.0, %v838
      %v840 = vpop.f32.mrf.mxu0
      %v841 = vpop.f32.mrf.mxu0
      %v842 = vadd.f32 0.0, %v841
      %v843 = vpop.f32.mrf.mxu0
      %844 = vmatprep.mubr.bf16.mxu0 0
      %845 = vmatmul.mubr.bf16.gmra.mxu0 %v632
      %v846 = vpop.f32.mrf.mxu0
      %v847 = vadd.f32 0.0, %v846
      %v848 = vpop.f32.mrf.mxu0
      %v849 = vpop.f32.mrf.mxu0
      %v850 = vadd.f32 0.0, %v849
      %v851 = vpop.f32.mrf.mxu0
      %852 = vmatprep.mubr.bf16.mxu0 0
      %853 = vmatmul.mubr.bf16.gmra.mxu0 %v633
      %v854 = vpop.f32.mrf.mxu0
      %v855 = vadd.f32 0.0, %v854
      %v856 = vpop.f32.mrf.mxu0
      %v857 = vpop.f32.mrf.mxu0
      %v858 = vadd.f32 0.0, %v857
      %v859 = vpop.f32.mrf.mxu0
      %860 = vmatprep.mubr.bf16.mxu0 0
      %861 = vmatmul.mubr.bf16.gmra.mxu0 %v634
      %v862 = vpop.f32.mrf.mxu0
      %v863 = vadd.f32 0.0, %v862
      %v864 = vpop.f32.mrf.mxu0
      %v865 = vpop.f32.mrf.mxu0
      %v866 = vadd.f32 0.0, %v865
      %v867 = vpop.f32.mrf.mxu0
      %868 = vmatprep.mubr.bf16.mxu0 0
      %869 = vmatmul.mubr.bf16.gmra.mxu0 %v635
      %v870 = vpop.f32.mrf.mxu0
      %v871 = vadd.f32 0.0, %v870
      %v872 = vpop.f32.mrf.mxu0
      %v873 = vpop.f32.mrf.mxu0
      %v874 = vadd.f32 0.0, %v873
      %v875 = vpop.f32.mrf.mxu0
      %876 = vmatprep.mubr.bf16.mxu0 0
      %877 = vmatmul.mubr.bf16.gmra.mxu0 %v636
      %v878 = vpop.f32.mrf.mxu0
      %v879 = vadd.f32 0.0, %v878
      %v880 = vpop.f32.mrf.mxu0
      %v881 = vpop.f32.mrf.mxu0
      %v882 = vadd.f32 0.0, %v881
      %v883 = vpop.f32.mrf.mxu0
      %884 = vmatprep.mubr.bf16.mxu0 0
      %885 = vmatmul.mubr.bf16.gmra.mxu0 %v637
      %v886 = vpop.f32.mrf.mxu0
      %v887 = vadd.f32 0.0, %v886
      %v888 = vpop.f32.mrf.mxu0
      %v889 = vpop.f32.mrf.mxu0
      %v890 = vadd.f32 0.0, %v889
      %v891 = vpop.f32.mrf.mxu0
      %892 = vmatprep.mubr.bf16.mxu0 0
      %893 = vmatmul.mubr.bf16.gmra.mxu0 %v638
      %v894 = vpop.f32.mrf.mxu0
      %v895 = vadd.f32 0.0, %v894
      %v896 = vpop.f32.mrf.mxu0
      %v897 = vpop.f32.mrf.mxu0
      %v898 = vadd.f32 0.0, %v897
      %v899 = vpop.f32.mrf.mxu0
      %900 = vmatprep.mubr.bf16.mxu0 0
      %901 = vmatmul.mubr.bf16.gmra.mxu0 %v639
      %v902 = vpop.f32.mrf.mxu0
      %v903 = vadd.f32 0.0, %v902
      %v904 = vpop.f32.mrf.mxu0
      %v905 = vpop.f32.mrf.mxu0
      %v906 = vadd.f32 0.0, %v905
      %v907 = vpop.f32.mrf.mxu0
      %908 = vmatprep.mubr.bf16.mxu0 0
      %909 = vmatmul.mubr.bf16.gmra.mxu0 %v640
      %v910 = vpop.f32.mrf.mxu0
      %v911 = vadd.f32 0.0, %v910
      %v912 = vpop.f32.mrf.mxu0
      %v913 = vpop.f32.mrf.mxu0
      %v914 = vadd.f32 0.0, %v913
      %v915 = vpop.f32.mrf.mxu0
      %916 = vmatprep.mubr.bf16.mxu0 0
      %917 = vmatmul.mubr.bf16.gmra.mxu0 %v641
      %v918 = vpop.f32.mrf.mxu0
      %v919 = vadd.f32 0.0, %v918
      %v920 = vpop.f32.mrf.mxu0
      %v921 = vpop.f32.mrf.mxu0
      %v922 = vadd.f32 0.0, %v921
      %v923 = vpop.f32.mrf.mxu0
      %924 = vmatprep.mubr.bf16.mxu0 0
      %925 = vmatmul.mubr.bf16.gmra.mxu0 %v642
      %v926 = vpop.f32.mrf.mxu0
      %v927 = vadd.f32 0.0, %v926
      %v928 = vpop.f32.mrf.mxu0
      %v929 = vpop.f32.mrf.mxu0
      %v930 = vadd.f32 0.0, %v929
      %v931 = vpop.f32.mrf.mxu0
      %932 = vmatprep.mubr.bf16.mxu0 0
      %933 = vmatmul.mubr.bf16.gmra.mxu0 %v643
      %v934 = vpop.f32.mrf.mxu0
      %v935 = vadd.f32 0.0, %v934
      %v936 = vpop.f32.mrf.mxu0
      %v937 = vpop.f32.mrf.mxu0
      %v938 = vadd.f32 0.0, %v937
      %v939 = vpop.f32.mrf.mxu0
      %940 = vdwg.mxu0
      %v944 = vunpack.c.l.b16 %v430
      %v945 = vunpack.c.l.b16 %v431
      %v946 = vunpack.c.l.b16 %v432
      %v947 = vpack.c.b16 %v945, %v944
      %v948 = vpack.c.b16 %v572, %v946
      %v949 = vpack.c.b16 %v574, %v573
      %v950 = vpack.c.b16 %v576, %v575
      %v951 = vpack.c.b16 %v578, %v577
      %v952 = vpack.c.b16 %v580, %v579
      %v953 = vpack.c.b16 %v582, %v581
      %v954 = vpack.c.b16 %v584, %v583
      %v955 = vpack.c.b16 %v586, %v585
      %v956 = vpack.c.b16 %v588, %v587
      %v957 = vpack.c.b16 %v590, %v589
      %v958 = vpack.c.b16 %v592, %v591
      %v959 = vpack.c.b16 %v594, %v593
      %v960 = vpack.c.b16 %v596, %v595
      %v961 = vpack.c.b16 %v598, %v597
      %v962 = vpack.c.b16 %v600, %v599
      %v963 = vpack.c.b16 %v602, %v601
      %v964 = vpack.c.b16 %v604, %v603
      %v965 = vpack.c.b16 %v606, %v605
      %v966 = vpack.c.b16 %v608, %v607
      %v967 = vpack.c.b16 %v610, %v609
      %v968 = vpack.c.b16 %v612, %v611
      %v969 = vpack.c.b16 %v614, %v613
      %v970 = vpack.c.b16 %v616, %v615
      %v1011 = vunpack.c.l.b16 %v491
      %v1012 = vunpack.c.l.b16 %v492
      %v1013 = vunpack.c.l.b16 %v493
      %v1014 = vunpack.c.l.b16 %v494
      %v1015 = vunpack.c.l.b16 %v495
      %v1016 = vunpack.c.l.b16 %v496
      %v1017 = vunpack.c.l.b16 %v497
      %v1018 = vunpack.c.l.b16 %v498
      %v1019 = vunpack.c.l.b16 %v499
      %v1020 = vunpack.c.l.b16 %v500
      %v1021 = vunpack.c.l.b16 %v501
      %v1022 = vunpack.c.l.b16 %v502
      %v1023 = vunpack.c.l.b16 %v503
      %v1024 = vunpack.c.l.b16 %v504
      %v1025 = vunpack.c.l.b16 %v505
      %v1026 = vunpack.c.l.b16 %v506
      %v1027 = vpack.c.b16 %v1012, %v1011
      %v1028 = vpack.c.b16 %v1014, %v1013
      %v1029 = vpack.c.b16 %v1016, %v1015
      %v1030 = vpack.c.b16 %v1018, %v1017
      %v1031 = vpack.c.b16 %v1020, %v1019
      %v1032 = vpack.c.b16 %v1022, %v1021
      %v1033 = vpack.c.b16 %v1024, %v1023
      %v1034 = vpack.c.b16 %v1026, %v1025
      %1043 = vmatprep.subr.bf16.mxu0 0
      %1044 = vmatpush1.bf16.msra.mxu0 %v1034
      %1045 = vmatprep.subr.bf16.mxu0 0
      %1046 = vmatpush1.bf16.msra.mxu0 %v1033
      %1047 = vmatprep.subr.bf16.mxu0 0
      %1048 = vmatpush1.bf16.msra.mxu0 %v1032
      %1049 = vmatprep.subr.bf16.mxu0 0
      %1050 = vmatpush1.bf16.msra.mxu0 %v1031
      %1051 = vmatprep.subr.bf16.mxu0 0
      %1052 = vmatpush1.bf16.msra.mxu0 %v1030
      %1053 = vmatprep.subr.bf16.mxu0 0
      %1054 = vmatpush1.bf16.msra.mxu0 %v1029
      %1055 = vmatprep.subr.bf16.mxu0 0
      %1056 = vmatpush1.bf16.msra.mxu0 %v1028
      %1057 = vmatprep.subr.bf16.mxu0 0
      %1058 = vmatpush1.bf16.msra.mxu0 %v1027
      %1059 = vmatprep.subr.bf16.mxu0 0
      %1060 = vmatpush2.bf16.msra.mxu0 0
      %1061 = vmatprep.subr.bf16.mxu0 0
      %1062 = vmatpush2.bf16.msra.mxu0 0
      %1063 = vmatprep.subr.bf16.mxu0 0
      %1064 = vmatpush2.bf16.msra.mxu0 0
      %1065 = vmatprep.subr.bf16.mxu0 0
      %1066 = vmatpush2.bf16.msra.mxu0 0
      %1067 = vmatprep.subr.bf16.mxu0 0
      %1068 = vmatpush2.bf16.msra.mxu0 0
      %1069 = vmatprep.subr.bf16.mxu0 0
      %1070 = vmatpush2.bf16.msra.mxu0 0
      %1071 = vmatprep.subr.bf16.mxu0 0
      %1072 = vmatpush2.bf16.msra.mxu0 0
      %1073 = vmatprep.subr.bf16.mxu0 0
      %1074 = vmatpush2.bf16.msra.mxu0 0
      %1075 = vmatprep.mubr.bf16.mxu0 0
      %1076 = vmatmul.mubr.bf16.gmra.mxu0 %v947
      %v1077 = vpop.f32.mrf.mxu0
      %v1078 = vadd.f32 %v751, %v1077
      %v1079 = vpop.f32.mrf.mxu0
      %v1080 = vpop.f32.mrf.mxu0
      %v1081 = vadd.f32 %v754, %v1080
      %v1082 = vpop.f32.mrf.mxu0
      %1083 = vmatprep.mubr.bf16.mxu0 0
      %1084 = vmatmul.mubr.bf16.gmra.mxu0 %v948
      %v1085 = vpop.f32.mrf.mxu0
      %v1086 = vadd.f32 %v759, %v1085
      %v1087 = vpop.f32.mrf.mxu0
      %v1088 = vpop.f32.mrf.mxu0
      %v1089 = vadd.f32 %v762, %v1088
      %v1090 = vpop.f32.mrf.mxu0
      %1091 = vmatprep.mubr.bf16.mxu0 0
      %1092 = vmatmul.mubr.bf16.gmra.mxu0 %v949
      %v1093 = vpop.f32.mrf.mxu0
      %v1094 = vadd.f32 %v767, %v1093
      %v1095 = vpop.f32.mrf.mxu0
      %v1096 = vpop.f32.mrf.mxu0
      %v1097 = vadd.f32 %v770, %v1096
      %v1098 = vpop.f32.mrf.mxu0
      %1099 = vmatprep.mubr.bf16.mxu0 0
      %1100 = vmatmul.mubr.bf16.gmra.mxu0 %v950
      %v1101 = vpop.f32.mrf.mxu0
      %v1102 = vadd.f32 %v775, %v1101
      %v1103 = vpop.f32.mrf.mxu0
      %v1104 = vpop.f32.mrf.mxu0
      %v1105 = vadd.f32 %v778, %v1104
      %v1106 = vpop.f32.mrf.mxu0
      %1107 = vmatprep.mubr.bf16.mxu0 0
      %1108 = vmatmul.mubr.bf16.gmra.mxu0 %v951
      %v1109 = vpop.f32.mrf.mxu0
      %v1110 = vadd.f32 %v783, %v1109
      %v1111 = vpop.f32.mrf.mxu0
      %v1112 = vpop.f32.mrf.mxu0
      %v1113 = vadd.f32 %v786, %v1112
      %v1114 = vpop.f32.mrf.mxu0
      %1115 = vmatprep.mubr.bf16.mxu0 0
      %1116 = vmatmul.mubr.bf16.gmra.mxu0 %v952
      %v1117 = vpop.f32.mrf.mxu0
      %v1118 = vadd.f32 %v791, %v1117
      %v1119 = vpop.f32.mrf.mxu0
      %v1120 = vpop.f32.mrf.mxu0
      %v1121 = vadd.f32 %v794, %v1120
      %v1122 = vpop.f32.mrf.mxu0
      %1123 = vmatprep.mubr.bf16.mxu0 0
      %1124 = vmatmul.mubr.bf16.gmra.mxu0 %v953
      %v1125 = vpop.f32.mrf.mxu0
      %v1126 = vadd.f32 %v799, %v1125
      %v1127 = vpop.f32.mrf.mxu0
      %v1128 = vpop.f32.mrf.mxu0
      %v1129 = vadd.f32 %v802, %v1128
      %v1130 = vpop.f32.mrf.mxu0
      %1131 = vmatprep.mubr.bf16.mxu0 0
      %1132 = vmatmul.mubr.bf16.gmra.mxu0 %v954
      %v1133 = vpop.f32.mrf.mxu0
      %v1134 = vadd.f32 %v807, %v1133
      %v1135 = vpop.f32.mrf.mxu0
      %v1136 = vpop.f32.mrf.mxu0
      %v1137 = vadd.f32 %v810, %v1136
      %v1138 = vpop.f32.mrf.mxu0
      %1139 = vmatprep.mubr.bf16.mxu0 0
      %1140 = vmatmul.mubr.bf16.gmra.mxu0 %v955
      %v1141 = vpop.f32.mrf.mxu0
      %v1142 = vadd.f32 %v815, %v1141
      %v1143 = vpop.f32.mrf.mxu0
      %v1144 = vpop.f32.mrf.mxu0
      %v1145 = vadd.f32 %v818, %v1144
      %v1146 = vpop.f32.mrf.mxu0
      %1147 = vmatprep.mubr.bf16.mxu0 0
      %1148 = vmatmul.mubr.bf16.gmra.mxu0 %v956
      %v1149 = vpop.f32.mrf.mxu0
      %v1150 = vadd.f32 %v823, %v1149
      %v1151 = vpop.f32.mrf.mxu0
      %v1152 = vpop.f32.mrf.mxu0
      %v1153 = vadd.f32 %v826, %v1152
      %v1154 = vpop.f32.mrf.mxu0
      %1155 = vmatprep.mubr.bf16.mxu0 0
      %1156 = vmatmul.mubr.bf16.gmra.mxu0 %v957
      %v1157 = vpop.f32.mrf.mxu0
      %v1158 = vadd.f32 %v831, %v1157
      %v1159 = vpop.f32.mrf.mxu0
      %v1160 = vpop.f32.mrf.mxu0
      %v1161 = vadd.f32 %v834, %v1160
      %v1162 = vpop.f32.mrf.mxu0
      %1163 = vmatprep.mubr.bf16.mxu0 0
      %1164 = vmatmul.mubr.bf16.gmra.mxu0 %v958
      %v1165 = vpop.f32.mrf.mxu0
      %v1166 = vadd.f32 %v839, %v1165
      %v1167 = vpop.f32.mrf.mxu0
      %v1168 = vpop.f32.mrf.mxu0
      %v1169 = vadd.f32 %v842, %v1168
      %v1170 = vpop.f32.mrf.mxu0
      %1171 = vmatprep.mubr.bf16.mxu0 0
      %1172 = vmatmul.mubr.bf16.gmra.mxu0 %v959
      %v1173 = vpop.f32.mrf.mxu0
      %v1174 = vadd.f32 %v847, %v1173
      %v1175 = vpop.f32.mrf.mxu0
      %v1176 = vpop.f32.mrf.mxu0
      %v1177 = vadd.f32 %v850, %v1176
      %v1178 = vpop.f32.mrf.mxu0
      %1179 = vmatprep.mubr.bf16.mxu0 0
      %1180 = vmatmul.mubr.bf16.gmra.mxu0 %v960
      %v1181 = vpop.f32.mrf.mxu0
      %v1182 = vadd.f32 %v855, %v1181
      %v1183 = vpop.f32.mrf.mxu0
      %v1184 = vpop.f32.mrf.mxu0
      %v1185 = vadd.f32 %v858, %v1184
      %v1186 = vpop.f32.mrf.mxu0
      %1187 = vmatprep.mubr.bf16.mxu0 0
      %1188 = vmatmul.mubr.bf16.gmra.mxu0 %v961
      %v1189 = vpop.f32.mrf.mxu0
      %v1190 = vadd.f32 %v863, %v1189
      %v1191 = vpop.f32.mrf.mxu0
      %v1192 = vpop.f32.mrf.mxu0
      %v1193 = vadd.f32 %v866, %v1192
      %v1194 = vpop.f32.mrf.mxu0
      %1195 = vmatprep.mubr.bf16.mxu0 0
      %1196 = vmatmul.mubr.bf16.gmra.mxu0 %v962
      %v1197 = vpop.f32.mrf.mxu0
      %v1198 = vadd.f32 %v871, %v1197
      %v1199 = vpop.f32.mrf.mxu0
      %v1200 = vpop.f32.mrf.mxu0
      %v1201 = vadd.f32 %v874, %v1200
      %v1202 = vpop.f32.mrf.mxu0
      %1203 = vmatprep.mubr.bf16.mxu0 0
      %1204 = vmatmul.mubr.bf16.gmra.mxu0 %v963
      %v1205 = vpop.f32.mrf.mxu0
      %v1206 = vadd.f32 %v879, %v1205
      %v1207 = vpop.f32.mrf.mxu0
      %v1208 = vpop.f32.mrf.mxu0
      %v1209 = vadd.f32 %v882, %v1208
      %v1210 = vpop.f32.mrf.mxu0
      %1211 = vmatprep.mubr.bf16.mxu0 0
      %1212 = vmatmul.mubr.bf16.gmra.mxu0 %v964
      %v1213 = vpop.f32.mrf.mxu0
      %v1214 = vadd.f32 %v887, %v1213
      %v1215 = vpop.f32.mrf.mxu0
      %v1216 = vpop.f32.mrf.mxu0
      %v1217 = vadd.f32 %v890, %v1216
      %v1218 = vpop.f32.mrf.mxu0
      %1219 = vmatprep.mubr.bf16.mxu0 0
      %1220 = vmatmul.mubr.bf16.gmra.mxu0 %v965
      %v1221 = vpop.f32.mrf.mxu0
      %v1222 = vadd.f32 %v895, %v1221
      %v1223 = vpop.f32.mrf.mxu0
      %v1224 = vpop.f32.mrf.mxu0
      %v1225 = vadd.f32 %v898, %v1224
      %v1226 = vpop.f32.mrf.mxu0
      %1227 = vmatprep.mubr.bf16.mxu0 0
      %1228 = vmatmul.mubr.bf16.gmra.mxu0 %v966
      %v1229 = vpop.f32.mrf.mxu0
      %v1230 = vadd.f32 %v903, %v1229
      %v1231 = vpop.f32.mrf.mxu0
      %v1232 = vpop.f32.mrf.mxu0
      %v1233 = vadd.f32 %v906, %v1232
      %v1234 = vpop.f32.mrf.mxu0
      %1235 = vmatprep.mubr.bf16.mxu0 0
      %1236 = vmatmul.mubr.bf16.gmra.mxu0 %v967
      %v1237 = vpop.f32.mrf.mxu0
      %v1238 = vadd.f32 %v911, %v1237
      %v1239 = vpop.f32.mrf.mxu0
      %v1240 = vpop.f32.mrf.mxu0
      %v1241 = vadd.f32 %v914, %v1240
      %v1242 = vpop.f32.mrf.mxu0
      %1243 = vmatprep.mubr.bf16.mxu0 0
      %1244 = vmatmul.mubr.bf16.gmra.mxu0 %v968
      %v1245 = vpop.f32.mrf.mxu0
      %v1246 = vadd.f32 %v919, %v1245
      %v1247 = vpop.f32.mrf.mxu0
      %v1248 = vpop.f32.mrf.mxu0
      %v1249 = vadd.f32 %v922, %v1248
      %v1250 = vpop.f32.mrf.mxu0
      %1251 = vmatprep.mubr.bf16.mxu0 0
      %1252 = vmatmul.mubr.bf16.gmra.mxu0 %v969
      %v1253 = vpop.f32.mrf.mxu0
      %v1254 = vadd.f32 %v927, %v1253
      %v1255 = vpop.f32.mrf.mxu0
      %v1256 = vpop.f32.mrf.mxu0
      %v1257 = vadd.f32 %v930, %v1256
      %v1258 = vpop.f32.mrf.mxu0
      %1259 = vmatprep.mubr.bf16.mxu0 0
      %1260 = vmatmul.mubr.bf16.gmra.mxu0 %v970
      %v1261 = vpop.f32.mrf.mxu0
      %v1262 = vadd.f32 %v935, %v1261
      %v1263 = vpop.f32.mrf.mxu0
      %v1264 = vpop.f32.mrf.mxu0
      %v1265 = vadd.f32 %v938, %v1264
      %v1266 = vpop.f32.mrf.mxu0
      %1267 = vdwg.mxu0
      %s1268 = scalar_lea.vmem %s2, 384
      %v1269 = vld [vmem:[%s1268] sm:$0xf]
      %v1270 = vld [vmem:[%s1268 + $0x4] sm:$0xf]
      %v1271 = vld [vmem:[%s1268 + $0x8] sm:$0xf]
      %v1272 = vld [vmem:[%s1268 + $0xc] sm:$0xf]
      %v1273 = vld [vmem:[%s1268 + $0x10] sm:$0xf]
      %v1274 = vld [vmem:[%s1268 + $0x14] sm:$0xf]
      %v1275 = vld [vmem:[%s1268 + $0x18] sm:$0xf]
      %v1276 = vld [vmem:[%s1268 + $0x1c] sm:$0xf]
      %v1277 = vld [vmem:[%s1268 + $0x20] sm:$0xf]
      %v1278 = vld [vmem:[%s1268 + $0x24] sm:$0xf]
      %v1279 = vld [vmem:[%s1268 + $0x28] sm:$0xf]
      %v1280 = vld [vmem:[%s1268 + $0x2c] sm:$0xf]
      %v1281 = vld [vmem:[%s1268 + $0x30] sm:$0xf]
      %v1282 = vld [vmem:[%s1268 + $0x34] sm:$0xf]
      %v1283 = vld [vmem:[%s1268 + $0x38] sm:$0xf]
      %v1284 = vld [vmem:[%s1268 + $0x3c] sm:$0xf]
      %v1288 = vunpack.c.l.b16 %v481
      %v1289 = vunpack.c.l.b16 %v482
      %v1290 = vunpack.c.l.b16 %v483
      %v1291 = vpack.c.b16 %v618, %v617
      %v1292 = vpack.c.b16 %v1288, %v619
      %v1293 = vpack.c.b16 %v1290, %v1289
      %v1313 = vunpack.c.l.b16 %v1269
      %v1314 = vunpack.c.l.b16 %v1270
      %v1315 = vunpack.c.l.b16 %v1271
      %v1316 = vunpack.c.l.b16 %v1272
      %v1317 = vunpack.c.l.b16 %v1273
      %v1318 = vunpack.c.l.b16 %v1274
      %v1319 = vunpack.c.l.b16 %v1275
      %v1320 = vunpack.c.l.b16 %v1276
      %v1321 = vunpack.c.l.b16 %v1277
      %v1322 = vunpack.c.l.b16 %v1278
      %v1323 = vunpack.c.l.b16 %v1279
      %v1324 = vunpack.c.l.b16 %v1280
      %v1325 = vunpack.c.l.b16 %v1281
      %v1326 = vunpack.c.l.b16 %v1282
      %v1327 = vunpack.c.l.b16 %v1283
      %v1328 = vunpack.c.l.b16 %v1284
      %v1329 = vpack.c.b16 %v1314, %v1313
      %v1330 = vpack.c.b16 %v1316, %v1315
      %v1331 = vpack.c.b16 %v1318, %v1317
      %v1332 = vpack.c.b16 %v1320, %v1319
      %v1333 = vpack.c.b16 %v1322, %v1321
      %v1334 = vpack.c.b16 %v1324, %v1323
      %v1335 = vpack.c.b16 %v1326, %v1325
      %v1336 = vpack.c.b16 %v1328, %v1327
      %1345 = vmatprep.subr.bf16.mxu0 0
      %1346 = vmatpush1.bf16.msra.mxu0 %v1336
      %1347 = vmatprep.subr.bf16.mxu0 0
      %1348 = vmatpush1.bf16.msra.mxu0 %v1335
      %1349 = vmatprep.subr.bf16.mxu0 0
      %1350 = vmatpush1.bf16.msra.mxu0 %v1334
      %1351 = vmatprep.subr.bf16.mxu0 0
      %1352 = vmatpush1.bf16.msra.mxu0 %v1333
      %1353 = vmatprep.subr.bf16.mxu0 0
      %1354 = vmatpush1.bf16.msra.mxu0 %v1332
      %1355 = vmatprep.subr.bf16.mxu0 0
      %1356 = vmatpush1.bf16.msra.mxu0 %v1331
      %1357 = vmatprep.subr.bf16.mxu0 0
      %1358 = vmatpush1.bf16.msra.mxu0 %v1330
      %1359 = vmatprep.subr.bf16.mxu0 0
      %1360 = vmatpush1.bf16.msra.mxu0 %v1329
      %1361 = vmatprep.subr.bf16.mxu0 0
      %1362 = vmatpush2.bf16.msra.mxu0 0
      %1363 = vmatprep.subr.bf16.mxu0 0
      %1364 = vmatpush2.bf16.msra.mxu0 0
      %1365 = vmatprep.subr.bf16.mxu0 0
      %1366 = vmatpush2.bf16.msra.mxu0 0
      %1367 = vmatprep.subr.bf16.mxu0 0
      %1368 = vmatpush2.bf16.msra.mxu0 0
      %1369 = vmatprep.subr.bf16.mxu0 0
      %1370 = vmatpush2.bf16.msra.mxu0 0
      %1371 = vmatprep.subr.bf16.mxu0 0
      %1372 = vmatpush2.bf16.msra.mxu0 0
      %1373 = vmatprep.subr.bf16.mxu0 0
      %1374 = vmatpush2.bf16.msra.mxu0 0
      %1375 = vmatprep.subr.bf16.mxu0 0
      %1376 = vmatpush2.bf16.msra.mxu0 0
      %1377 = vmatprep.mubr.bf16.mxu0 0
      %1378 = vmatmul.mubr.bf16.gmra.mxu0 %v950
      %v1379 = vpop.f32.mrf.mxu0
      %v1380 = vadd.f32 0.0, %v1379
      %v1381 = vpop.f32.mrf.mxu0
      %v1382 = vpop.f32.mrf.mxu0
      %v1383 = vadd.f32 0.0, %v1382
      %v1384 = vpop.f32.mrf.mxu0
      %1385 = vmatprep.mubr.bf16.mxu0 0
      %1386 = vmatmul.mubr.bf16.gmra.mxu0 %v951
      %v1387 = vpop.f32.mrf.mxu0
      %v1388 = vadd.f32 0.0, %v1387
      %v1389 = vpop.f32.mrf.mxu0
      %v1390 = vpop.f32.mrf.mxu0
      %v1391 = vadd.f32 0.0, %v1390
      %v1392 = vpop.f32.mrf.mxu0
      %1393 = vmatprep.mubr.bf16.mxu0 0
      %1394 = vmatmul.mubr.bf16.gmra.mxu0 %v952
      %v1395 = vpop.f32.mrf.mxu0
      %v1396 = vadd.f32 0.0, %v1395
      %v1397 = vpop.f32.mrf.mxu0
      %v1398 = vpop.f32.mrf.mxu0
      %v1399 = vadd.f32 0.0, %v1398
      %v1400 = vpop.f32.mrf.mxu0
      %1401 = vmatprep.mubr.bf16.mxu0 0
      %1402 = vmatmul.mubr.bf16.gmra.mxu0 %v953
      %v1403 = vpop.f32.mrf.mxu0
      %v1404 = vadd.f32 0.0, %v1403
      %v1405 = vpop.f32.mrf.mxu0
      %v1406 = vpop.f32.mrf.mxu0
      %v1407 = vadd.f32 0.0, %v1406
      %v1408 = vpop.f32.mrf.mxu0
      %1409 = vmatprep.mubr.bf16.mxu0 0
      %1410 = vmatmul.mubr.bf16.gmra.mxu0 %v954
      %v1411 = vpop.f32.mrf.mxu0
      %v1412 = vadd.f32 0.0, %v1411
      %v1413 = vpop.f32.mrf.mxu0
      %v1414 = vpop.f32.mrf.mxu0
      %v1415 = vadd.f32 0.0, %v1414
      %v1416 = vpop.f32.mrf.mxu0
      %1417 = vmatprep.mubr.bf16.mxu0 0
      %1418 = vmatmul.mubr.bf16.gmra.mxu0 %v955
      %v1419 = vpop.f32.mrf.mxu0
      %v1420 = vadd.f32 0.0, %v1419
      %v1421 = vpop.f32.mrf.mxu0
      %v1422 = vpop.f32.mrf.mxu0
      %v1423 = vadd.f32 0.0, %v1422
      %v1424 = vpop.f32.mrf.mxu0
      %1425 = vmatprep.mubr.bf16.mxu0 0
      %1426 = vmatmul.mubr.bf16.gmra.mxu0 %v956
      %v1427 = vpop.f32.mrf.mxu0
      %v1428 = vadd.f32 0.0, %v1427
      %v1429 = vpop.f32.mrf.mxu0
      %v1430 = vpop.f32.mrf.mxu0
      %v1431 = vadd.f32 0.0, %v1430
      %v1432 = vpop.f32.mrf.mxu0
      %1433 = vmatprep.mubr.bf16.mxu0 0
      %1434 = vmatmul.mubr.bf16.gmra.mxu0 %v957
      %v1435 = vpop.f32.mrf.mxu0
      %v1436 = vadd.f32 0.0, %v1435
      %v1437 = vpop.f32.mrf.mxu0
      %v1438 = vpop.f32.mrf.mxu0
      %v1439 = vadd.f32 0.0, %v1438
      %v1440 = vpop.f32.mrf.mxu0
      %1441 = vmatprep.mubr.bf16.mxu0 0
      %1442 = vmatmul.mubr.bf16.gmra.mxu0 %v958
      %v1443 = vpop.f32.mrf.mxu0
      %v1444 = vadd.f32 0.0, %v1443
      %v1445 = vpop.f32.mrf.mxu0
      %v1446 = vpop.f32.mrf.mxu0
      %v1447 = vadd.f32 0.0, %v1446
      %v1448 = vpop.f32.mrf.mxu0
      %1449 = vmatprep.mubr.bf16.mxu0 0
      %1450 = vmatmul.mubr.bf16.gmra.mxu0 %v959
      %v1451 = vpop.f32.mrf.mxu0
      %v1452 = vadd.f32 0.0, %v1451
      %v1453 = vpop.f32.mrf.mxu0
      %v1454 = vpop.f32.mrf.mxu0
      %v1455 = vadd.f32 0.0, %v1454
      %v1456 = vpop.f32.mrf.mxu0
      %1457 = vmatprep.mubr.bf16.mxu0 0
      %1458 = vmatmul.mubr.bf16.gmra.mxu0 %v960
      %v1459 = vpop.f32.mrf.mxu0
      %v1460 = vadd.f32 0.0, %v1459
      %v1461 = vpop.f32.mrf.mxu0
      %v1462 = vpop.f32.mrf.mxu0
      %v1463 = vadd.f32 0.0, %v1462
      %v1464 = vpop.f32.mrf.mxu0
      %1465 = vmatprep.mubr.bf16.mxu0 0
      %1466 = vmatmul.mubr.bf16.gmra.mxu0 %v961
      %v1467 = vpop.f32.mrf.mxu0
      %v1468 = vadd.f32 0.0, %v1467
      %v1469 = vpop.f32.mrf.mxu0
      %v1470 = vpop.f32.mrf.mxu0
      %v1471 = vadd.f32 0.0, %v1470
      %v1472 = vpop.f32.mrf.mxu0
      %1473 = vmatprep.mubr.bf16.mxu0 0
      %1474 = vmatmul.mubr.bf16.gmra.mxu0 %v962
      %v1475 = vpop.f32.mrf.mxu0
      %v1476 = vadd.f32 0.0, %v1475
      %v1477 = vpop.f32.mrf.mxu0
      %v1478 = vpop.f32.mrf.mxu0
      %v1479 = vadd.f32 0.0, %v1478
      %v1480 = vpop.f32.mrf.mxu0
      %1481 = vmatprep.mubr.bf16.mxu0 0
      %1482 = vmatmul.mubr.bf16.gmra.mxu0 %v963
      %v1483 = vpop.f32.mrf.mxu0
      %v1484 = vadd.f32 0.0, %v1483
      %v1485 = vpop.f32.mrf.mxu0
      %v1486 = vpop.f32.mrf.mxu0
      %v1487 = vadd.f32 0.0, %v1486
      %v1488 = vpop.f32.mrf.mxu0
      %1489 = vmatprep.mubr.bf16.mxu0 0
      %1490 = vmatmul.mubr.bf16.gmra.mxu0 %v964
      %v1491 = vpop.f32.mrf.mxu0
      %v1492 = vadd.f32 0.0, %v1491
      %v1493 = vpop.f32.mrf.mxu0
      %v1494 = vpop.f32.mrf.mxu0
      %v1495 = vadd.f32 0.0, %v1494
      %v1496 = vpop.f32.mrf.mxu0
      %1497 = vmatprep.mubr.bf16.mxu0 0
      %1498 = vmatmul.mubr.bf16.gmra.mxu0 %v965
      %v1499 = vpop.f32.mrf.mxu0
      %v1500 = vadd.f32 0.0, %v1499
      %v1501 = vpop.f32.mrf.mxu0
      %v1502 = vpop.f32.mrf.mxu0
      %v1503 = vadd.f32 0.0, %v1502
      %v1504 = vpop.f32.mrf.mxu0
      %1505 = vmatprep.mubr.bf16.mxu0 0
      %1506 = vmatmul.mubr.bf16.gmra.mxu0 %v966
      %v1507 = vpop.f32.mrf.mxu0
      %v1508 = vadd.f32 0.0, %v1507
      %v1509 = vpop.f32.mrf.mxu0
      %v1510 = vpop.f32.mrf.mxu0
      %v1511 = vadd.f32 0.0, %v1510
      %v1512 = vpop.f32.mrf.mxu0
      %1513 = vmatprep.mubr.bf16.mxu0 0
      %1514 = vmatmul.mubr.bf16.gmra.mxu0 %v967
      %v1515 = vpop.f32.mrf.mxu0
      %v1516 = vadd.f32 0.0, %v1515
      %v1517 = vpop.f32.mrf.mxu0
      %v1518 = vpop.f32.mrf.mxu0
      %v1519 = vadd.f32 0.0, %v1518
      %v1520 = vpop.f32.mrf.mxu0
      %1521 = vmatprep.mubr.bf16.mxu0 0
      %1522 = vmatmul.mubr.bf16.gmra.mxu0 %v968
      %v1523 = vpop.f32.mrf.mxu0
      %v1524 = vadd.f32 0.0, %v1523
      %v1525 = vpop.f32.mrf.mxu0
      %v1526 = vpop.f32.mrf.mxu0
      %v1527 = vadd.f32 0.0, %v1526
      %v1528 = vpop.f32.mrf.mxu0
      %1529 = vmatprep.mubr.bf16.mxu0 0
      %1530 = vmatmul.mubr.bf16.gmra.mxu0 %v969
      %v1531 = vpop.f32.mrf.mxu0
      %v1532 = vadd.f32 0.0, %v1531
      %v1533 = vpop.f32.mrf.mxu0
      %v1534 = vpop.f32.mrf.mxu0
      %v1535 = vadd.f32 0.0, %v1534
      %v1536 = vpop.f32.mrf.mxu0
      %1537 = vmatprep.mubr.bf16.mxu0 0
      %1538 = vmatmul.mubr.bf16.gmra.mxu0 %v970
      %v1539 = vpop.f32.mrf.mxu0
      %v1540 = vadd.f32 0.0, %v1539
      %v1541 = vpop.f32.mrf.mxu0
      %v1542 = vpop.f32.mrf.mxu0
      %v1543 = vadd.f32 0.0, %v1542
      %v1544 = vpop.f32.mrf.mxu0
      %1545 = vmatprep.mubr.bf16.mxu0 0
      %1546 = vmatmul.mubr.bf16.gmra.mxu0 %v1291
      %v1547 = vpop.f32.mrf.mxu0
      %v1548 = vadd.f32 0.0, %v1547
      %v1549 = vpop.f32.mrf.mxu0
      %v1550 = vpop.f32.mrf.mxu0
      %v1551 = vadd.f32 0.0, %v1550
      %v1552 = vpop.f32.mrf.mxu0
      %1553 = vmatprep.mubr.bf16.mxu0 0
      %1554 = vmatmul.mubr.bf16.gmra.mxu0 %v1292
      %v1555 = vpop.f32.mrf.mxu0
      %v1556 = vadd.f32 0.0, %v1555
      %v1557 = vpop.f32.mrf.mxu0
      %v1558 = vpop.f32.mrf.mxu0
      %v1559 = vadd.f32 0.0, %v1558
      %v1560 = vpop.f32.mrf.mxu0
      %1561 = vmatprep.mubr.bf16.mxu0 0
      %1562 = vmatmul.mubr.bf16.gmra.mxu0 %v1293
      %v1563 = vpop.f32.mrf.mxu0
      %v1564 = vadd.f32 0.0, %v1563
      %v1565 = vpop.f32.mrf.mxu0
      %v1566 = vpop.f32.mrf.mxu0
      %v1567 = vadd.f32 0.0, %v1566
      %v1568 = vpop.f32.mrf.mxu0
      %1569 = vdwg.mxu0
      %v1570 = vadd.f32 %v1078, %v1380
      %v1571 = vadd.f32 %v1081, %v1383
      %v1572 = vadd.f32 %v1086, %v1388
      %v1573 = vadd.f32 %v1089, %v1391
      %v1574 = vadd.f32 %v1094, %v1396
      %v1575 = vadd.f32 %v1097, %v1399
      %v1576 = vadd.f32 %v1102, %v1404
      %v1577 = vadd.f32 %v1105, %v1407
      %v1578 = vadd.f32 %v1110, %v1412
      %v1579 = vadd.f32 %v1113, %v1415
      %v1580 = vadd.f32 %v1118, %v1420
      %v1581 = vadd.f32 %v1121, %v1423
      %v1582 = vadd.f32 %v1126, %v1428
      %v1583 = vadd.f32 %v1129, %v1431
      %v1584 = vadd.f32 %v1134, %v1436
      %v1585 = vadd.f32 %v1137, %v1439
      %v1586 = vadd.f32 %v1142, %v1444
      %v1587 = vadd.f32 %v1145, %v1447
      %v1588 = vadd.f32 %v1150, %v1452
      %v1589 = vadd.f32 %v1153, %v1455
      %v1590 = vadd.f32 %v1158, %v1460
      %v1591 = vadd.f32 %v1161, %v1463
      %v1592 = vadd.f32 %v1166, %v1468
      %v1593 = vadd.f32 %v1169, %v1471
      %v1594 = vadd.f32 %v1174, %v1476
      %v1595 = vadd.f32 %v1177, %v1479
      %v1596 = vadd.f32 %v1182, %v1484
      %v1597 = vadd.f32 %v1185, %v1487
      %v1598 = vadd.f32 %v1190, %v1492
      %v1599 = vadd.f32 %v1193, %v1495
      %v1600 = vadd.f32 %v1198, %v1500
      %v1601 = vadd.f32 %v1201, %v1503
      %v1602 = vadd.f32 %v1206, %v1508
      %v1603 = vadd.f32 %v1209, %v1511
      %v1604 = vadd.f32 %v1214, %v1516
      %v1605 = vadd.f32 %v1217, %v1519
      %v1606 = vadd.f32 %v1222, %v1524
      %v1607 = vadd.f32 %v1225, %v1527
      %v1608 = vadd.f32 %v1230, %v1532
      %v1609 = vadd.f32 %v1233, %v1535
      %v1610 = vadd.f32 %v1238, %v1540
      %v1611 = vadd.f32 %v1241, %v1543
      %v1612 = vadd.f32 %v1246, %v1548
      %v1613 = vadd.f32 %v1249, %v1551
      %v1614 = vadd.f32 %v1254, %v1556
      %v1615 = vadd.f32 %v1257, %v1559
      %v1616 = vadd.f32 %v1262, %v1564
      %v1617 = vadd.f32 %v1265, %v1567
      %v1618 = vadd.f32 %v489, %v1570
      %v1619 = vadd.f32 %v489, %v1571
      %v1620 = vadd.f32 %v489, %v1572
      %v1621 = vadd.f32 %v489, %v1573
      %v1622 = vadd.f32 %v489, %v1574
      %v1623 = vadd.f32 %v489, %v1575
      %v1624 = vadd.f32 %v489, %v1576
      %v1625 = vadd.f32 %v489, %v1577
      %v1626 = vadd.f32 %v489, %v1578
      %v1627 = vadd.f32 %v489, %v1579
      %v1628 = vadd.f32 %v489, %v1580
      %v1629 = vadd.f32 %v489, %v1581
      %v1630 = vadd.f32 %v489, %v1582
      %v1631 = vadd.f32 %v489, %v1583
      %v1632 = vadd.f32 %v489, %v1584
      %v1633 = vadd.f32 %v489, %v1585
      %v1634 = vadd.f32 %v489, %v1586
      %v1635 = vadd.f32 %v489, %v1587
      %v1636 = vadd.f32 %v489, %v1588
      %v1637 = vadd.f32 %v489, %v1589
      %v1638 = vadd.f32 %v489, %v1590
      %v1639 = vadd.f32 %v489, %v1591
      %v1640 = vadd.f32 %v489, %v1592
      %v1641 = vadd.f32 %v489, %v1593
      %v1642 = vadd.f32 %v489, %v1594
      %v1643 = vadd.f32 %v489, %v1595
      %v1644 = vadd.f32 %v489, %v1596
      %v1645 = vadd.f32 %v489, %v1597
      %v1646 = vadd.f32 %v489, %v1598
      %v1647 = vadd.f32 %v489, %v1599
      %v1648 = vadd.f32 %v489, %v1600
      %v1649 = vadd.f32 %v489, %v1601
      %v1650 = vadd.f32 %v489, %v1602
      %v1651 = vadd.f32 %v489, %v1603
      %v1652 = vadd.f32 %v489, %v1604
      %v1653 = vadd.f32 %v489, %v1605
      %v1654 = vadd.f32 %v489, %v1606
      %v1655 = vadd.f32 %v489, %v1607
      %v1656 = vadd.f32 %v489, %v1608
      %v1657 = vadd.f32 %v489, %v1609
      %v1658 = vadd.f32 %v489, %v1610
      %v1659 = vadd.f32 %v489, %v1611
      %v1660 = vadd.f32 %v489, %v1612
      %v1661 = vadd.f32 %v489, %v1613
      %v1662 = vadd.f32 %v489, %v1614
      %v1663 = vadd.f32 %v489, %v1615
      %v1664 = vadd.f32 %v489, %v1616
      %v1665 = vadd.f32 %v489, %v1617
      %s1666 = scalar_lea.vmem %s2, 64
      %v1667 = vld [vmem:[%s1666] sm:$0xf]
      %v1668 = vld [vmem:[%s1666 + $0x4] sm:$0xf]
      %v1669 = vld [vmem:[%s1666 + $0x8] sm:$0xf]
      %v1670 = vld [vmem:[%s1666 + $0xc] sm:$0xf]
      %v1671 = vld [vmem:[%s1666 + $0x10] sm:$0xf]
      %v1672 = vld [vmem:[%s1666 + $0x14] sm:$0xf]
      %v1673 = vld [vmem:[%s1666 + $0x18] sm:$0xf]
      %v1674 = vld [vmem:[%s1666 + $0x1c] sm:$0xf]
      %v1675 = vld [vmem:[%s1666 + $0x20] sm:$0xf]
      %v1676 = vld [vmem:[%s1666 + $0x24] sm:$0xf]
      %v1677 = vld [vmem:[%s1666 + $0x28] sm:$0xf]
      %v1678 = vld [vmem:[%s1666 + $0x2c] sm:$0xf]
      %v1679 = vld [vmem:[%s1666 + $0x30] sm:$0xf]
      %v1680 = vld [vmem:[%s1666 + $0x34] sm:$0xf]
      %v1681 = vld [vmem:[%s1666 + $0x38] sm:$0xf]
      %v1682 = vld [vmem:[%s1666 + $0x3c] sm:$0xf]
      %s1683 = scalar_lea.vmem %s2, 256
      %v1684 = vld [vmem:[%s1683] sm:$0xf]
      %v1685 = vld [vmem:[%s1683 + $0x4] sm:$0xf]
      %v1686 = vld [vmem:[%s1683 + $0x8] sm:$0xf]
      %v1687 = vld [vmem:[%s1683 + $0xc] sm:$0xf]
      %v1688 = vld [vmem:[%s1683 + $0x10] sm:$0xf]
      %v1689 = vld [vmem:[%s1683 + $0x14] sm:$0xf]
      %v1690 = vld [vmem:[%s1683 + $0x18] sm:$0xf]
      %v1691 = vld [vmem:[%s1683 + $0x1c] sm:$0xf]
      %v1692 = vld [vmem:[%s1683 + $0x20] sm:$0xf]
      %v1693 = vld [vmem:[%s1683 + $0x24] sm:$0xf]
      %v1694 = vld [vmem:[%s1683 + $0x28] sm:$0xf]
      %v1695 = vld [vmem:[%s1683 + $0x2c] sm:$0xf]
      %v1696 = vld [vmem:[%s1683 + $0x30] sm:$0xf]
      %v1697 = vld [vmem:[%s1683 + $0x34] sm:$0xf]
      %v1698 = vld [vmem:[%s1683 + $0x38] sm:$0xf]
      %v1699 = vld [vmem:[%s1683 + $0x3c] sm:$0xf]
      %v1716 = vunpack.c.l.b16 %v1684
      %v1717 = vunpack.c.l.b16 %v1685
      %v1718 = vunpack.c.l.b16 %v1686
      %v1719 = vunpack.c.l.b16 %v1687
      %v1720 = vunpack.c.l.b16 %v1688
      %v1721 = vunpack.c.l.b16 %v1689
      %v1722 = vunpack.c.l.b16 %v1690
      %v1723 = vunpack.c.l.b16 %v1691
      %v1724 = vunpack.c.l.b16 %v1692
      %v1725 = vunpack.c.l.b16 %v1693
      %v1726 = vunpack.c.l.b16 %v1694
      %v1727 = vunpack.c.l.b16 %v1695
      %v1728 = vunpack.c.l.b16 %v1696
      %v1729 = vunpack.c.l.b16 %v1697
      %v1730 = vunpack.c.l.b16 %v1698
      %v1731 = vunpack.c.l.b16 %v1699
      %v1732 = vpack.c.b16 %v1717, %v1716
      %v1733 = vpack.c.b16 %v1719, %v1718
      %v1734 = vpack.c.b16 %v1721, %v1720
      %v1735 = vpack.c.b16 %v1723, %v1722
      %v1736 = vpack.c.b16 %v1725, %v1724
      %v1737 = vpack.c.b16 %v1727, %v1726
      %v1738 = vpack.c.b16 %v1729, %v1728
      %v1739 = vpack.c.b16 %v1731, %v1730
      %1748 = vmatprep.subr.bf16.mxu0 0
      %1749 = vmatpush1.bf16.msra.mxu0 %v1739
      %1750 = vmatprep.subr.bf16.mxu0 0
      %1751 = vmatpush1.bf16.msra.mxu0 %v1738
      %1752 = vmatprep.subr.bf16.mxu0 0
      %1753 = vmatpush1.bf16.msra.mxu0 %v1737
      %1754 = vmatprep.subr.bf16.mxu0 0
      %1755 = vmatpush1.bf16.msra.mxu0 %v1736
      %1756 = vmatprep.subr.bf16.mxu0 0
      %1757 = vmatpush1.bf16.msra.mxu0 %v1735
      %1758 = vmatprep.subr.bf16.mxu0 0
      %1759 = vmatpush1.bf16.msra.mxu0 %v1734
      %1760 = vmatprep.subr.bf16.mxu0 0
      %1761 = vmatpush1.bf16.msra.mxu0 %v1733
      %1762 = vmatprep.subr.bf16.mxu0 0
      %1763 = vmatpush1.bf16.msra.mxu0 %v1732
      %1764 = vmatprep.subr.bf16.mxu0 0
      %1765 = vmatpush2.bf16.msra.mxu0 0
      %1766 = vmatprep.subr.bf16.mxu0 0
      %1767 = vmatpush2.bf16.msra.mxu0 0
      %1768 = vmatprep.subr.bf16.mxu0 0
      %1769 = vmatpush2.bf16.msra.mxu0 0
      %1770 = vmatprep.subr.bf16.mxu0 0
      %1771 = vmatpush2.bf16.msra.mxu0 0
      %1772 = vmatprep.subr.bf16.mxu0 0
      %1773 = vmatpush2.bf16.msra.mxu0 0
      %1774 = vmatprep.subr.bf16.mxu0 0
      %1775 = vmatpush2.bf16.msra.mxu0 0
      %1776 = vmatprep.subr.bf16.mxu0 0
      %1777 = vmatpush2.bf16.msra.mxu0 0
      %1778 = vmatprep.subr.bf16.mxu0 0
      %1779 = vmatpush2.bf16.msra.mxu0 0
      %1780 = vmatprep.mubr.bf16.mxu0 0
      %1781 = vmatmul.mubr.bf16.gmra.mxu0 %v620
      %v1782 = vpop.f32.mrf.mxu0
      %v1783 = vadd.f32 0.0, %v1782
      %v1784 = vpop.f32.mrf.mxu0
      %v1785 = vpop.f32.mrf.mxu0
      %v1786 = vadd.f32 0.0, %v1785
      %v1787 = vpop.f32.mrf.mxu0
      %1788 = vmatprep.mubr.bf16.mxu0 0
      %1789 = vmatmul.mubr.bf16.gmra.mxu0 %v621
      %v1790 = vpop.f32.mrf.mxu0
      %v1791 = vadd.f32 0.0, %v1790
      %v1792 = vpop.f32.mrf.mxu0
      %v1793 = vpop.f32.mrf.mxu0
      %v1794 = vadd.f32 0.0, %v1793
      %v1795 = vpop.f32.mrf.mxu0
      %1796 = vmatprep.mubr.bf16.mxu0 0
      %1797 = vmatmul.mubr.bf16.gmra.mxu0 %v622
      %v1798 = vpop.f32.mrf.mxu0
      %v1799 = vadd.f32 0.0, %v1798
      %v1800 = vpop.f32.mrf.mxu0
      %v1801 = vpop.f32.mrf.mxu0
      %v1802 = vadd.f32 0.0, %v1801
      %v1803 = vpop.f32.mrf.mxu0
      %1804 = vmatprep.mubr.bf16.mxu0 0
      %1805 = vmatmul.mubr.bf16.gmra.mxu0 %v623
      %v1806 = vpop.f32.mrf.mxu0
      %v1807 = vadd.f32 0.0, %v1806
      %v1808 = vpop.f32.mrf.mxu0
      %v1809 = vpop.f32.mrf.mxu0
      %v1810 = vadd.f32 0.0, %v1809
      %v1811 = vpop.f32.mrf.mxu0
      %1812 = vmatprep.mubr.bf16.mxu0 0
      %1813 = vmatmul.mubr.bf16.gmra.mxu0 %v624
      %v1814 = vpop.f32.mrf.mxu0
      %v1815 = vadd.f32 0.0, %v1814
      %v1816 = vpop.f32.mrf.mxu0
      %v1817 = vpop.f32.mrf.mxu0
      %v1818 = vadd.f32 0.0, %v1817
      %v1819 = vpop.f32.mrf.mxu0
      %1820 = vmatprep.mubr.bf16.mxu0 0
      %1821 = vmatmul.mubr.bf16.gmra.mxu0 %v625
      %v1822 = vpop.f32.mrf.mxu0
      %v1823 = vadd.f32 0.0, %v1822
      %v1824 = vpop.f32.mrf.mxu0
      %v1825 = vpop.f32.mrf.mxu0
      %v1826 = vadd.f32 0.0, %v1825
      %v1827 = vpop.f32.mrf.mxu0
      %1828 = vmatprep.mubr.bf16.mxu0 0
      %1829 = vmatmul.mubr.bf16.gmra.mxu0 %v626
      %v1830 = vpop.f32.mrf.mxu0
      %v1831 = vadd.f32 0.0, %v1830
      %v1832 = vpop.f32.mrf.mxu0
      %v1833 = vpop.f32.mrf.mxu0
      %v1834 = vadd.f32 0.0, %v1833
      %v1835 = vpop.f32.mrf.mxu0
      %1836 = vmatprep.mubr.bf16.mxu0 0
      %1837 = vmatmul.mubr.bf16.gmra.mxu0 %v627
      %v1838 = vpop.f32.mrf.mxu0
      %v1839 = vadd.f32 0.0, %v1838
      %v1840 = vpop.f32.mrf.mxu0
      %v1841 = vpop.f32.mrf.mxu0
      %v1842 = vadd.f32 0.0, %v1841
      %v1843 = vpop.f32.mrf.mxu0
      %1844 = vmatprep.mubr.bf16.mxu0 0
      %1845 = vmatmul.mubr.bf16.gmra.mxu0 %v628
      %v1846 = vpop.f32.mrf.mxu0
      %v1847 = vadd.f32 0.0, %v1846
      %v1848 = vpop.f32.mrf.mxu0
      %v1849 = vpop.f32.mrf.mxu0
      %v1850 = vadd.f32 0.0, %v1849
      %v1851 = vpop.f32.mrf.mxu0
      %1852 = vmatprep.mubr.bf16.mxu0 0
      %1853 = vmatmul.mubr.bf16.gmra.mxu0 %v629
      %v1854 = vpop.f32.mrf.mxu0
      %v1855 = vadd.f32 0.0, %v1854
      %v1856 = vpop.f32.mrf.mxu0
      %v1857 = vpop.f32.mrf.mxu0
      %v1858 = vadd.f32 0.0, %v1857
      %v1859 = vpop.f32.mrf.mxu0
      %1860 = vmatprep.mubr.bf16.mxu0 0
      %1861 = vmatmul.mubr.bf16.gmra.mxu0 %v630
      %v1862 = vpop.f32.mrf.mxu0
      %v1863 = vadd.f32 0.0, %v1862
      %v1864 = vpop.f32.mrf.mxu0
      %v1865 = vpop.f32.mrf.mxu0
      %v1866 = vadd.f32 0.0, %v1865
      %v1867 = vpop.f32.mrf.mxu0
      %1868 = vmatprep.mubr.bf16.mxu0 0
      %1869 = vmatmul.mubr.bf16.gmra.mxu0 %v631
      %v1870 = vpop.f32.mrf.mxu0
      %v1871 = vadd.f32 0.0, %v1870
      %v1872 = vpop.f32.mrf.mxu0
      %v1873 = vpop.f32.mrf.mxu0
      %v1874 = vadd.f32 0.0, %v1873
      %v1875 = vpop.f32.mrf.mxu0
      %1876 = vmatprep.mubr.bf16.mxu0 0
      %1877 = vmatmul.mubr.bf16.gmra.mxu0 %v632
      %v1878 = vpop.f32.mrf.mxu0
      %v1879 = vadd.f32 0.0, %v1878
      %v1880 = vpop.f32.mrf.mxu0
      %v1881 = vpop.f32.mrf.mxu0
      %v1882 = vadd.f32 0.0, %v1881
      %v1883 = vpop.f32.mrf.mxu0
      %1884 = vmatprep.mubr.bf16.mxu0 0
      %1885 = vmatmul.mubr.bf16.gmra.mxu0 %v633
      %v1886 = vpop.f32.mrf.mxu0
      %v1887 = vadd.f32 0.0, %v1886
      %v1888 = vpop.f32.mrf.mxu0
      %v1889 = vpop.f32.mrf.mxu0
      %v1890 = vadd.f32 0.0, %v1889
      %v1891 = vpop.f32.mrf.mxu0
      %1892 = vmatprep.mubr.bf16.mxu0 0
      %1893 = vmatmul.mubr.bf16.gmra.mxu0 %v634
      %v1894 = vpop.f32.mrf.mxu0
      %v1895 = vadd.f32 0.0, %v1894
      %v1896 = vpop.f32.mrf.mxu0
      %v1897 = vpop.f32.mrf.mxu0
      %v1898 = vadd.f32 0.0, %v1897
      %v1899 = vpop.f32.mrf.mxu0
      %1900 = vmatprep.mubr.bf16.mxu0 0
      %1901 = vmatmul.mubr.bf16.gmra.mxu0 %v635
      %v1902 = vpop.f32.mrf.mxu0
      %v1903 = vadd.f32 0.0, %v1902
      %v1904 = vpop.f32.mrf.mxu0
      %v1905 = vpop.f32.mrf.mxu0
      %v1906 = vadd.f32 0.0, %v1905
      %v1907 = vpop.f32.mrf.mxu0
      %1908 = vmatprep.mubr.bf16.mxu0 0
      %1909 = vmatmul.mubr.bf16.gmra.mxu0 %v636
      %v1910 = vpop.f32.mrf.mxu0
      %v1911 = vadd.f32 0.0, %v1910
      %v1912 = vpop.f32.mrf.mxu0
      %v1913 = vpop.f32.mrf.mxu0
      %v1914 = vadd.f32 0.0, %v1913
      %v1915 = vpop.f32.mrf.mxu0
      %1916 = vmatprep.mubr.bf16.mxu0 0
      %1917 = vmatmul.mubr.bf16.gmra.mxu0 %v637
      %v1918 = vpop.f32.mrf.mxu0
      %v1919 = vadd.f32 0.0, %v1918
      %v1920 = vpop.f32.mrf.mxu0
      %v1921 = vpop.f32.mrf.mxu0
      %v1922 = vadd.f32 0.0, %v1921
      %v1923 = vpop.f32.mrf.mxu0
      %1924 = vmatprep.mubr.bf16.mxu0 0
      %1925 = vmatmul.mubr.bf16.gmra.mxu0 %v638
      %v1926 = vpop.f32.mrf.mxu0
      %v1927 = vadd.f32 0.0, %v1926
      %v1928 = vpop.f32.mrf.mxu0
      %v1929 = vpop.f32.mrf.mxu0
      %v1930 = vadd.f32 0.0, %v1929
      %v1931 = vpop.f32.mrf.mxu0
      %1932 = vmatprep.mubr.bf16.mxu0 0
      %1933 = vmatmul.mubr.bf16.gmra.mxu0 %v639
      %v1934 = vpop.f32.mrf.mxu0
      %v1935 = vadd.f32 0.0, %v1934
      %v1936 = vpop.f32.mrf.mxu0
      %v1937 = vpop.f32.mrf.mxu0
      %v1938 = vadd.f32 0.0, %v1937
      %v1939 = vpop.f32.mrf.mxu0
      %1940 = vmatprep.mubr.bf16.mxu0 0
      %1941 = vmatmul.mubr.bf16.gmra.mxu0 %v640
      %v1942 = vpop.f32.mrf.mxu0
      %v1943 = vadd.f32 0.0, %v1942
      %v1944 = vpop.f32.mrf.mxu0
      %v1945 = vpop.f32.mrf.mxu0
      %v1946 = vadd.f32 0.0, %v1945
      %v1947 = vpop.f32.mrf.mxu0
      %1948 = vmatprep.mubr.bf16.mxu0 0
      %1949 = vmatmul.mubr.bf16.gmra.mxu0 %v641
      %v1950 = vpop.f32.mrf.mxu0
      %v1951 = vadd.f32 0.0, %v1950
      %v1952 = vpop.f32.mrf.mxu0
      %v1953 = vpop.f32.mrf.mxu0
      %v1954 = vadd.f32 0.0, %v1953
      %v1955 = vpop.f32.mrf.mxu0
      %1956 = vmatprep.mubr.bf16.mxu0 0
      %1957 = vmatmul.mubr.bf16.gmra.mxu0 %v642
      %v1958 = vpop.f32.mrf.mxu0
      %v1959 = vadd.f32 0.0, %v1958
      %v1960 = vpop.f32.mrf.mxu0
      %v1961 = vpop.f32.mrf.mxu0
      %v1962 = vadd.f32 0.0, %v1961
      %v1963 = vpop.f32.mrf.mxu0
      %1964 = vmatprep.mubr.bf16.mxu0 0
      %1965 = vmatmul.mubr.bf16.gmra.mxu0 %v643
      %v1966 = vpop.f32.mrf.mxu0
      %v1967 = vadd.f32 0.0, %v1966
      %v1968 = vpop.f32.mrf.mxu0
      %v1969 = vpop.f32.mrf.mxu0
      %v1970 = vadd.f32 0.0, %v1969
      %v1971 = vpop.f32.mrf.mxu0
      %1972 = vdwg.mxu0
      %v1989 = vunpack.c.l.b16 %v1667
      %v1990 = vunpack.c.l.b16 %v1668
      %v1991 = vunpack.c.l.b16 %v1669
      %v1992 = vunpack.c.l.b16 %v1670
      %v1993 = vunpack.c.l.b16 %v1671
      %v1994 = vunpack.c.l.b16 %v1672
      %v1995 = vunpack.c.l.b16 %v1673
      %v1996 = vunpack.c.l.b16 %v1674
      %v1997 = vunpack.c.l.b16 %v1675
      %v1998 = vunpack.c.l.b16 %v1676
      %v1999 = vunpack.c.l.b16 %v1677
      %v2000 = vunpack.c.l.b16 %v1678
      %v2001 = vunpack.c.l.b16 %v1679
      %v2002 = vunpack.c.l.b16 %v1680
      %v2003 = vunpack.c.l.b16 %v1681
      %v2004 = vunpack.c.l.b16 %v1682
      %v2005 = vpack.c.b16 %v1990, %v1989
      %v2006 = vpack.c.b16 %v1992, %v1991
      %v2007 = vpack.c.b16 %v1994, %v1993
      %v2008 = vpack.c.b16 %v1996, %v1995
      %v2009 = vpack.c.b16 %v1998, %v1997
      %v2010 = vpack.c.b16 %v2000, %v1999
      %v2011 = vpack.c.b16 %v2002, %v2001
      %v2012 = vpack.c.b16 %v2004, %v2003
      %2021 = vmatprep.subr.bf16.mxu0 0
      %2022 = vmatpush1.bf16.msra.mxu0 %v2012
      %2023 = vmatprep.subr.bf16.mxu0 0
      %2024 = vmatpush1.bf16.msra.mxu0 %v2011
      %2025 = vmatprep.subr.bf16.mxu0 0
      %2026 = vmatpush1.bf16.msra.mxu0 %v2010
      %2027 = vmatprep.subr.bf16.mxu0 0
      %2028 = vmatpush1.bf16.msra.mxu0 %v2009
      %2029 = vmatprep.subr.bf16.mxu0 0
      %2030 = vmatpush1.bf16.msra.mxu0 %v2008
      %2031 = vmatprep.subr.bf16.mxu0 0
      %2032 = vmatpush1.bf16.msra.mxu0 %v2007
      %2033 = vmatprep.subr.bf16.mxu0 0
      %2034 = vmatpush1.bf16.msra.mxu0 %v2006
      %2035 = vmatprep.subr.bf16.mxu0 0
      %2036 = vmatpush1.bf16.msra.mxu0 %v2005
      %2037 = vmatprep.subr.bf16.mxu0 0
      %2038 = vmatpush2.bf16.msra.mxu0 0
      %2039 = vmatprep.subr.bf16.mxu0 0
      %2040 = vmatpush2.bf16.msra.mxu0 0
      %2041 = vmatprep.subr.bf16.mxu0 0
      %2042 = vmatpush2.bf16.msra.mxu0 0
      %2043 = vmatprep.subr.bf16.mxu0 0
      %2044 = vmatpush2.bf16.msra.mxu0 0
      %2045 = vmatprep.subr.bf16.mxu0 0
      %2046 = vmatpush2.bf16.msra.mxu0 0
      %2047 = vmatprep.subr.bf16.mxu0 0
      %2048 = vmatpush2.bf16.msra.mxu0 0
      %2049 = vmatprep.subr.bf16.mxu0 0
      %2050 = vmatpush2.bf16.msra.mxu0 0
      %2051 = vmatprep.subr.bf16.mxu0 0
      %2052 = vmatpush2.bf16.msra.mxu0 0
      %2053 = vmatprep.mubr.bf16.mxu0 0
      %2054 = vmatmul.mubr.bf16.gmra.mxu0 %v947
      %v2055 = vpop.f32.mrf.mxu0
      %v2056 = vadd.f32 %v1783, %v2055
      %v2057 = vpop.f32.mrf.mxu0
      %v2058 = vpop.f32.mrf.mxu0
      %v2059 = vadd.f32 %v1786, %v2058
      %v2060 = vpop.f32.mrf.mxu0
      %2061 = vmatprep.mubr.bf16.mxu0 0
      %2062 = vmatmul.mubr.bf16.gmra.mxu0 %v948
      %v2063 = vpop.f32.mrf.mxu0
      %v2064 = vadd.f32 %v1791, %v2063
      %v2065 = vpop.f32.mrf.mxu0
      %v2066 = vpop.f32.mrf.mxu0
      %v2067 = vadd.f32 %v1794, %v2066
      %v2068 = vpop.f32.mrf.mxu0
      %2069 = vmatprep.mubr.bf16.mxu0 0
      %2070 = vmatmul.mubr.bf16.gmra.mxu0 %v949
      %v2071 = vpop.f32.mrf.mxu0
      %v2072 = vadd.f32 %v1799, %v2071
      %v2073 = vpop.f32.mrf.mxu0
      %v2074 = vpop.f32.mrf.mxu0
      %v2075 = vadd.f32 %v1802, %v2074
      %v2076 = vpop.f32.mrf.mxu0
      %2077 = vmatprep.mubr.bf16.mxu0 0
      %2078 = vmatmul.mubr.bf16.gmra.mxu0 %v950
      %v2079 = vpop.f32.mrf.mxu0
      %v2080 = vadd.f32 %v1807, %v2079
      %v2081 = vpop.f32.mrf.mxu0
      %v2082 = vpop.f32.mrf.mxu0
      %v2083 = vadd.f32 %v1810, %v2082
      %v2084 = vpop.f32.mrf.mxu0
      %2085 = vmatprep.mubr.bf16.mxu0 0
      %2086 = vmatmul.mubr.bf16.gmra.mxu0 %v951
      %v2087 = vpop.f32.mrf.mxu0
      %v2088 = vadd.f32 %v1815, %v2087
      %v2089 = vpop.f32.mrf.mxu0
      %v2090 = vpop.f32.mrf.mxu0
      %v2091 = vadd.f32 %v1818, %v2090
      %v2092 = vpop.f32.mrf.mxu0
      %2093 = vmatprep.mubr.bf16.mxu0 0
      %2094 = vmatmul.mubr.bf16.gmra.mxu0 %v952
      %v2095 = vpop.f32.mrf.mxu0
      %v2096 = vadd.f32 %v1823, %v2095
      %v2097 = vpop.f32.mrf.mxu0
      %v2098 = vpop.f32.mrf.mxu0
      %v2099 = vadd.f32 %v1826, %v2098
      %v2100 = vpop.f32.mrf.mxu0
      %2101 = vmatprep.mubr.bf16.mxu0 0
      %2102 = vmatmul.mubr.bf16.gmra.mxu0 %v953
      %v2103 = vpop.f32.mrf.mxu0
      %v2104 = vadd.f32 %v1831, %v2103
      %v2105 = vpop.f32.mrf.mxu0
      %v2106 = vpop.f32.mrf.mxu0
      %v2107 = vadd.f32 %v1834, %v2106
      %v2108 = vpop.f32.mrf.mxu0
      %2109 = vmatprep.mubr.bf16.mxu0 0
      %2110 = vmatmul.mubr.bf16.gmra.mxu0 %v954
      %v2111 = vpop.f32.mrf.mxu0
      %v2112 = vadd.f32 %v1839, %v2111
      %v2113 = vpop.f32.mrf.mxu0
      %v2114 = vpop.f32.mrf.mxu0
      %v2115 = vadd.f32 %v1842, %v2114
      %v2116 = vpop.f32.mrf.mxu0
      %2117 = vmatprep.mubr.bf16.mxu0 0
      %2118 = vmatmul.mubr.bf16.gmra.mxu0 %v955
      %v2119 = vpop.f32.mrf.mxu0
      %v2120 = vadd.f32 %v1847, %v2119
      %v2121 = vpop.f32.mrf.mxu0
      %v2122 = vpop.f32.mrf.mxu0
      %v2123 = vadd.f32 %v1850, %v2122
      %v2124 = vpop.f32.mrf.mxu0
      %2125 = vmatprep.mubr.bf16.mxu0 0
      %2126 = vmatmul.mubr.bf16.gmra.mxu0 %v956
      %v2127 = vpop.f32.mrf.mxu0
      %v2128 = vadd.f32 %v1855, %v2127
      %v2129 = vpop.f32.mrf.mxu0
      %v2130 = vpop.f32.mrf.mxu0
      %v2131 = vadd.f32 %v1858, %v2130
      %v2132 = vpop.f32.mrf.mxu0
      %2133 = vmatprep.mubr.bf16.mxu0 0
      %2134 = vmatmul.mubr.bf16.gmra.mxu0 %v957
      %v2135 = vpop.f32.mrf.mxu0
      %v2136 = vadd.f32 %v1863, %v2135
      %v2137 = vpop.f32.mrf.mxu0
      %v2138 = vpop.f32.mrf.mxu0
      %v2139 = vadd.f32 %v1866, %v2138
      %v2140 = vpop.f32.mrf.mxu0
      %2141 = vmatprep.mubr.bf16.mxu0 0
      %2142 = vmatmul.mubr.bf16.gmra.mxu0 %v958
      %v2143 = vpop.f32.mrf.mxu0
      %v2144 = vadd.f32 %v1871, %v2143
      %v2145 = vpop.f32.mrf.mxu0
      %v2146 = vpop.f32.mrf.mxu0
      %v2147 = vadd.f32 %v1874, %v2146
      %v2148 = vpop.f32.mrf.mxu0
      %2149 = vmatprep.mubr.bf16.mxu0 0
      %2150 = vmatmul.mubr.bf16.gmra.mxu0 %v959
      %v2151 = vpop.f32.mrf.mxu0
      %v2152 = vadd.f32 %v1879, %v2151
      %v2153 = vpop.f32.mrf.mxu0
      %v2154 = vpop.f32.mrf.mxu0
      %v2155 = vadd.f32 %v1882, %v2154
      %v2156 = vpop.f32.mrf.mxu0
      %2157 = vmatprep.mubr.bf16.mxu0 0
      %2158 = vmatmul.mubr.bf16.gmra.mxu0 %v960
      %v2159 = vpop.f32.mrf.mxu0
      %v2160 = vadd.f32 %v1887, %v2159
      %v2161 = vpop.f32.mrf.mxu0
      %v2162 = vpop.f32.mrf.mxu0
      %v2163 = vadd.f32 %v1890, %v2162
      %v2164 = vpop.f32.mrf.mxu0
      %2165 = vmatprep.mubr.bf16.mxu0 0
      %2166 = vmatmul.mubr.bf16.gmra.mxu0 %v961
      %v2167 = vpop.f32.mrf.mxu0
      %v2168 = vadd.f32 %v1895, %v2167
      %v2169 = vpop.f32.mrf.mxu0
      %v2170 = vpop.f32.mrf.mxu0
      %v2171 = vadd.f32 %v1898, %v2170
      %v2172 = vpop.f32.mrf.mxu0
      %2173 = vmatprep.mubr.bf16.mxu0 0
      %2174 = vmatmul.mubr.bf16.gmra.mxu0 %v962
      %v2175 = vpop.f32.mrf.mxu0
      %v2176 = vadd.f32 %v1903, %v2175
      %v2177 = vpop.f32.mrf.mxu0
      %v2178 = vpop.f32.mrf.mxu0
      %v2179 = vadd.f32 %v1906, %v2178
      %v2180 = vpop.f32.mrf.mxu0
      %2181 = vmatprep.mubr.bf16.mxu0 0
      %2182 = vmatmul.mubr.bf16.gmra.mxu0 %v963
      %v2183 = vpop.f32.mrf.mxu0
      %v2184 = vadd.f32 %v1911, %v2183
      %v2185 = vpop.f32.mrf.mxu0
      %v2186 = vpop.f32.mrf.mxu0
      %v2187 = vadd.f32 %v1914, %v2186
      %v2188 = vpop.f32.mrf.mxu0
      %2189 = vmatprep.mubr.bf16.mxu0 0
      %2190 = vmatmul.mubr.bf16.gmra.mxu0 %v964
      %v2191 = vpop.f32.mrf.mxu0
      %v2192 = vadd.f32 %v1919, %v2191
      %v2193 = vpop.f32.mrf.mxu0
      %v2194 = vpop.f32.mrf.mxu0
      %v2195 = vadd.f32 %v1922, %v2194
      %v2196 = vpop.f32.mrf.mxu0
      %2197 = vmatprep.mubr.bf16.mxu0 0
      %2198 = vmatmul.mubr.bf16.gmra.mxu0 %v965
      %v2199 = vpop.f32.mrf.mxu0
      %v2200 = vadd.f32 %v1927, %v2199
      %v2201 = vpop.f32.mrf.mxu0
      %v2202 = vpop.f32.mrf.mxu0
      %v2203 = vadd.f32 %v1930, %v2202
      %v2204 = vpop.f32.mrf.mxu0
      %2205 = vmatprep.mubr.bf16.mxu0 0
      %2206 = vmatmul.mubr.bf16.gmra.mxu0 %v966
      %v2207 = vpop.f32.mrf.mxu0
      %v2208 = vadd.f32 %v1935, %v2207
      %v2209 = vpop.f32.mrf.mxu0
      %v2210 = vpop.f32.mrf.mxu0
      %v2211 = vadd.f32 %v1938, %v2210
      %v2212 = vpop.f32.mrf.mxu0
      %2213 = vmatprep.mubr.bf16.mxu0 0
      %2214 = vmatmul.mubr.bf16.gmra.mxu0 %v967
      %v2215 = vpop.f32.mrf.mxu0
      %v2216 = vadd.f32 %v1943, %v2215
      %v2217 = vpop.f32.mrf.mxu0
      %v2218 = vpop.f32.mrf.mxu0
      %v2219 = vadd.f32 %v1946, %v2218
      %v2220 = vpop.f32.mrf.mxu0
      %2221 = vmatprep.mubr.bf16.mxu0 0
      %2222 = vmatmul.mubr.bf16.gmra.mxu0 %v968
      %v2223 = vpop.f32.mrf.mxu0
      %v2224 = vadd.f32 %v1951, %v2223
      %v2225 = vpop.f32.mrf.mxu0
      %v2226 = vpop.f32.mrf.mxu0
      %v2227 = vadd.f32 %v1954, %v2226
      %v2228 = vpop.f32.mrf.mxu0
      %2229 = vmatprep.mubr.bf16.mxu0 0
      %2230 = vmatmul.mubr.bf16.gmra.mxu0 %v969
      %v2231 = vpop.f32.mrf.mxu0
      %v2232 = vadd.f32 %v1959, %v2231
      %v2233 = vpop.f32.mrf.mxu0
      %v2234 = vpop.f32.mrf.mxu0
      %v2235 = vadd.f32 %v1962, %v2234
      %v2236 = vpop.f32.mrf.mxu0
      %2237 = vmatprep.mubr.bf16.mxu0 0
      %2238 = vmatmul.mubr.bf16.gmra.mxu0 %v970
      %v2239 = vpop.f32.mrf.mxu0
      %v2240 = vadd.f32 %v1967, %v2239
      %v2241 = vpop.f32.mrf.mxu0
      %v2242 = vpop.f32.mrf.mxu0
      %v2243 = vadd.f32 %v1970, %v2242
      %v2244 = vpop.f32.mrf.mxu0
      %2245 = vdwg.mxu0
      %s2246 = scalar_lea.vmem %s2, 448
      %v2247 = vld [vmem:[%s2246] sm:$0xf]
      %v2248 = vld [vmem:[%s2246 + $0x4] sm:$0xf]
      %v2249 = vld [vmem:[%s2246 + $0x8] sm:$0xf]
      %v2250 = vld [vmem:[%s2246 + $0xc] sm:$0xf]
      %v2251 = vld [vmem:[%s2246 + $0x10] sm:$0xf]
      %v2252 = vld [vmem:[%s2246 + $0x14] sm:$0xf]
      %v2253 = vld [vmem:[%s2246 + $0x18] sm:$0xf]
      %v2254 = vld [vmem:[%s2246 + $0x1c] sm:$0xf]
      %v2255 = vld [vmem:[%s2246 + $0x20] sm:$0xf]
      %v2256 = vld [vmem:[%s2246 + $0x24] sm:$0xf]
      %v2257 = vld [vmem:[%s2246 + $0x28] sm:$0xf]
      %v2258 = vld [vmem:[%s2246 + $0x2c] sm:$0xf]
      %v2259 = vld [vmem:[%s2246 + $0x30] sm:$0xf]
      %v2260 = vld [vmem:[%s2246 + $0x34] sm:$0xf]
      %v2261 = vld [vmem:[%s2246 + $0x38] sm:$0xf]
      %v2262 = vld [vmem:[%s2246 + $0x3c] sm:$0xf]
      %v2279 = vunpack.c.l.b16 %v2247
      %v2280 = vunpack.c.l.b16 %v2248
      %v2281 = vunpack.c.l.b16 %v2249
      %v2282 = vunpack.c.l.b16 %v2250
      %v2283 = vunpack.c.l.b16 %v2251
      %v2284 = vunpack.c.l.b16 %v2252
      %v2285 = vunpack.c.l.b16 %v2253
      %v2286 = vunpack.c.l.b16 %v2254
      %v2287 = vunpack.c.l.b16 %v2255
      %v2288 = vunpack.c.l.b16 %v2256
      %v2289 = vunpack.c.l.b16 %v2257
      %v2290 = vunpack.c.l.b16 %v2258
      %v2291 = vunpack.c.l.b16 %v2259
      %v2292 = vunpack.c.l.b16 %v2260
      %v2293 = vunpack.c.l.b16 %v2261
      %v2294 = vunpack.c.l.b16 %v2262
      %v2295 = vpack.c.b16 %v2280, %v2279
      %v2296 = vpack.c.b16 %v2282, %v2281
      %v2297 = vpack.c.b16 %v2284, %v2283
      %v2298 = vpack.c.b16 %v2286, %v2285
      %v2299 = vpack.c.b16 %v2288, %v2287
      %v2300 = vpack.c.b16 %v2290, %v2289
      %v2301 = vpack.c.b16 %v2292, %v2291
      %v2302 = vpack.c.b16 %v2294, %v2293
      %2311 = vmatprep.subr.bf16.mxu0 0
      %2312 = vmatpush1.bf16.msra.mxu0 %v2302
      %2313 = vmatprep.subr.bf16.mxu0 0
      %2314 = vmatpush1.bf16.msra.mxu0 %v2301
      %2315 = vmatprep.subr.bf16.mxu0 0
      %2316 = vmatpush1.bf16.msra.mxu0 %v2300
      %2317 = vmatprep.subr.bf16.mxu0 0
      %2318 = vmatpush1.bf16.msra.mxu0 %v2299
      %2319 = vmatprep.subr.bf16.mxu0 0
      %2320 = vmatpush1.bf16.msra.mxu0 %v2298
      %2321 = vmatprep.subr.bf16.mxu0 0
      %2322 = vmatpush1.bf16.msra.mxu0 %v2297
      %2323 = vmatprep.subr.bf16.mxu0 0
      %2324 = vmatpush1.bf16.msra.mxu0 %v2296
      %2325 = vmatprep.subr.bf16.mxu0 0
      %2326 = vmatpush1.bf16.msra.mxu0 %v2295
      %2327 = vmatprep.subr.bf16.mxu0 0
      %2328 = vmatpush2.bf16.msra.mxu0 0
      %2329 = vmatprep.subr.bf16.mxu0 0
      %2330 = vmatpush2.bf16.msra.mxu0 0
      %2331 = vmatprep.subr.bf16.mxu0 0
      %2332 = vmatpush2.bf16.msra.mxu0 0
      %2333 = vmatprep.subr.bf16.mxu0 0
      %2334 = vmatpush2.bf16.msra.mxu0 0
      %2335 = vmatprep.subr.bf16.mxu0 0
      %2336 = vmatpush2.bf16.msra.mxu0 0
      %2337 = vmatprep.subr.bf16.mxu0 0
      %2338 = vmatpush2.bf16.msra.mxu0 0
      %2339 = vmatprep.subr.bf16.mxu0 0
      %2340 = vmatpush2.bf16.msra.mxu0 0
      %2341 = vmatprep.subr.bf16.mxu0 0
      %2342 = vmatpush2.bf16.msra.mxu0 0
      %2343 = vmatprep.mubr.bf16.mxu0 0
      %2344 = vmatmul.mubr.bf16.gmra.mxu0 %v950
      %v2345 = vpop.f32.mrf.mxu0
      %v2346 = vadd.f32 0.0, %v2345
      %v2347 = vpop.f32.mrf.mxu0
      %v2348 = vpop.f32.mrf.mxu0
      %v2349 = vadd.f32 0.0, %v2348
      %v2350 = vpop.f32.mrf.mxu0
      %2351 = vmatprep.mubr.bf16.mxu0 0
      %2352 = vmatmul.mubr.bf16.gmra.mxu0 %v951
      %v2353 = vpop.f32.mrf.mxu0
      %v2354 = vadd.f32 0.0, %v2353
      %v2355 = vpop.f32.mrf.mxu0
      %v2356 = vpop.f32.mrf.mxu0
      %v2357 = vadd.f32 0.0, %v2356
      %v2358 = vpop.f32.mrf.mxu0
      %2359 = vmatprep.mubr.bf16.mxu0 0
      %2360 = vmatmul.mubr.bf16.gmra.mxu0 %v952
      %v2361 = vpop.f32.mrf.mxu0
      %v2362 = vadd.f32 0.0, %v2361
      %v2363 = vpop.f32.mrf.mxu0
      %v2364 = vpop.f32.mrf.mxu0
      %v2365 = vadd.f32 0.0, %v2364
      %v2366 = vpop.f32.mrf.mxu0
      %2367 = vmatprep.mubr.bf16.mxu0 0
      %2368 = vmatmul.mubr.bf16.gmra.mxu0 %v953
      %v2369 = vpop.f32.mrf.mxu0
      %v2370 = vadd.f32 0.0, %v2369
      %v2371 = vpop.f32.mrf.mxu0
      %v2372 = vpop.f32.mrf.mxu0
      %v2373 = vadd.f32 0.0, %v2372
      %v2374 = vpop.f32.mrf.mxu0
      %2375 = vmatprep.mubr.bf16.mxu0 0
      %2376 = vmatmul.mubr.bf16.gmra.mxu0 %v954
      %v2377 = vpop.f32.mrf.mxu0
      %v2378 = vadd.f32 0.0, %v2377
      %v2379 = vpop.f32.mrf.mxu0
      %v2380 = vpop.f32.mrf.mxu0
      %v2381 = vadd.f32 0.0, %v2380
      %v2382 = vpop.f32.mrf.mxu0
      %2383 = vmatprep.mubr.bf16.mxu0 0
      %2384 = vmatmul.mubr.bf16.gmra.mxu0 %v955
      %v2385 = vpop.f32.mrf.mxu0
      %v2386 = vadd.f32 0.0, %v2385
      %v2387 = vpop.f32.mrf.mxu0
      %v2388 = vpop.f32.mrf.mxu0
      %v2389 = vadd.f32 0.0, %v2388
      %v2390 = vpop.f32.mrf.mxu0
      %2391 = vmatprep.mubr.bf16.mxu0 0
      %2392 = vmatmul.mubr.bf16.gmra.mxu0 %v956
      %v2393 = vpop.f32.mrf.mxu0
      %v2394 = vadd.f32 0.0, %v2393
      %v2395 = vpop.f32.mrf.mxu0
      %v2396 = vpop.f32.mrf.mxu0
      %v2397 = vadd.f32 0.0, %v2396
      %v2398 = vpop.f32.mrf.mxu0
      %2399 = vmatprep.mubr.bf16.mxu0 0
      %2400 = vmatmul.mubr.bf16.gmra.mxu0 %v957
      %v2401 = vpop.f32.mrf.mxu0
      %v2402 = vadd.f32 0.0, %v2401
      %v2403 = vpop.f32.mrf.mxu0
      %v2404 = vpop.f32.mrf.mxu0
      %v2405 = vadd.f32 0.0, %v2404
      %v2406 = vpop.f32.mrf.mxu0
      %2407 = vmatprep.mubr.bf16.mxu0 0
      %2408 = vmatmul.mubr.bf16.gmra.mxu0 %v958
      %v2409 = vpop.f32.mrf.mxu0
      %v2410 = vadd.f32 0.0, %v2409
      %v2411 = vpop.f32.mrf.mxu0
      %v2412 = vpop.f32.mrf.mxu0
      %v2413 = vadd.f32 0.0, %v2412
      %v2414 = vpop.f32.mrf.mxu0
      %2415 = vmatprep.mubr.bf16.mxu0 0
      %2416 = vmatmul.mubr.bf16.gmra.mxu0 %v959
      %v2417 = vpop.f32.mrf.mxu0
      %v2418 = vadd.f32 0.0, %v2417
      %v2419 = vpop.f32.mrf.mxu0
      %v2420 = vpop.f32.mrf.mxu0
      %v2421 = vadd.f32 0.0, %v2420
      %v2422 = vpop.f32.mrf.mxu0
      %2423 = vmatprep.mubr.bf16.mxu0 0
      %2424 = vmatmul.mubr.bf16.gmra.mxu0 %v960
      %v2425 = vpop.f32.mrf.mxu0
      %v2426 = vadd.f32 0.0, %v2425
      %v2427 = vpop.f32.mrf.mxu0
      %v2428 = vpop.f32.mrf.mxu0
      %v2429 = vadd.f32 0.0, %v2428
      %v2430 = vpop.f32.mrf.mxu0
      %2431 = vmatprep.mubr.bf16.mxu0 0
      %2432 = vmatmul.mubr.bf16.gmra.mxu0 %v961
      %v2433 = vpop.f32.mrf.mxu0
      %v2434 = vadd.f32 0.0, %v2433
      %v2435 = vpop.f32.mrf.mxu0
      %v2436 = vpop.f32.mrf.mxu0
      %v2437 = vadd.f32 0.0, %v2436
      %v2438 = vpop.f32.mrf.mxu0
      %2439 = vmatprep.mubr.bf16.mxu0 0
      %2440 = vmatmul.mubr.bf16.gmra.mxu0 %v962
      %v2441 = vpop.f32.mrf.mxu0
      %v2442 = vadd.f32 0.0, %v2441
      %v2443 = vpop.f32.mrf.mxu0
      %v2444 = vpop.f32.mrf.mxu0
      %v2445 = vadd.f32 0.0, %v2444
      %v2446 = vpop.f32.mrf.mxu0
      %2447 = vmatprep.mubr.bf16.mxu0 0
      %2448 = vmatmul.mubr.bf16.gmra.mxu0 %v963
      %v2449 = vpop.f32.mrf.mxu0
      %v2450 = vadd.f32 0.0, %v2449
      %v2451 = vpop.f32.mrf.mxu0
      %v2452 = vpop.f32.mrf.mxu0
      %v2453 = vadd.f32 0.0, %v2452
      %v2454 = vpop.f32.mrf.mxu0
      %2455 = vmatprep.mubr.bf16.mxu0 0
      %2456 = vmatmul.mubr.bf16.gmra.mxu0 %v964
      %v2457 = vpop.f32.mrf.mxu0
      %v2458 = vadd.f32 0.0, %v2457
      %v2459 = vpop.f32.mrf.mxu0
      %v2460 = vpop.f32.mrf.mxu0
      %v2461 = vadd.f32 0.0, %v2460
      %v2462 = vpop.f32.mrf.mxu0
      %2463 = vmatprep.mubr.bf16.mxu0 0
      %2464 = vmatmul.mubr.bf16.gmra.mxu0 %v965
      %v2465 = vpop.f32.mrf.mxu0
      %v2466 = vadd.f32 0.0, %v2465
      %v2467 = vpop.f32.mrf.mxu0
      %v2468 = vpop.f32.mrf.mxu0
      %v2469 = vadd.f32 0.0, %v2468
      %v2470 = vpop.f32.mrf.mxu0
      %2471 = vmatprep.mubr.bf16.mxu0 0
      %2472 = vmatmul.mubr.bf16.gmra.mxu0 %v966
      %v2473 = vpop.f32.mrf.mxu0
      %v2474 = vadd.f32 0.0, %v2473
      %v2475 = vpop.f32.mrf.mxu0
      %v2476 = vpop.f32.mrf.mxu0
      %v2477 = vadd.f32 0.0, %v2476
      %v2478 = vpop.f32.mrf.mxu0
      %2479 = vmatprep.mubr.bf16.mxu0 0
      %2480 = vmatmul.mubr.bf16.gmra.mxu0 %v967
      %v2481 = vpop.f32.mrf.mxu0
      %v2482 = vadd.f32 0.0, %v2481
      %v2483 = vpop.f32.mrf.mxu0
      %v2484 = vpop.f32.mrf.mxu0
      %v2485 = vadd.f32 0.0, %v2484
      %v2486 = vpop.f32.mrf.mxu0
      %2487 = vmatprep.mubr.bf16.mxu0 0
      %2488 = vmatmul.mubr.bf16.gmra.mxu0 %v968
      %v2489 = vpop.f32.mrf.mxu0
      %v2490 = vadd.f32 0.0, %v2489
      %v2491 = vpop.f32.mrf.mxu0
      %v2492 = vpop.f32.mrf.mxu0
      %v2493 = vadd.f32 0.0, %v2492
      %v2494 = vpop.f32.mrf.mxu0
      %2495 = vmatprep.mubr.bf16.mxu0 0
      %2496 = vmatmul.mubr.bf16.gmra.mxu0 %v969
      %v2497 = vpop.f32.mrf.mxu0
      %v2498 = vadd.f32 0.0, %v2497
      %v2499 = vpop.f32.mrf.mxu0
      %v2500 = vpop.f32.mrf.mxu0
      %v2501 = vadd.f32 0.0, %v2500
      %v2502 = vpop.f32.mrf.mxu0
      %2503 = vmatprep.mubr.bf16.mxu0 0
      %2504 = vmatmul.mubr.bf16.gmra.mxu0 %v970
      %v2505 = vpop.f32.mrf.mxu0
      %v2506 = vadd.f32 0.0, %v2505
      %v2507 = vpop.f32.mrf.mxu0
      %v2508 = vpop.f32.mrf.mxu0
      %v2509 = vadd.f32 0.0, %v2508
      %v2510 = vpop.f32.mrf.mxu0
      %2511 = vmatprep.mubr.bf16.mxu0 0
      %2512 = vmatmul.mubr.bf16.gmra.mxu0 %v1291
      %v2513 = vpop.f32.mrf.mxu0
      %v2514 = vadd.f32 0.0, %v2513
      %v2515 = vpop.f32.mrf.mxu0
      %v2516 = vpop.f32.mrf.mxu0
      %v2517 = vadd.f32 0.0, %v2516
      %v2518 = vpop.f32.mrf.mxu0
      %2519 = vmatprep.mubr.bf16.mxu0 0
      %2520 = vmatmul.mubr.bf16.gmra.mxu0 %v1292
      %v2521 = vpop.f32.mrf.mxu0
      %v2522 = vadd.f32 0.0, %v2521
      %v2523 = vpop.f32.mrf.mxu0
      %v2524 = vpop.f32.mrf.mxu0
      %v2525 = vadd.f32 0.0, %v2524
      %v2526 = vpop.f32.mrf.mxu0
      %2527 = vmatprep.mubr.bf16.mxu0 0
      %2528 = vmatmul.mubr.bf16.gmra.mxu0 %v1293
      %v2529 = vpop.f32.mrf.mxu0
      %v2530 = vadd.f32 0.0, %v2529
      %v2531 = vpop.f32.mrf.mxu0
      %v2532 = vpop.f32.mrf.mxu0
      %v2533 = vadd.f32 0.0, %v2532
      %v2534 = vpop.f32.mrf.mxu0
      %2535 = vdwg.mxu0
      %v2536 = vadd.f32 %v2056, %v2346
      %v2537 = vadd.f32 %v2059, %v2349
      %v2538 = vadd.f32 %v2064, %v2354
      %v2539 = vadd.f32 %v2067, %v2357
      %v2540 = vadd.f32 %v2072, %v2362
      %v2541 = vadd.f32 %v2075, %v2365
      %v2542 = vadd.f32 %v2080, %v2370
      %v2543 = vadd.f32 %v2083, %v2373
      %v2544 = vadd.f32 %v2088, %v2378
      %v2545 = vadd.f32 %v2091, %v2381
      %v2546 = vadd.f32 %v2096, %v2386
      %v2547 = vadd.f32 %v2099, %v2389
      %v2548 = vadd.f32 %v2104, %v2394
      %v2549 = vadd.f32 %v2107, %v2397
      %v2550 = vadd.f32 %v2112, %v2402
      %v2551 = vadd.f32 %v2115, %v2405
      %v2552 = vadd.f32 %v2120, %v2410
      %v2553 = vadd.f32 %v2123, %v2413
      %v2554 = vadd.f32 %v2128, %v2418
      %v2555 = vadd.f32 %v2131, %v2421
      %v2556 = vadd.f32 %v2136, %v2426
      %v2557 = vadd.f32 %v2139, %v2429
      %v2558 = vadd.f32 %v2144, %v2434
      %v2559 = vadd.f32 %v2147, %v2437
      %v2560 = vadd.f32 %v2152, %v2442
      %v2561 = vadd.f32 %v2155, %v2445
      %v2562 = vadd.f32 %v2160, %v2450
      %v2563 = vadd.f32 %v2163, %v2453
      %v2564 = vadd.f32 %v2168, %v2458
      %v2565 = vadd.f32 %v2171, %v2461
      %v2566 = vadd.f32 %v2176, %v2466
      %v2567 = vadd.f32 %v2179, %v2469
      %v2568 = vadd.f32 %v2184, %v2474
      %v2569 = vadd.f32 %v2187, %v2477
      %v2570 = vadd.f32 %v2192, %v2482
      %v2571 = vadd.f32 %v2195, %v2485
      %v2572 = vadd.f32 %v2200, %v2490
      %v2573 = vadd.f32 %v2203, %v2493
      %v2574 = vadd.f32 %v2208, %v2498
      %v2575 = vadd.f32 %v2211, %v2501
      %v2576 = vadd.f32 %v2216, %v2506
      %v2577 = vadd.f32 %v2219, %v2509
      %v2578 = vadd.f32 %v2224, %v2514
      %v2579 = vadd.f32 %v2227, %v2517
      %v2580 = vadd.f32 %v2232, %v2522
      %v2581 = vadd.f32 %v2235, %v2525
      %v2582 = vadd.f32 %v2240, %v2530
      %v2583 = vadd.f32 %v2243, %v2533
      %v2584 = vrot.slane %v2536, 1
      %v2585 = vrot.slane %v2537, 1
      %v2586 = vrot.slane %v2538, 1
      %v2587 = vrot.slane %v2539, 1
      %v2588 = vrot.slane %v2540, 1
      %v2589 = vrot.slane %v2541, 1
      %v2590 = vrot.slane %v2542, 1
      %v2591 = vrot.slane %v2543, 1
      %v2592 = vrot.slane %v2544, 1
      %v2593 = vrot.slane %v2545, 1
      %v2594 = vrot.slane %v2546, 1
      %v2595 = vrot.slane %v2547, 1
      %v2596 = vrot.slane %v2548, 1
      %v2597 = vrot.slane %v2549, 1
      %v2598 = vrot.slane %v2550, 1
      %v2599 = vrot.slane %v2551, 1
      %v2600 = vrot.slane %v2552, 1
      %v2601 = vrot.slane %v2553, 1
      %v2602 = vrot.slane %v2554, 1
      %v2603 = vrot.slane %v2555, 1
      %v2604 = vrot.slane %v2556, 1
      %v2605 = vrot.slane %v2557, 1
      %v2606 = vrot.slane %v2558, 1
      %v2607 = vrot.slane %v2559, 1
      %v2608 = vrot.slane %v2560, 1
      %v2609 = vrot.slane %v2561, 1
      %v2610 = vrot.slane %v2562, 1
      %v2611 = vrot.slane %v2563, 1
      %v2612 = vrot.slane %v2564, 1
      %v2613 = vrot.slane %v2565, 1
      %v2614 = vrot.slane %v2566, 1
      %v2615 = vrot.slane %v2567, 1
      %v2616 = vrot.slane %v2568, 1
      %v2617 = vrot.slane %v2569, 1
      %v2618 = vrot.slane %v2570, 1
      %v2619 = vrot.slane %v2571, 1
      %v2620 = vrot.slane %v2572, 1
      %v2621 = vrot.slane %v2573, 1
      %v2622 = vrot.slane %v2574, 1
      %v2623 = vrot.slane %v2575, 1
      %v2624 = vrot.slane %v2576, 1
      %v2625 = vrot.slane %v2577, 1
      %v2626 = vrot.slane %v2578, 1
      %v2627 = vrot.slane %v2579, 1
      %v2628 = vrot.slane %v2580, 1
      %v2629 = vrot.slane %v2581, 1
      %v2630 = vrot.slane %v2582, 1
      %v2631 = vrot.slane %v2583, 1
      %v2632 = vlaneseq
      %v2633 = vshrl.u32 %v2632, 7
      %vm2634 = vcmp.lt.s32.totalorder %v2633, 7
      %v2635 = vsel %vm2634, %v2630, %v2631
      %v2636 = vsel %vm2634, %v2629, %v2630
      %v2637 = vsel %vm2634, %v2628, %v2629
      %v2638 = vsel %vm2634, %v2627, %v2628
      %v2639 = vsel %vm2634, %v2626, %v2627
      %v2640 = vsel %vm2634, %v2625, %v2626
      %v2641 = vsel %vm2634, %v2624, %v2625
      %v2642 = vsel %vm2634, %v2623, %v2624
      %v2643 = vsel %vm2634, %v2622, %v2623
      %v2644 = vsel %vm2634, %v2621, %v2622
      %v2645 = vsel %vm2634, %v2620, %v2621
      %v2646 = vsel %vm2634, %v2619, %v2620
      %v2647 = vsel %vm2634, %v2618, %v2619
      %v2648 = vsel %vm2634, %v2617, %v2618
      %v2649 = vsel %vm2634, %v2616, %v2617
      %v2650 = vsel %vm2634, %v2615, %v2616
      %v2651 = vsel %vm2634, %v2614, %v2615
      %v2652 = vsel %vm2634, %v2613, %v2614
      %v2653 = vsel %vm2634, %v2612, %v2613
      %v2654 = vsel %vm2634, %v2611, %v2612
      %v2655 = vsel %vm2634, %v2610, %v2611
      %v2656 = vsel %vm2634, %v2609, %v2610
      %v2657 = vsel %vm2634, %v2608, %v2609
      %v2658 = vsel %vm2634, %v2607, %v2608
      %v2659 = vsel %vm2634, %v2606, %v2607
      %v2660 = vsel %vm2634, %v2605, %v2606
      %v2661 = vsel %vm2634, %v2604, %v2605
      %v2662 = vsel %vm2634, %v2603, %v2604
      %v2663 = vsel %vm2634, %v2602, %v2603
      %v2664 = vsel %vm2634, %v2601, %v2602
      %v2665 = vsel %vm2634, %v2600, %v2601
      %v2666 = vsel %vm2634, %v2599, %v2600
      %v2667 = vsel %vm2634, %v2598, %v2599
      %v2668 = vsel %vm2634, %v2597, %v2598
      %v2669 = vsel %vm2634, %v2596, %v2597
      %v2670 = vsel %vm2634, %v2595, %v2596
      %v2671 = vsel %vm2634, %v2594, %v2595
      %v2672 = vsel %vm2634, %v2593, %v2594
      %v2673 = vsel %vm2634, %v2592, %v2593
      %v2674 = vsel %vm2634, %v2591, %v2592
      %v2675 = vsel %vm2634, %v2590, %v2591
      %v2676 = vsel %vm2634, %v2589, %v2590
      %v2677 = vsel %vm2634, %v2588, %v2589
      %v2678 = vsel %vm2634, %v2587, %v2588
      %v2679 = vsel %vm2634, %v2586, %v2587
      %v2680 = vsel %vm2634, %v2585, %v2586
      %v2681 = vsel %vm2634, %v2584, %v2585
      %v2682 = vsel %vm2634, %v2631, %v2584
      %v2683 = vadd.f32 %v1618, %v2681
      %v2684 = vadd.f32 %v1619, %v2680
      %v2685 = vadd.f32 %v1620, %v2679
      %v2686 = vadd.f32 %v1621, %v2678
      %v2687 = vadd.f32 %v1622, %v2677
      %v2688 = vadd.f32 %v1623, %v2676
      %v2689 = vadd.f32 %v1624, %v2675
      %v2690 = vadd.f32 %v1625, %v2674
      %v2691 = vadd.f32 %v1626, %v2673
      %v2692 = vadd.f32 %v1627, %v2672
      %v2693 = vadd.f32 %v1628, %v2671
      %v2694 = vadd.f32 %v1629, %v2670
      %v2695 = vadd.f32 %v1630, %v2669
      %v2696 = vadd.f32 %v1631, %v2668
      %v2697 = vadd.f32 %v1632, %v2667
      %v2698 = vadd.f32 %v1633, %v2666
      %v2699 = vadd.f32 %v1634, %v2665
      %v2700 = vadd.f32 %v1635, %v2664
      %v2701 = vadd.f32 %v1636, %v2663
      %v2702 = vadd.f32 %v1637, %v2662
      %v2703 = vadd.f32 %v1638, %v2661
      %v2704 = vadd.f32 %v1639, %v2660
      %v2705 = vadd.f32 %v1640, %v2659
      %v2706 = vadd.f32 %v1641, %v2658
      %v2707 = vadd.f32 %v1642, %v2657
      %v2708 = vadd.f32 %v1643, %v2656
      %v2709 = vadd.f32 %v1644, %v2655
      %v2710 = vadd.f32 %v1645, %v2654
      %v2711 = vadd.f32 %v1646, %v2653
      %v2712 = vadd.f32 %v1647, %v2652
      %v2713 = vadd.f32 %v1648, %v2651
      %v2714 = vadd.f32 %v1649, %v2650
      %v2715 = vadd.f32 %v1650, %v2649
      %v2716 = vadd.f32 %v1651, %v2648
      %v2717 = vadd.f32 %v1652, %v2647
      %v2718 = vadd.f32 %v1653, %v2646
      %v2719 = vadd.f32 %v1654, %v2645
      %v2720 = vadd.f32 %v1655, %v2644
      %v2721 = vadd.f32 %v1656, %v2643
      %v2722 = vadd.f32 %v1657, %v2642
      %v2723 = vadd.f32 %v1658, %v2641
      %v2724 = vadd.f32 %v1659, %v2640
      %v2725 = vadd.f32 %v1660, %v2639
      %v2726 = vadd.f32 %v1661, %v2638
      %v2727 = vadd.f32 %v1662, %v2637
      %v2728 = vadd.f32 %v1663, %v2636
      %v2729 = vadd.f32 %v1664, %v2635
      %v2730 = vadd.f32 %v1665, %v2682
      %s2731 = scalar_lea.vmem %s2, 128
      %v2732 = vld [vmem:[%s2731] sm:$0xf]
      %v2733 = vld [vmem:[%s2731 + $0x4] sm:$0xf]
      %v2734 = vld [vmem:[%s2731 + $0x8] sm:$0xf]
      %v2735 = vld [vmem:[%s2731 + $0xc] sm:$0xf]
      %v2736 = vld [vmem:[%s2731 + $0x10] sm:$0xf]
      %v2737 = vld [vmem:[%s2731 + $0x14] sm:$0xf]
      %v2738 = vld [vmem:[%s2731 + $0x18] sm:$0xf]
      %v2739 = vld [vmem:[%s2731 + $0x1c] sm:$0xf]
      %v2740 = vld [vmem:[%s2731 + $0x20] sm:$0xf]
      %v2741 = vld [vmem:[%s2731 + $0x24] sm:$0xf]
      %v2742 = vld [vmem:[%s2731 + $0x28] sm:$0xf]
      %v2743 = vld [vmem:[%s2731 + $0x2c] sm:$0xf]
      %v2744 = vld [vmem:[%s2731 + $0x30] sm:$0xf]
      %v2745 = vld [vmem:[%s2731 + $0x34] sm:$0xf]
      %v2746 = vld [vmem:[%s2731 + $0x38] sm:$0xf]
      %v2747 = vld [vmem:[%s2731 + $0x3c] sm:$0xf]
      %s2748 = scalar_lea.vmem %s2, 320
      %v2749 = vld [vmem:[%s2748] sm:$0xf]
      %v2750 = vld [vmem:[%s2748 + $0x4] sm:$0xf]
      %v2751 = vld [vmem:[%s2748 + $0x8] sm:$0xf]
      %v2752 = vld [vmem:[%s2748 + $0xc] sm:$0xf]
      %v2753 = vld [vmem:[%s2748 + $0x10] sm:$0xf]
      %v2754 = vld [vmem:[%s2748 + $0x14] sm:$0xf]
      %v2755 = vld [vmem:[%s2748 + $0x18] sm:$0xf]
      %v2756 = vld [vmem:[%s2748 + $0x1c] sm:$0xf]
      %v2757 = vld [vmem:[%s2748 + $0x20] sm:$0xf]
      %v2758 = vld [vmem:[%s2748 + $0x24] sm:$0xf]
      %v2759 = vld [vmem:[%s2748 + $0x28] sm:$0xf]
      %v2760 = vld [vmem:[%s2748 + $0x2c] sm:$0xf]
      %v2761 = vld [vmem:[%s2748 + $0x30] sm:$0xf]
      %v2762 = vld [vmem:[%s2748 + $0x34] sm:$0xf]
      %v2763 = vld [vmem:[%s2748 + $0x38] sm:$0xf]
      %v2764 = vld [vmem:[%s2748 + $0x3c] sm:$0xf]
      %v2781 = vunpack.c.l.b16 %v2749
      %v2782 = vunpack.c.l.b16 %v2750
      %v2783 = vunpack.c.l.b16 %v2751
      %v2784 = vunpack.c.l.b16 %v2752
      %v2785 = vunpack.c.l.b16 %v2753
      %v2786 = vunpack.c.l.b16 %v2754
      %v2787 = vunpack.c.l.b16 %v2755
      %v2788 = vunpack.c.l.b16 %v2756
      %v2789 = vunpack.c.l.b16 %v2757
      %v2790 = vunpack.c.l.b16 %v2758
      %v2791 = vunpack.c.l.b16 %v2759
      %v2792 = vunpack.c.l.b16 %v2760
      %v2793 = vunpack.c.l.b16 %v2761
      %v2794 = vunpack.c.l.b16 %v2762
      %v2795 = vunpack.c.l.b16 %v2763
      %v2796 = vunpack.c.l.b16 %v2764
      %v2797 = vpack.c.b16 %v2782, %v2781
      %v2798 = vpack.c.b16 %v2784, %v2783
      %v2799 = vpack.c.b16 %v2786, %v2785
      %v2800 = vpack.c.b16 %v2788, %v2787
      %v2801 = vpack.c.b16 %v2790, %v2789
      %v2802 = vpack.c.b16 %v2792, %v2791
      %v2803 = vpack.c.b16 %v2794, %v2793
      %v2804 = vpack.c.b16 %v2796, %v2795
      %2813 = vmatprep.subr.bf16.mxu0 0
      %2814 = vmatpush1.bf16.msra.mxu0 %v2804
      %2815 = vmatprep.subr.bf16.mxu0 0
      %2816 = vmatpush1.bf16.msra.mxu0 %v2803
      %2817 = vmatprep.subr.bf16.mxu0 0
      %2818 = vmatpush1.bf16.msra.mxu0 %v2802
      %2819 = vmatprep.subr.bf16.mxu0 0
      %2820 = vmatpush1.bf16.msra.mxu0 %v2801
      %2821 = vmatprep.subr.bf16.mxu0 0
      %2822 = vmatpush1.bf16.msra.mxu0 %v2800
      %2823 = vmatprep.subr.bf16.mxu0 0
      %2824 = vmatpush1.bf16.msra.mxu0 %v2799
      %2825 = vmatprep.subr.bf16.mxu0 0
      %2826 = vmatpush1.bf16.msra.mxu0 %v2798
      %2827 = vmatprep.subr.bf16.mxu0 0
      %2828 = vmatpush1.bf16.msra.mxu0 %v2797
      %2829 = vmatprep.subr.bf16.mxu0 0
      %2830 = vmatpush2.bf16.msra.mxu0 0
      %2831 = vmatprep.subr.bf16.mxu0 0
      %2832 = vmatpush2.bf16.msra.mxu0 0
      %2833 = vmatprep.subr.bf16.mxu0 0
      %2834 = vmatpush2.bf16.msra.mxu0 0
      %2835 = vmatprep.subr.bf16.mxu0 0
      %2836 = vmatpush2.bf16.msra.mxu0 0
      %2837 = vmatprep.subr.bf16.mxu0 0
      %2838 = vmatpush2.bf16.msra.mxu0 0
      %2839 = vmatprep.subr.bf16.mxu0 0
      %2840 = vmatpush2.bf16.msra.mxu0 0
      %2841 = vmatprep.subr.bf16.mxu0 0
      %2842 = vmatpush2.bf16.msra.mxu0 0
      %2843 = vmatprep.subr.bf16.mxu0 0
      %2844 = vmatpush2.bf16.msra.mxu0 0
      %2845 = vmatprep.mubr.bf16.mxu0 0
      %2846 = vmatmul.mubr.bf16.gmra.mxu0 %v620
      %v2847 = vpop.f32.mrf.mxu0
      %v2848 = vadd.f32 0.0, %v2847
      %v2849 = vpop.f32.mrf.mxu0
      %v2850 = vpop.f32.mrf.mxu0
      %v2851 = vadd.f32 0.0, %v2850
      %v2852 = vpop.f32.mrf.mxu0
      %2853 = vmatprep.mubr.bf16.mxu0 0
      %2854 = vmatmul.mubr.bf16.gmra.mxu0 %v621
      %v2855 = vpop.f32.mrf.mxu0
      %v2856 = vadd.f32 0.0, %v2855
      %v2857 = vpop.f32.mrf.mxu0
      %v2858 = vpop.f32.mrf.mxu0
      %v2859 = vadd.f32 0.0, %v2858
      %v2860 = vpop.f32.mrf.mxu0
      %2861 = vmatprep.mubr.bf16.mxu0 0
      %2862 = vmatmul.mubr.bf16.gmra.mxu0 %v622
      %v2863 = vpop.f32.mrf.mxu0
      %v2864 = vadd.f32 0.0, %v2863
      %v2865 = vpop.f32.mrf.mxu0
      %v2866 = vpop.f32.mrf.mxu0
      %v2867 = vadd.f32 0.0, %v2866
      %v2868 = vpop.f32.mrf.mxu0
      %2869 = vmatprep.mubr.bf16.mxu0 0
      %2870 = vmatmul.mubr.bf16.gmra.mxu0 %v623
      %v2871 = vpop.f32.mrf.mxu0
      %v2872 = vadd.f32 0.0, %v2871
      %v2873 = vpop.f32.mrf.mxu0
      %v2874 = vpop.f32.mrf.mxu0
      %v2875 = vadd.f32 0.0, %v2874
      %v2876 = vpop.f32.mrf.mxu0
      %2877 = vmatprep.mubr.bf16.mxu0 0
      %2878 = vmatmul.mubr.bf16.gmra.mxu0 %v624
      %v2879 = vpop.f32.mrf.mxu0
      %v2880 = vadd.f32 0.0, %v2879
      %v2881 = vpop.f32.mrf.mxu0
      %v2882 = vpop.f32.mrf.mxu0
      %v2883 = vadd.f32 0.0, %v2882
      %v2884 = vpop.f32.mrf.mxu0
      %2885 = vmatprep.mubr.bf16.mxu0 0
      %2886 = vmatmul.mubr.bf16.gmra.mxu0 %v625
      %v2887 = vpop.f32.mrf.mxu0
      %v2888 = vadd.f32 0.0, %v2887
      %v2889 = vpop.f32.mrf.mxu0
      %v2890 = vpop.f32.mrf.mxu0
      %v2891 = vadd.f32 0.0, %v2890
      %v2892 = vpop.f32.mrf.mxu0
      %2893 = vmatprep.mubr.bf16.mxu0 0
      %2894 = vmatmul.mubr.bf16.gmra.mxu0 %v626
      %v2895 = vpop.f32.mrf.mxu0
      %v2896 = vadd.f32 0.0, %v2895
      %v2897 = vpop.f32.mrf.mxu0
      %v2898 = vpop.f32.mrf.mxu0
      %v2899 = vadd.f32 0.0, %v2898
      %v2900 = vpop.f32.mrf.mxu0
      %2901 = vmatprep.mubr.bf16.mxu0 0
      %2902 = vmatmul.mubr.bf16.gmra.mxu0 %v627
      %v2903 = vpop.f32.mrf.mxu0
      %v2904 = vadd.f32 0.0, %v2903
      %v2905 = vpop.f32.mrf.mxu0
      %v2906 = vpop.f32.mrf.mxu0
      %v2907 = vadd.f32 0.0, %v2906
      %v2908 = vpop.f32.mrf.mxu0
      %2909 = vmatprep.mubr.bf16.mxu0 0
      %2910 = vmatmul.mubr.bf16.gmra.mxu0 %v628
      %v2911 = vpop.f32.mrf.mxu0
      %v2912 = vadd.f32 0.0, %v2911
      %v2913 = vpop.f32.mrf.mxu0
      %v2914 = vpop.f32.mrf.mxu0
      %v2915 = vadd.f32 0.0, %v2914
      %v2916 = vpop.f32.mrf.mxu0
      %2917 = vmatprep.mubr.bf16.mxu0 0
      %2918 = vmatmul.mubr.bf16.gmra.mxu0 %v629
      %v2919 = vpop.f32.mrf.mxu0
      %v2920 = vadd.f32 0.0, %v2919
      %v2921 = vpop.f32.mrf.mxu0
      %v2922 = vpop.f32.mrf.mxu0
      %v2923 = vadd.f32 0.0, %v2922
      %v2924 = vpop.f32.mrf.mxu0
      %2925 = vmatprep.mubr.bf16.mxu0 0
      %2926 = vmatmul.mubr.bf16.gmra.mxu0 %v630
      %v2927 = vpop.f32.mrf.mxu0
      %v2928 = vadd.f32 0.0, %v2927
      %v2929 = vpop.f32.mrf.mxu0
      %v2930 = vpop.f32.mrf.mxu0
      %v2931 = vadd.f32 0.0, %v2930
      %v2932 = vpop.f32.mrf.mxu0
      %2933 = vmatprep.mubr.bf16.mxu0 0
      %2934 = vmatmul.mubr.bf16.gmra.mxu0 %v631
      %v2935 = vpop.f32.mrf.mxu0
      %v2936 = vadd.f32 0.0, %v2935
      %v2937 = vpop.f32.mrf.mxu0
      %v2938 = vpop.f32.mrf.mxu0
      %v2939 = vadd.f32 0.0, %v2938
      %v2940 = vpop.f32.mrf.mxu0
      %2941 = vmatprep.mubr.bf16.mxu0 0
      %2942 = vmatmul.mubr.bf16.gmra.mxu0 %v632
      %v2943 = vpop.f32.mrf.mxu0
      %v2944 = vadd.f32 0.0, %v2943
      %v2945 = vpop.f32.mrf.mxu0
      %v2946 = vpop.f32.mrf.mxu0
      %v2947 = vadd.f32 0.0, %v2946
      %v2948 = vpop.f32.mrf.mxu0
      %2949 = vmatprep.mubr.bf16.mxu0 0
      %2950 = vmatmul.mubr.bf16.gmra.mxu0 %v633
      %v2951 = vpop.f32.mrf.mxu0
      %v2952 = vadd.f32 0.0, %v2951
      %v2953 = vpop.f32.mrf.mxu0
      %v2954 = vpop.f32.mrf.mxu0
      %v2955 = vadd.f32 0.0, %v2954
      %v2956 = vpop.f32.mrf.mxu0
      %2957 = vmatprep.mubr.bf16.mxu0 0
      %2958 = vmatmul.mubr.bf16.gmra.mxu0 %v634
      %v2959 = vpop.f32.mrf.mxu0
      %v2960 = vadd.f32 0.0, %v2959
      %v2961 = vpop.f32.mrf.mxu0
      %v2962 = vpop.f32.mrf.mxu0
      %v2963 = vadd.f32 0.0, %v2962
      %v2964 = vpop.f32.mrf.mxu0
      %2965 = vmatprep.mubr.bf16.mxu0 0
      %2966 = vmatmul.mubr.bf16.gmra.mxu0 %v635
      %v2967 = vpop.f32.mrf.mxu0
      %v2968 = vadd.f32 0.0, %v2967
      %v2969 = vpop.f32.mrf.mxu0
      %v2970 = vpop.f32.mrf.mxu0
      %v2971 = vadd.f32 0.0, %v2970
      %v2972 = vpop.f32.mrf.mxu0
      %2973 = vmatprep.mubr.bf16.mxu0 0
      %2974 = vmatmul.mubr.bf16.gmra.mxu0 %v636
      %v2975 = vpop.f32.mrf.mxu0
      %v2976 = vadd.f32 0.0, %v2975
      %v2977 = vpop.f32.mrf.mxu0
      %v2978 = vpop.f32.mrf.mxu0
      %v2979 = vadd.f32 0.0, %v2978
      %v2980 = vpop.f32.mrf.mxu0
      %2981 = vmatprep.mubr.bf16.mxu0 0
      %2982 = vmatmul.mubr.bf16.gmra.mxu0 %v637
      %v2983 = vpop.f32.mrf.mxu0
      %v2984 = vadd.f32 0.0, %v2983
      %v2985 = vpop.f32.mrf.mxu0
      %v2986 = vpop.f32.mrf.mxu0
      %v2987 = vadd.f32 0.0, %v2986
      %v2988 = vpop.f32.mrf.mxu0
      %2989 = vmatprep.mubr.bf16.mxu0 0
      %2990 = vmatmul.mubr.bf16.gmra.mxu0 %v638
      %v2991 = vpop.f32.mrf.mxu0
      %v2992 = vadd.f32 0.0, %v2991
      %v2993 = vpop.f32.mrf.mxu0
      %v2994 = vpop.f32.mrf.mxu0
      %v2995 = vadd.f32 0.0, %v2994
      %v2996 = vpop.f32.mrf.mxu0
      %2997 = vmatprep.mubr.bf16.mxu0 0
      %2998 = vmatmul.mubr.bf16.gmra.mxu0 %v639
      %v2999 = vpop.f32.mrf.mxu0
      %v3000 = vadd.f32 0.0, %v2999
      %v3001 = vpop.f32.mrf.mxu0
      %v3002 = vpop.f32.mrf.mxu0
      %v3003 = vadd.f32 0.0, %v3002
      %v3004 = vpop.f32.mrf.mxu0
      %3005 = vmatprep.mubr.bf16.mxu0 0
      %3006 = vmatmul.mubr.bf16.gmra.mxu0 %v640
      %v3007 = vpop.f32.mrf.mxu0
      %v3008 = vadd.f32 0.0, %v3007
      %v3009 = vpop.f32.mrf.mxu0
      %v3010 = vpop.f32.mrf.mxu0
      %v3011 = vadd.f32 0.0, %v3010
      %v3012 = vpop.f32.mrf.mxu0
      %3013 = vmatprep.mubr.bf16.mxu0 0
      %3014 = vmatmul.mubr.bf16.gmra.mxu0 %v641
      %v3015 = vpop.f32.mrf.mxu0
      %v3016 = vadd.f32 0.0, %v3015
      %v3017 = vpop.f32.mrf.mxu0
      %v3018 = vpop.f32.mrf.mxu0
      %v3019 = vadd.f32 0.0, %v3018
      %v3020 = vpop.f32.mrf.mxu0
      %3021 = vmatprep.mubr.bf16.mxu0 0
      %3022 = vmatmul.mubr.bf16.gmra.mxu0 %v642
      %v3023 = vpop.f32.mrf.mxu0
      %v3024 = vadd.f32 0.0, %v3023
      %v3025 = vpop.f32.mrf.mxu0
      %v3026 = vpop.f32.mrf.mxu0
      %v3027 = vadd.f32 0.0, %v3026
      %v3028 = vpop.f32.mrf.mxu0
      %3029 = vmatprep.mubr.bf16.mxu0 0
      %3030 = vmatmul.mubr.bf16.gmra.mxu0 %v643
      %v3031 = vpop.f32.mrf.mxu0
      %v3032 = vadd.f32 0.0, %v3031
      %v3033 = vpop.f32.mrf.mxu0
      %v3034 = vpop.f32.mrf.mxu0
      %v3035 = vadd.f32 0.0, %v3034
      %v3036 = vpop.f32.mrf.mxu0
      %3037 = vdwg.mxu0
      %v3054 = vunpack.c.l.b16 %v2732
      %v3055 = vunpack.c.l.b16 %v2733
      %v3056 = vunpack.c.l.b16 %v2734
      %v3057 = vunpack.c.l.b16 %v2735
      %v3058 = vunpack.c.l.b16 %v2736
      %v3059 = vunpack.c.l.b16 %v2737
      %v3060 = vunpack.c.l.b16 %v2738
      %v3061 = vunpack.c.l.b16 %v2739
      %v3062 = vunpack.c.l.b16 %v2740
      %v3063 = vunpack.c.l.b16 %v2741
      %v3064 = vunpack.c.l.b16 %v2742
      %v3065 = vunpack.c.l.b16 %v2743
      %v3066 = vunpack.c.l.b16 %v2744
      %v3067 = vunpack.c.l.b16 %v2745
      %v3068 = vunpack.c.l.b16 %v2746
      %v3069 = vunpack.c.l.b16 %v2747
      %v3070 = vpack.c.b16 %v3055, %v3054
      %v3071 = vpack.c.b16 %v3057, %v3056
      %v3072 = vpack.c.b16 %v3059, %v3058
      %v3073 = vpack.c.b16 %v3061, %v3060
      %v3074 = vpack.c.b16 %v3063, %v3062
      %v3075 = vpack.c.b16 %v3065, %v3064
      %v3076 = vpack.c.b16 %v3067, %v3066
      %v3077 = vpack.c.b16 %v3069, %v3068
      %3086 = vmatprep.subr.bf16.mxu0 0
      %3087 = vmatpush1.bf16.msra.mxu0 %v3077
      %3088 = vmatprep.subr.bf16.mxu0 0
      %3089 = vmatpush1.bf16.msra.mxu0 %v3076
      %3090 = vmatprep.subr.bf16.mxu0 0
      %3091 = vmatpush1.bf16.msra.mxu0 %v3075
      %3092 = vmatprep.subr.bf16.mxu0 0
      %3093 = vmatpush1.bf16.msra.mxu0 %v3074
      %3094 = vmatprep.subr.bf16.mxu0 0
      %3095 = vmatpush1.bf16.msra.mxu0 %v3073
      %3096 = vmatprep.subr.bf16.mxu0 0
      %3097 = vmatpush1.bf16.msra.mxu0 %v3072
      %3098 = vmatprep.subr.bf16.mxu0 0
      %3099 = vmatpush1.bf16.msra.mxu0 %v3071
      %3100 = vmatprep.subr.bf16.mxu0 0
      %3101 = vmatpush1.bf16.msra.mxu0 %v3070
      %3102 = vmatprep.subr.bf16.mxu0 0
      %3103 = vmatpush2.bf16.msra.mxu0 0
      %3104 = vmatprep.subr.bf16.mxu0 0
      %3105 = vmatpush2.bf16.msra.mxu0 0
      %3106 = vmatprep.subr.bf16.mxu0 0
      %3107 = vmatpush2.bf16.msra.mxu0 0
      %3108 = vmatprep.subr.bf16.mxu0 0
      %3109 = vmatpush2.bf16.msra.mxu0 0
      %3110 = vmatprep.subr.bf16.mxu0 0
      %3111 = vmatpush2.bf16.msra.mxu0 0
      %3112 = vmatprep.subr.bf16.mxu0 0
      %3113 = vmatpush2.bf16.msra.mxu0 0
      %3114 = vmatprep.subr.bf16.mxu0 0
      %3115 = vmatpush2.bf16.msra.mxu0 0
      %3116 = vmatprep.subr.bf16.mxu0 0
      %3117 = vmatpush2.bf16.msra.mxu0 0
      %3118 = vmatprep.mubr.bf16.mxu0 0
      %3119 = vmatmul.mubr.bf16.gmra.mxu0 %v947
      %v3120 = vpop.f32.mrf.mxu0
      %v3121 = vadd.f32 %v2848, %v3120
      %v3122 = vpop.f32.mrf.mxu0
      %v3123 = vpop.f32.mrf.mxu0
      %v3124 = vadd.f32 %v2851, %v3123
      %v3125 = vpop.f32.mrf.mxu0
      %3126 = vmatprep.mubr.bf16.mxu0 0
      %3127 = vmatmul.mubr.bf16.gmra.mxu0 %v948
      %v3128 = vpop.f32.mrf.mxu0
      %v3129 = vadd.f32 %v2856, %v3128
      %v3130 = vpop.f32.mrf.mxu0
      %v3131 = vpop.f32.mrf.mxu0
      %v3132 = vadd.f32 %v2859, %v3131
      %v3133 = vpop.f32.mrf.mxu0
      %3134 = vmatprep.mubr.bf16.mxu0 0
      %3135 = vmatmul.mubr.bf16.gmra.mxu0 %v949
      %v3136 = vpop.f32.mrf.mxu0
      %v3137 = vadd.f32 %v2864, %v3136
      %v3138 = vpop.f32.mrf.mxu0
      %v3139 = vpop.f32.mrf.mxu0
      %v3140 = vadd.f32 %v2867, %v3139
      %v3141 = vpop.f32.mrf.mxu0
      %3142 = vmatprep.mubr.bf16.mxu0 0
      %3143 = vmatmul.mubr.bf16.gmra.mxu0 %v950
      %v3144 = vpop.f32.mrf.mxu0
      %v3145 = vadd.f32 %v2872, %v3144
      %v3146 = vpop.f32.mrf.mxu0
      %v3147 = vpop.f32.mrf.mxu0
      %v3148 = vadd.f32 %v2875, %v3147
      %v3149 = vpop.f32.mrf.mxu0
      %3150 = vmatprep.mubr.bf16.mxu0 0
      %3151 = vmatmul.mubr.bf16.gmra.mxu0 %v951
      %v3152 = vpop.f32.mrf.mxu0
      %v3153 = vadd.f32 %v2880, %v3152
      %v3154 = vpop.f32.mrf.mxu0
      %v3155 = vpop.f32.mrf.mxu0
      %v3156 = vadd.f32 %v2883, %v3155
      %v3157 = vpop.f32.mrf.mxu0
      %3158 = vmatprep.mubr.bf16.mxu0 0
      %3159 = vmatmul.mubr.bf16.gmra.mxu0 %v952
      %v3160 = vpop.f32.mrf.mxu0
      %v3161 = vadd.f32 %v2888, %v3160
      %v3162 = vpop.f32.mrf.mxu0
      %v3163 = vpop.f32.mrf.mxu0
      %v3164 = vadd.f32 %v2891, %v3163
      %v3165 = vpop.f32.mrf.mxu0
      %3166 = vmatprep.mubr.bf16.mxu0 0
      %3167 = vmatmul.mubr.bf16.gmra.mxu0 %v953
      %v3168 = vpop.f32.mrf.mxu0
      %v3169 = vadd.f32 %v2896, %v3168
      %v3170 = vpop.f32.mrf.mxu0
      %v3171 = vpop.f32.mrf.mxu0
      %v3172 = vadd.f32 %v2899, %v3171
      %v3173 = vpop.f32.mrf.mxu0
      %3174 = vmatprep.mubr.bf16.mxu0 0
      %3175 = vmatmul.mubr.bf16.gmra.mxu0 %v954
      %v3176 = vpop.f32.mrf.mxu0
      %v3177 = vadd.f32 %v2904, %v3176
      %v3178 = vpop.f32.mrf.mxu0
      %v3179 = vpop.f32.mrf.mxu0
      %v3180 = vadd.f32 %v2907, %v3179
      %v3181 = vpop.f32.mrf.mxu0
      %3182 = vmatprep.mubr.bf16.mxu0 0
      %3183 = vmatmul.mubr.bf16.gmra.mxu0 %v955
      %v3184 = vpop.f32.mrf.mxu0
      %v3185 = vadd.f32 %v2912, %v3184
      %v3186 = vpop.f32.mrf.mxu0
      %v3187 = vpop.f32.mrf.mxu0
      %v3188 = vadd.f32 %v2915, %v3187
      %v3189 = vpop.f32.mrf.mxu0
      %3190 = vmatprep.mubr.bf16.mxu0 0
      %3191 = vmatmul.mubr.bf16.gmra.mxu0 %v956
      %v3192 = vpop.f32.mrf.mxu0
      %v3193 = vadd.f32 %v2920, %v3192
      %v3194 = vpop.f32.mrf.mxu0
      %v3195 = vpop.f32.mrf.mxu0
      %v3196 = vadd.f32 %v2923, %v3195
      %v3197 = vpop.f32.mrf.mxu0
      %3198 = vmatprep.mubr.bf16.mxu0 0
      %3199 = vmatmul.mubr.bf16.gmra.mxu0 %v957
      %v3200 = vpop.f32.mrf.mxu0
      %v3201 = vadd.f32 %v2928, %v3200
      %v3202 = vpop.f32.mrf.mxu0
      %v3203 = vpop.f32.mrf.mxu0
      %v3204 = vadd.f32 %v2931, %v3203
      %v3205 = vpop.f32.mrf.mxu0
      %3206 = vmatprep.mubr.bf16.mxu0 0
      %3207 = vmatmul.mubr.bf16.gmra.mxu0 %v958
      %v3208 = vpop.f32.mrf.mxu0
      %v3209 = vadd.f32 %v2936, %v3208
      %v3210 = vpop.f32.mrf.mxu0
      %v3211 = vpop.f32.mrf.mxu0
      %v3212 = vadd.f32 %v2939, %v3211
      %v3213 = vpop.f32.mrf.mxu0
      %3214 = vmatprep.mubr.bf16.mxu0 0
      %3215 = vmatmul.mubr.bf16.gmra.mxu0 %v959
      %v3216 = vpop.f32.mrf.mxu0
      %v3217 = vadd.f32 %v2944, %v3216
      %v3218 = vpop.f32.mrf.mxu0
      %v3219 = vpop.f32.mrf.mxu0
      %v3220 = vadd.f32 %v2947, %v3219
      %v3221 = vpop.f32.mrf.mxu0
      %3222 = vmatprep.mubr.bf16.mxu0 0
      %3223 = vmatmul.mubr.bf16.gmra.mxu0 %v960
      %v3224 = vpop.f32.mrf.mxu0
      %v3225 = vadd.f32 %v2952, %v3224
      %v3226 = vpop.f32.mrf.mxu0
      %v3227 = vpop.f32.mrf.mxu0
      %v3228 = vadd.f32 %v2955, %v3227
      %v3229 = vpop.f32.mrf.mxu0
      %3230 = vmatprep.mubr.bf16.mxu0 0
      %3231 = vmatmul.mubr.bf16.gmra.mxu0 %v961
      %v3232 = vpop.f32.mrf.mxu0
      %v3233 = vadd.f32 %v2960, %v3232
      %v3234 = vpop.f32.mrf.mxu0
      %v3235 = vpop.f32.mrf.mxu0
      %v3236 = vadd.f32 %v2963, %v3235
      %v3237 = vpop.f32.mrf.mxu0
      %3238 = vmatprep.mubr.bf16.mxu0 0
      %3239 = vmatmul.mubr.bf16.gmra.mxu0 %v962
      %v3240 = vpop.f32.mrf.mxu0
      %v3241 = vadd.f32 %v2968, %v3240
      %v3242 = vpop.f32.mrf.mxu0
      %v3243 = vpop.f32.mrf.mxu0
      %v3244 = vadd.f32 %v2971, %v3243
      %v3245 = vpop.f32.mrf.mxu0
      %3246 = vmatprep.mubr.bf16.mxu0 0
      %3247 = vmatmul.mubr.bf16.gmra.mxu0 %v963
      %v3248 = vpop.f32.mrf.mxu0
      %v3249 = vadd.f32 %v2976, %v3248
      %v3250 = vpop.f32.mrf.mxu0
      %v3251 = vpop.f32.mrf.mxu0
      %v3252 = vadd.f32 %v2979, %v3251
      %v3253 = vpop.f32.mrf.mxu0
      %3254 = vmatprep.mubr.bf16.mxu0 0
      %3255 = vmatmul.mubr.bf16.gmra.mxu0 %v964
      %v3256 = vpop.f32.mrf.mxu0
      %v3257 = vadd.f32 %v2984, %v3256
      %v3258 = vpop.f32.mrf.mxu0
      %v3259 = vpop.f32.mrf.mxu0
      %v3260 = vadd.f32 %v2987, %v3259
      %v3261 = vpop.f32.mrf.mxu0
      %3262 = vmatprep.mubr.bf16.mxu0 0
      %3263 = vmatmul.mubr.bf16.gmra.mxu0 %v965
      %v3264 = vpop.f32.mrf.mxu0
      %v3265 = vadd.f32 %v2992, %v3264
      %v3266 = vpop.f32.mrf.mxu0
      %v3267 = vpop.f32.mrf.mxu0
      %v3268 = vadd.f32 %v2995, %v3267
      %v3269 = vpop.f32.mrf.mxu0
      %3270 = vmatprep.mubr.bf16.mxu0 0
      %3271 = vmatmul.mubr.bf16.gmra.mxu0 %v966
      %v3272 = vpop.f32.mrf.mxu0
      %v3273 = vadd.f32 %v3000, %v3272
      %v3274 = vpop.f32.mrf.mxu0
      %v3275 = vpop.f32.mrf.mxu0
      %v3276 = vadd.f32 %v3003, %v3275
      %v3277 = vpop.f32.mrf.mxu0
      %3278 = vmatprep.mubr.bf16.mxu0 0
      %3279 = vmatmul.mubr.bf16.gmra.mxu0 %v967
      %v3280 = vpop.f32.mrf.mxu0
      %v3281 = vadd.f32 %v3008, %v3280
      %v3282 = vpop.f32.mrf.mxu0
      %v3283 = vpop.f32.mrf.mxu0
      %v3284 = vadd.f32 %v3011, %v3283
      %v3285 = vpop.f32.mrf.mxu0
      %3286 = vmatprep.mubr.bf16.mxu0 0
      %3287 = vmatmul.mubr.bf16.gmra.mxu0 %v968
      %v3288 = vpop.f32.mrf.mxu0
      %v3289 = vadd.f32 %v3016, %v3288
      %v3290 = vpop.f32.mrf.mxu0
      %v3291 = vpop.f32.mrf.mxu0
      %v3292 = vadd.f32 %v3019, %v3291
      %v3293 = vpop.f32.mrf.mxu0
      %3294 = vmatprep.mubr.bf16.mxu0 0
      %3295 = vmatmul.mubr.bf16.gmra.mxu0 %v969
      %v3296 = vpop.f32.mrf.mxu0
      %v3297 = vadd.f32 %v3024, %v3296
      %v3298 = vpop.f32.mrf.mxu0
      %v3299 = vpop.f32.mrf.mxu0
      %v3300 = vadd.f32 %v3027, %v3299
      %v3301 = vpop.f32.mrf.mxu0
      %3302 = vmatprep.mubr.bf16.mxu0 0
      %3303 = vmatmul.mubr.bf16.gmra.mxu0 %v970
      %v3304 = vpop.f32.mrf.mxu0
      %v3305 = vadd.f32 %v3032, %v3304
      %v3306 = vpop.f32.mrf.mxu0
      %v3307 = vpop.f32.mrf.mxu0
      %v3308 = vadd.f32 %v3035, %v3307
      %v3309 = vpop.f32.mrf.mxu0
      %3310 = vdwg.mxu0
      %s3311 = scalar_lea.vmem %s2, 512
      %v3312 = vld [vmem:[%s3311] sm:$0xf]
      %v3313 = vld [vmem:[%s3311 + $0x4] sm:$0xf]
      %v3314 = vld [vmem:[%s3311 + $0x8] sm:$0xf]
      %v3315 = vld [vmem:[%s3311 + $0xc] sm:$0xf]
      %v3316 = vld [vmem:[%s3311 + $0x10] sm:$0xf]
      %v3317 = vld [vmem:[%s3311 + $0x14] sm:$0xf]
      %v3318 = vld [vmem:[%s3311 + $0x18] sm:$0xf]
      %v3319 = vld [vmem:[%s3311 + $0x1c] sm:$0xf]
      %v3320 = vld [vmem:[%s3311 + $0x20] sm:$0xf]
      %v3321 = vld [vmem:[%s3311 + $0x24] sm:$0xf]
      %v3322 = vld [vmem:[%s3311 + $0x28] sm:$0xf]
      %v3323 = vld [vmem:[%s3311 + $0x2c] sm:$0xf]
      %v3324 = vld [vmem:[%s3311 + $0x30] sm:$0xf]
      %v3325 = vld [vmem:[%s3311 + $0x34] sm:$0xf]
      %v3326 = vld [vmem:[%s3311 + $0x38] sm:$0xf]
      %v3327 = vld [vmem:[%s3311 + $0x3c] sm:$0xf]
      %v3344 = vunpack.c.l.b16 %v3312
      %v3345 = vunpack.c.l.b16 %v3313
      %v3346 = vunpack.c.l.b16 %v3314
      %v3347 = vunpack.c.l.b16 %v3315
      %v3348 = vunpack.c.l.b16 %v3316
      %v3349 = vunpack.c.l.b16 %v3317
      %v3350 = vunpack.c.l.b16 %v3318
      %v3351 = vunpack.c.l.b16 %v3319
      %v3352 = vunpack.c.l.b16 %v3320
      %v3353 = vunpack.c.l.b16 %v3321
      %v3354 = vunpack.c.l.b16 %v3322
      %v3355 = vunpack.c.l.b16 %v3323
      %v3356 = vunpack.c.l.b16 %v3324
      %v3357 = vunpack.c.l.b16 %v3325
      %v3358 = vunpack.c.l.b16 %v3326
      %v3359 = vunpack.c.l.b16 %v3327
      %v3360 = vpack.c.b16 %v3345, %v3344
      %v3361 = vpack.c.b16 %v3347, %v3346
      %v3362 = vpack.c.b16 %v3349, %v3348
      %v3363 = vpack.c.b16 %v3351, %v3350
      %v3364 = vpack.c.b16 %v3353, %v3352
      %v3365 = vpack.c.b16 %v3355, %v3354
      %v3366 = vpack.c.b16 %v3357, %v3356
      %v3367 = vpack.c.b16 %v3359, %v3358
      %3376 = vmatprep.subr.bf16.mxu0 0
      %3377 = vmatpush1.bf16.msra.mxu0 %v3367
      %3378 = vmatprep.subr.bf16.mxu0 0
      %3379 = vmatpush1.bf16.msra.mxu0 %v3366
      %3380 = vmatprep.subr.bf16.mxu0 0
      %3381 = vmatpush1.bf16.msra.mxu0 %v3365
      %3382 = vmatprep.subr.bf16.mxu0 0
      %3383 = vmatpush1.bf16.msra.mxu0 %v3364
      %3384 = vmatprep.subr.bf16.mxu0 0
      %3385 = vmatpush1.bf16.msra.mxu0 %v3363
      %3386 = vmatprep.subr.bf16.mxu0 0
      %3387 = vmatpush1.bf16.msra.mxu0 %v3362
      %3388 = vmatprep.subr.bf16.mxu0 0
      %3389 = vmatpush1.bf16.msra.mxu0 %v3361
      %3390 = vmatprep.subr.bf16.mxu0 0
      %3391 = vmatpush1.bf16.msra.mxu0 %v3360
      %3392 = vmatprep.subr.bf16.mxu0 0
      %3393 = vmatpush2.bf16.msra.mxu0 0
      %3394 = vmatprep.subr.bf16.mxu0 0
      %3395 = vmatpush2.bf16.msra.mxu0 0
      %3396 = vmatprep.subr.bf16.mxu0 0
      %3397 = vmatpush2.bf16.msra.mxu0 0
      %3398 = vmatprep.subr.bf16.mxu0 0
      %3399 = vmatpush2.bf16.msra.mxu0 0
      %3400 = vmatprep.subr.bf16.mxu0 0
      %3401 = vmatpush2.bf16.msra.mxu0 0
      %3402 = vmatprep.subr.bf16.mxu0 0
      %3403 = vmatpush2.bf16.msra.mxu0 0
      %3404 = vmatprep.subr.bf16.mxu0 0
      %3405 = vmatpush2.bf16.msra.mxu0 0
      %3406 = vmatprep.subr.bf16.mxu0 0
      %3407 = vmatpush2.bf16.msra.mxu0 0
      %3408 = vmatprep.mubr.bf16.mxu0 0
      %3409 = vmatmul.mubr.bf16.gmra.mxu0 %v950
      %v3410 = vpop.f32.mrf.mxu0
      %v3411 = vadd.f32 0.0, %v3410
      %v3412 = vpop.f32.mrf.mxu0
      %v3413 = vpop.f32.mrf.mxu0
      %v3414 = vadd.f32 0.0, %v3413
      %v3415 = vpop.f32.mrf.mxu0
      %3416 = vmatprep.mubr.bf16.mxu0 0
      %3417 = vmatmul.mubr.bf16.gmra.mxu0 %v951
      %v3418 = vpop.f32.mrf.mxu0
      %v3419 = vadd.f32 0.0, %v3418
      %v3420 = vpop.f32.mrf.mxu0
      %v3421 = vpop.f32.mrf.mxu0
      %v3422 = vadd.f32 0.0, %v3421
      %v3423 = vpop.f32.mrf.mxu0
      %3424 = vmatprep.mubr.bf16.mxu0 0
      %3425 = vmatmul.mubr.bf16.gmra.mxu0 %v952
      %v3426 = vpop.f32.mrf.mxu0
      %v3427 = vadd.f32 0.0, %v3426
      %v3428 = vpop.f32.mrf.mxu0
      %v3429 = vpop.f32.mrf.mxu0
      %v3430 = vadd.f32 0.0, %v3429
      %v3431 = vpop.f32.mrf.mxu0
      %3432 = vmatprep.mubr.bf16.mxu0 0
      %3433 = vmatmul.mubr.bf16.gmra.mxu0 %v953
      %v3434 = vpop.f32.mrf.mxu0
      %v3435 = vadd.f32 0.0, %v3434
      %v3436 = vpop.f32.mrf.mxu0
      %v3437 = vpop.f32.mrf.mxu0
      %v3438 = vadd.f32 0.0, %v3437
      %v3439 = vpop.f32.mrf.mxu0
      %3440 = vmatprep.mubr.bf16.mxu0 0
      %3441 = vmatmul.mubr.bf16.gmra.mxu0 %v954
      %v3442 = vpop.f32.mrf.mxu0
      %v3443 = vadd.f32 0.0, %v3442
      %v3444 = vpop.f32.mrf.mxu0
      %v3445 = vpop.f32.mrf.mxu0
      %v3446 = vadd.f32 0.0, %v3445
      %v3447 = vpop.f32.mrf.mxu0
      %3448 = vmatprep.mubr.bf16.mxu0 0
      %3449 = vmatmul.mubr.bf16.gmra.mxu0 %v955
      %v3450 = vpop.f32.mrf.mxu0
      %v3451 = vadd.f32 0.0, %v3450
      %v3452 = vpop.f32.mrf.mxu0
      %v3453 = vpop.f32.mrf.mxu0
      %v3454 = vadd.f32 0.0, %v3453
      %v3455 = vpop.f32.mrf.mxu0
      %3456 = vmatprep.mubr.bf16.mxu0 0
      %3457 = vmatmul.mubr.bf16.gmra.mxu0 %v956
      %v3458 = vpop.f32.mrf.mxu0
      %v3459 = vadd.f32 0.0, %v3458
      %v3460 = vpop.f32.mrf.mxu0
      %v3461 = vpop.f32.mrf.mxu0
      %v3462 = vadd.f32 0.0, %v3461
      %v3463 = vpop.f32.mrf.mxu0
      %3464 = vmatprep.mubr.bf16.mxu0 0
      %3465 = vmatmul.mubr.bf16.gmra.mxu0 %v957
      %v3466 = vpop.f32.mrf.mxu0
      %v3467 = vadd.f32 0.0, %v3466
      %v3468 = vpop.f32.mrf.mxu0
      %v3469 = vpop.f32.mrf.mxu0
      %v3470 = vadd.f32 0.0, %v3469
      %v3471 = vpop.f32.mrf.mxu0
      %3472 = vmatprep.mubr.bf16.mxu0 0
      %3473 = vmatmul.mubr.bf16.gmra.mxu0 %v958
      %v3474 = vpop.f32.mrf.mxu0
      %v3475 = vadd.f32 0.0, %v3474
      %v3476 = vpop.f32.mrf.mxu0
      %v3477 = vpop.f32.mrf.mxu0
      %v3478 = vadd.f32 0.0, %v3477
      %v3479 = vpop.f32.mrf.mxu0
      %3480 = vmatprep.mubr.bf16.mxu0 0
      %3481 = vmatmul.mubr.bf16.gmra.mxu0 %v959
      %v3482 = vpop.f32.mrf.mxu0
      %v3483 = vadd.f32 0.0, %v3482
      %v3484 = vpop.f32.mrf.mxu0
      %v3485 = vpop.f32.mrf.mxu0
      %v3486 = vadd.f32 0.0, %v3485
      %v3487 = vpop.f32.mrf.mxu0
      %3488 = vmatprep.mubr.bf16.mxu0 0
      %3489 = vmatmul.mubr.bf16.gmra.mxu0 %v960
      %v3490 = vpop.f32.mrf.mxu0
      %v3491 = vadd.f32 0.0, %v3490
      %v3492 = vpop.f32.mrf.mxu0
      %v3493 = vpop.f32.mrf.mxu0
      %v3494 = vadd.f32 0.0, %v3493
      %v3495 = vpop.f32.mrf.mxu0
      %3496 = vmatprep.mubr.bf16.mxu0 0
      %3497 = vmatmul.mubr.bf16.gmra.mxu0 %v961
      %v3498 = vpop.f32.mrf.mxu0
      %v3499 = vadd.f32 0.0, %v3498
      %v3500 = vpop.f32.mrf.mxu0
      %v3501 = vpop.f32.mrf.mxu0
      %v3502 = vadd.f32 0.0, %v3501
      %v3503 = vpop.f32.mrf.mxu0
      %3504 = vmatprep.mubr.bf16.mxu0 0
      %3505 = vmatmul.mubr.bf16.gmra.mxu0 %v962
      %v3506 = vpop.f32.mrf.mxu0
      %v3507 = vadd.f32 0.0, %v3506
      %v3508 = vpop.f32.mrf.mxu0
      %v3509 = vpop.f32.mrf.mxu0
      %v3510 = vadd.f32 0.0, %v3509
      %v3511 = vpop.f32.mrf.mxu0
      %3512 = vmatprep.mubr.bf16.mxu0 0
      %3513 = vmatmul.mubr.bf16.gmra.mxu0 %v963
      %v3514 = vpop.f32.mrf.mxu0
      %v3515 = vadd.f32 0.0, %v3514
      %v3516 = vpop.f32.mrf.mxu0
      %v3517 = vpop.f32.mrf.mxu0
      %v3518 = vadd.f32 0.0, %v3517
      %v3519 = vpop.f32.mrf.mxu0
      %3520 = vmatprep.mubr.bf16.mxu0 0
      %3521 = vmatmul.mubr.bf16.gmra.mxu0 %v964
      %v3522 = vpop.f32.mrf.mxu0
      %v3523 = vadd.f32 0.0, %v3522
      %v3524 = vpop.f32.mrf.mxu0
      %v3525 = vpop.f32.mrf.mxu0
      %v3526 = vadd.f32 0.0, %v3525
      %v3527 = vpop.f32.mrf.mxu0
      %3528 = vmatprep.mubr.bf16.mxu0 0
      %3529 = vmatmul.mubr.bf16.gmra.mxu0 %v965
      %v3530 = vpop.f32.mrf.mxu0
      %v3531 = vadd.f32 0.0, %v3530
      %v3532 = vpop.f32.mrf.mxu0
      %v3533 = vpop.f32.mrf.mxu0
      %v3534 = vadd.f32 0.0, %v3533
      %v3535 = vpop.f32.mrf.mxu0
      %3536 = vmatprep.mubr.bf16.mxu0 0
      %3537 = vmatmul.mubr.bf16.gmra.mxu0 %v966
      %v3538 = vpop.f32.mrf.mxu0
      %v3539 = vadd.f32 0.0, %v3538
      %v3540 = vpop.f32.mrf.mxu0
      %v3541 = vpop.f32.mrf.mxu0
      %v3542 = vadd.f32 0.0, %v3541
      %v3543 = vpop.f32.mrf.mxu0
      %3544 = vmatprep.mubr.bf16.mxu0 0
      %3545 = vmatmul.mubr.bf16.gmra.mxu0 %v967
      %v3546 = vpop.f32.mrf.mxu0
      %v3547 = vadd.f32 0.0, %v3546
      %v3548 = vpop.f32.mrf.mxu0
      %v3549 = vpop.f32.mrf.mxu0
      %v3550 = vadd.f32 0.0, %v3549
      %v3551 = vpop.f32.mrf.mxu0
      %3552 = vmatprep.mubr.bf16.mxu0 0
      %3553 = vmatmul.mubr.bf16.gmra.mxu0 %v968
      %v3554 = vpop.f32.mrf.mxu0
      %v3555 = vadd.f32 0.0, %v3554
      %v3556 = vpop.f32.mrf.mxu0
      %v3557 = vpop.f32.mrf.mxu0
      %v3558 = vadd.f32 0.0, %v3557
      %v3559 = vpop.f32.mrf.mxu0
      %3560 = vmatprep.mubr.bf16.mxu0 0
      %3561 = vmatmul.mubr.bf16.gmra.mxu0 %v969
      %v3562 = vpop.f32.mrf.mxu0
      %v3563 = vadd.f32 0.0, %v3562
      %v3564 = vpop.f32.mrf.mxu0
      %v3565 = vpop.f32.mrf.mxu0
      %v3566 = vadd.f32 0.0, %v3565
      %v3567 = vpop.f32.mrf.mxu0
      %3568 = vmatprep.mubr.bf16.mxu0 0
      %3569 = vmatmul.mubr.bf16.gmra.mxu0 %v970
      %v3570 = vpop.f32.mrf.mxu0
      %v3571 = vadd.f32 0.0, %v3570
      %v3572 = vpop.f32.mrf.mxu0
      %v3573 = vpop.f32.mrf.mxu0
      %v3574 = vadd.f32 0.0, %v3573
      %v3575 = vpop.f32.mrf.mxu0
      %3576 = vmatprep.mubr.bf16.mxu0 0
      %3577 = vmatmul.mubr.bf16.gmra.mxu0 %v1291
      %v3578 = vpop.f32.mrf.mxu0
      %v3579 = vadd.f32 0.0, %v3578
      %v3580 = vpop.f32.mrf.mxu0
      %v3581 = vpop.f32.mrf.mxu0
      %v3582 = vadd.f32 0.0, %v3581
      %v3583 = vpop.f32.mrf.mxu0
      %3584 = vmatprep.mubr.bf16.mxu0 0
      %3585 = vmatmul.mubr.bf16.gmra.mxu0 %v1292
      %v3586 = vpop.f32.mrf.mxu0
      %v3587 = vadd.f32 0.0, %v3586
      %v3588 = vpop.f32.mrf.mxu0
      %v3589 = vpop.f32.mrf.mxu0
      %v3590 = vadd.f32 0.0, %v3589
      %v3591 = vpop.f32.mrf.mxu0
      %3592 = vmatprep.mubr.bf16.mxu0 0
      %3593 = vmatmul.mubr.bf16.gmra.mxu0 %v1293
      %v3594 = vpop.f32.mrf.mxu0
      %v3595 = vadd.f32 0.0, %v3594
      %v3596 = vpop.f32.mrf.mxu0
      %v3597 = vpop.f32.mrf.mxu0
      %v3598 = vadd.f32 0.0, %v3597
      %v3599 = vpop.f32.mrf.mxu0
      %3600 = vdwg.mxu0
      %v3601 = vadd.f32 %v3121, %v3411
      %v3602 = vadd.f32 %v3124, %v3414
      %v3603 = vadd.f32 %v3129, %v3419
      %v3604 = vadd.f32 %v3132, %v3422
      %v3605 = vadd.f32 %v3137, %v3427
      %v3606 = vadd.f32 %v3140, %v3430
      %v3607 = vadd.f32 %v3145, %v3435
      %v3608 = vadd.f32 %v3148, %v3438
      %v3609 = vadd.f32 %v3153, %v3443
      %v3610 = vadd.f32 %v3156, %v3446
      %v3611 = vadd.f32 %v3161, %v3451
      %v3612 = vadd.f32 %v3164, %v3454
      %v3613 = vadd.f32 %v3169, %v3459
      %v3614 = vadd.f32 %v3172, %v3462
      %v3615 = vadd.f32 %v3177, %v3467
      %v3616 = vadd.f32 %v3180, %v3470
      %v3617 = vadd.f32 %v3185, %v3475
      %v3618 = vadd.f32 %v3188, %v3478
      %v3619 = vadd.f32 %v3193, %v3483
      %v3620 = vadd.f32 %v3196, %v3486
      %v3621 = vadd.f32 %v3201, %v3491
      %v3622 = vadd.f32 %v3204, %v3494
      %v3623 = vadd.f32 %v3209, %v3499
      %v3624 = vadd.f32 %v3212, %v3502
      %v3625 = vadd.f32 %v3217, %v3507
      %v3626 = vadd.f32 %v3220, %v3510
      %v3627 = vadd.f32 %v3225, %v3515
      %v3628 = vadd.f32 %v3228, %v3518
      %v3629 = vadd.f32 %v3233, %v3523
      %v3630 = vadd.f32 %v3236, %v3526
      %v3631 = vadd.f32 %v3241, %v3531
      %v3632 = vadd.f32 %v3244, %v3534
      %v3633 = vadd.f32 %v3249, %v3539
      %v3634 = vadd.f32 %v3252, %v3542
      %v3635 = vadd.f32 %v3257, %v3547
      %v3636 = vadd.f32 %v3260, %v3550
      %v3637 = vadd.f32 %v3265, %v3555
      %v3638 = vadd.f32 %v3268, %v3558
      %v3639 = vadd.f32 %v3273, %v3563
      %v3640 = vadd.f32 %v3276, %v3566
      %v3641 = vadd.f32 %v3281, %v3571
      %v3642 = vadd.f32 %v3284, %v3574
      %v3643 = vadd.f32 %v3289, %v3579
      %v3644 = vadd.f32 %v3292, %v3582
      %v3645 = vadd.f32 %v3297, %v3587
      %v3646 = vadd.f32 %v3300, %v3590
      %v3647 = vadd.f32 %v3305, %v3595
      %v3648 = vadd.f32 %v3308, %v3598
      %v3649 = vrot.slane %v3601, 2
      %v3650 = vrot.slane %v3602, 2
      %v3651 = vrot.slane %v3603, 2
      %v3652 = vrot.slane %v3604, 2
      %v3653 = vrot.slane %v3605, 2
      %v3654 = vrot.slane %v3606, 2
      %v3655 = vrot.slane %v3607, 2
      %v3656 = vrot.slane %v3608, 2
      %v3657 = vrot.slane %v3609, 2
      %v3658 = vrot.slane %v3610, 2
      %v3659 = vrot.slane %v3611, 2
      %v3660 = vrot.slane %v3612, 2
      %v3661 = vrot.slane %v3613, 2
      %v3662 = vrot.slane %v3614, 2
      %v3663 = vrot.slane %v3615, 2
      %v3664 = vrot.slane %v3616, 2
      %v3665 = vrot.slane %v3617, 2
      %v3666 = vrot.slane %v3618, 2
      %v3667 = vrot.slane %v3619, 2
      %v3668 = vrot.slane %v3620, 2
      %v3669 = vrot.slane %v3621, 2
      %v3670 = vrot.slane %v3622, 2
      %v3671 = vrot.slane %v3623, 2
      %v3672 = vrot.slane %v3624, 2
      %v3673 = vrot.slane %v3625, 2
      %v3674 = vrot.slane %v3626, 2
      %v3675 = vrot.slane %v3627, 2
      %v3676 = vrot.slane %v3628, 2
      %v3677 = vrot.slane %v3629, 2
      %v3678 = vrot.slane %v3630, 2
      %v3679 = vrot.slane %v3631, 2
      %v3680 = vrot.slane %v3632, 2
      %v3681 = vrot.slane %v3633, 2
      %v3682 = vrot.slane %v3634, 2
      %v3683 = vrot.slane %v3635, 2
      %v3684 = vrot.slane %v3636, 2
      %v3685 = vrot.slane %v3637, 2
      %v3686 = vrot.slane %v3638, 2
      %v3687 = vrot.slane %v3639, 2
      %v3688 = vrot.slane %v3640, 2
      %v3689 = vrot.slane %v3641, 2
      %v3690 = vrot.slane %v3642, 2
      %v3691 = vrot.slane %v3643, 2
      %v3692 = vrot.slane %v3644, 2
      %v3693 = vrot.slane %v3645, 2
      %v3694 = vrot.slane %v3646, 2
      %v3695 = vrot.slane %v3647, 2
      %v3696 = vrot.slane %v3648, 2
      %vm3697 = vcmp.lt.s32.totalorder %v2633, 6
      %v3698 = vsel %vm3697, %v3695, %v3696
      %v3699 = vsel %vm3697, %v3694, %v3695
      %v3700 = vsel %vm3697, %v3693, %v3694
      %v3701 = vsel %vm3697, %v3692, %v3693
      %v3702 = vsel %vm3697, %v3691, %v3692
      %v3703 = vsel %vm3697, %v3690, %v3691
      %v3704 = vsel %vm3697, %v3689, %v3690
      %v3705 = vsel %vm3697, %v3688, %v3689
      %v3706 = vsel %vm3697, %v3687, %v3688
      %v3707 = vsel %vm3697, %v3686, %v3687
      %v3708 = vsel %vm3697, %v3685, %v3686
      %v3709 = vsel %vm3697, %v3684, %v3685
      %v3710 = vsel %vm3697, %v3683, %v3684
      %v3711 = vsel %vm3697, %v3682, %v3683
      %v3712 = vsel %vm3697, %v3681, %v3682
      %v3713 = vsel %vm3697, %v3680, %v3681
      %v3714 = vsel %vm3697, %v3679, %v3680
      %v3715 = vsel %vm3697, %v3678, %v3679
      %v3716 = vsel %vm3697, %v3677, %v3678
      %v3717 = vsel %vm3697, %v3676, %v3677
      %v3718 = vsel %vm3697, %v3675, %v3676
      %v3719 = vsel %vm3697, %v3674, %v3675
      %v3720 = vsel %vm3697, %v3673, %v3674
      %v3721 = vsel %vm3697, %v3672, %v3673
      %v3722 = vsel %vm3697, %v3671, %v3672
      %v3723 = vsel %vm3697, %v3670, %v3671
      %v3724 = vsel %vm3697, %v3669, %v3670
      %v3725 = vsel %vm3697, %v3668, %v3669
      %v3726 = vsel %vm3697, %v3667, %v3668
      %v3727 = vsel %vm3697, %v3666, %v3667
      %v3728 = vsel %vm3697, %v3665, %v3666
      %v3729 = vsel %vm3697, %v3664, %v3665
      %v3730 = vsel %vm3697, %v3663, %v3664
      %v3731 = vsel %vm3697, %v3662, %v3663
      %v3732 = vsel %vm3697, %v3661, %v3662
      %v3733 = vsel %vm3697, %v3660, %v3661
      %v3734 = vsel %vm3697, %v3659, %v3660
      %v3735 = vsel %vm3697, %v3658, %v3659
      %v3736 = vsel %vm3697, %v3657, %v3658
      %v3737 = vsel %vm3697, %v3656, %v3657
      %v3738 = vsel %vm3697, %v3655, %v3656
      %v3739 = vsel %vm3697, %v3654, %v3655
      %v3740 = vsel %vm3697, %v3653, %v3654
      %v3741 = vsel %vm3697, %v3652, %v3653
      %v3742 = vsel %vm3697, %v3651, %v3652
      %v3743 = vsel %vm3697, %v3650, %v3651
      %v3744 = vsel %vm3697, %v3649, %v3650
      %v3745 = vsel %vm3697, %v3696, %v3649
      %v3746 = vadd.f32 %v2683, %v3744
      %v3747 = vadd.f32 %v2684, %v3743
      %v3748 = vadd.f32 %v2685, %v3742
      %v3749 = vadd.f32 %v2686, %v3741
      %v3750 = vadd.f32 %v2687, %v3740
      %v3751 = vadd.f32 %v2688, %v3739
      %v3752 = vadd.f32 %v2689, %v3738
      %v3753 = vadd.f32 %v2690, %v3737
      %v3754 = vadd.f32 %v2691, %v3736
      %v3755 = vadd.f32 %v2692, %v3735
      %v3756 = vadd.f32 %v2693, %v3734
      %v3757 = vadd.f32 %v2694, %v3733
      %v3758 = vadd.f32 %v2695, %v3732
      %v3759 = vadd.f32 %v2696, %v3731
      %v3760 = vadd.f32 %v2697, %v3730
      %v3761 = vadd.f32 %v2698, %v3729
      %v3762 = vadd.f32 %v2699, %v3728
      %v3763 = vadd.f32 %v2700, %v3727
      %v3764 = vadd.f32 %v2701, %v3726
      %v3765 = vadd.f32 %v2702, %v3725
      %v3766 = vadd.f32 %v2703, %v3724
      %v3767 = vadd.f32 %v2704, %v3723
      %v3768 = vadd.f32 %v2705, %v3722
      %v3769 = vadd.f32 %v2706, %v3721
      %v3770 = vadd.f32 %v2707, %v3720
      %v3771 = vadd.f32 %v2708, %v3719
      %v3772 = vadd.f32 %v2709, %v3718
      %v3773 = vadd.f32 %v2710, %v3717
      %v3774 = vadd.f32 %v2711, %v3716
      %v3775 = vadd.f32 %v2712, %v3715
      %v3776 = vadd.f32 %v2713, %v3714
      %v3777 = vadd.f32 %v2714, %v3713
      %v3778 = vadd.f32 %v2715, %v3712
      %v3779 = vadd.f32 %v2716, %v3711
      %v3780 = vadd.f32 %v2717, %v3710
      %v3781 = vadd.f32 %v2718, %v3709
      %v3782 = vadd.f32 %v2719, %v3708
      %v3783 = vadd.f32 %v2720, %v3707
      %v3784 = vadd.f32 %v2721, %v3706
      %v3785 = vadd.f32 %v2722, %v3705
      %v3786 = vadd.f32 %v2723, %v3704
      %v3787 = vadd.f32 %v2724, %v3703
      %v3788 = vadd.f32 %v2725, %v3702
      %v3789 = vadd.f32 %v2726, %v3701
      %v3790 = vadd.f32 %v2727, %v3700
      %v3791 = vadd.f32 %v2728, %v3699
      %v3792 = vadd.f32 %v2729, %v3698
      %v3793 = vadd.f32 %v2730, %v3745
      %v3794 = vmax.f32 %v3746, 0.0
      %v3795 = vmax.f32 %v3747, 0.0
      %v3796 = vmax.f32 %v3748, 0.0
      %v3797 = vmax.f32 %v3749, 0.0
      %v3798 = vmax.f32 %v3750, 0.0
      %v3799 = vmax.f32 %v3751, 0.0
      %v3800 = vmax.f32 %v3752, 0.0
      %v3801 = vmax.f32 %v3753, 0.0
      %v3802 = vmax.f32 %v3754, 0.0
      %v3803 = vmax.f32 %v3755, 0.0
      %v3804 = vmax.f32 %v3756, 0.0
      %v3805 = vmax.f32 %v3757, 0.0
      %v3806 = vmax.f32 %v3758, 0.0
      %v3807 = vmax.f32 %v3759, 0.0
      %v3808 = vmax.f32 %v3760, 0.0
      %v3809 = vmax.f32 %v3761, 0.0
      %v3810 = vmax.f32 %v3762, 0.0
      %v3811 = vmax.f32 %v3763, 0.0
      %v3812 = vmax.f32 %v3764, 0.0
      %v3813 = vmax.f32 %v3765, 0.0
      %v3814 = vmax.f32 %v3766, 0.0
      %v3815 = vmax.f32 %v3767, 0.0
      %v3816 = vmax.f32 %v3768, 0.0
      %v3817 = vmax.f32 %v3769, 0.0
      %v3818 = vmax.f32 %v3770, 0.0
      %v3819 = vmax.f32 %v3771, 0.0
      %v3820 = vmax.f32 %v3772, 0.0
      %v3821 = vmax.f32 %v3773, 0.0
      %v3822 = vmax.f32 %v3774, 0.0
      %v3823 = vmax.f32 %v3775, 0.0
      %v3824 = vmax.f32 %v3776, 0.0
      %v3825 = vmax.f32 %v3777, 0.0
      %v3826 = vmax.f32 %v3778, 0.0
      %v3827 = vmax.f32 %v3779, 0.0
      %v3828 = vmax.f32 %v3780, 0.0
      %v3829 = vmax.f32 %v3781, 0.0
      %v3830 = vmax.f32 %v3782, 0.0
      %v3831 = vmax.f32 %v3783, 0.0
      %v3832 = vmax.f32 %v3784, 0.0
      %v3833 = vmax.f32 %v3785, 0.0
      %v3834 = vmax.f32 %v3786, 0.0
      %v3835 = vmax.f32 %v3787, 0.0
      %v3836 = vmax.f32 %v3788, 0.0
      %v3837 = vmax.f32 %v3789, 0.0
      %v3838 = vmax.f32 %v3790, 0.0
      %v3839 = vmax.f32 %v3791, 0.0
      %v3840 = vmax.f32 %v3792, 0.0
      %v3841 = vmax.f32 %v3793, 0.0
      %v3842 = vpack.c.bf16 %v3795, %v3794
      %v3843 = vpack.c.bf16 %v3796, %v3796
      %v3844 = vpack.c.bf16 %v3798, %v3797
      %v3845 = vpack.c.bf16 %v3799, %v3799
      %v3846 = vpack.c.bf16 %v3801, %v3800
      %v3847 = vpack.c.bf16 %v3802, %v3802
      %v3848 = vpack.c.bf16 %v3804, %v3803
      %v3849 = vpack.c.bf16 %v3805, %v3805
      %v3850 = vpack.c.bf16 %v3807, %v3806
      %v3851 = vpack.c.bf16 %v3808, %v3808
      %v3852 = vpack.c.bf16 %v3810, %v3809
      %v3853 = vpack.c.bf16 %v3811, %v3811
      %v3854 = vpack.c.bf16 %v3813, %v3812
      %v3855 = vpack.c.bf16 %v3814, %v3814
      %v3856 = vpack.c.bf16 %v3816, %v3815
      %v3857 = vpack.c.bf16 %v3817, %v3817
      %v3858 = vpack.c.bf16 %v3819, %v3818
      %v3859 = vpack.c.bf16 %v3820, %v3820
      %v3860 = vpack.c.bf16 %v3822, %v3821
      %v3861 = vpack.c.bf16 %v3823, %v3823
      %v3862 = vpack.c.bf16 %v3825, %v3824
      %v3863 = vpack.c.bf16 %v3826, %v3826
      %v3864 = vpack.c.bf16 %v3828, %v3827
      %v3865 = vpack.c.bf16 %v3829, %v3829
      %v3866 = vpack.c.bf16 %v3831, %v3830
      %v3867 = vpack.c.bf16 %v3832, %v3832
      %v3868 = vpack.c.bf16 %v3834, %v3833
      %v3869 = vpack.c.bf16 %v3835, %v3835
      %v3870 = vpack.c.bf16 %v3837, %v3836
      %v3871 = vpack.c.bf16 %v3838, %v3838
      %v3872 = vpack.c.bf16 %v3840, %v3839
      %v3873 = vpack.c.bf16 %v3841, %v3841
      %v3906 = vunpack.c.l.b16 %v3842
      %v3907 = vunpack.c.h.b16 %v3842
      %v3908 = vunpack.c.l.b16 %v3843
      %v3909 = vunpack.c.l.b16 %v3844
      %v3910 = vunpack.c.h.b16 %v3844
      %v3911 = vunpack.c.l.b16 %v3845
      %v3912 = vunpack.c.l.b16 %v3846
      %v3913 = vunpack.c.h.b16 %v3846
      %v3914 = vunpack.c.l.b16 %v3847
      %v3915 = vunpack.c.l.b16 %v3848
      %v3916 = vunpack.c.h.b16 %v3848
      %v3917 = vunpack.c.l.b16 %v3849
      %v3918 = vunpack.c.l.b16 %v3850
      %v3919 = vunpack.c.h.b16 %v3850
      %v3920 = vunpack.c.l.b16 %v3851
      %v3921 = vunpack.c.l.b16 %v3852
      %v3922 = vunpack.c.h.b16 %v3852
      %v3923 = vunpack.c.l.b16 %v3853
      %v3924 = vunpack.c.l.b16 %v3854
      %v3925 = vunpack.c.h.b16 %v3854
      %v3926 = vunpack.c.l.b16 %v3855
      %v3927 = vunpack.c.l.b16 %v3856
      %v3928 = vunpack.c.h.b16 %v3856
      %v3929 = vunpack.c.l.b16 %v3857
      %v3930 = vunpack.c.l.b16 %v3858
      %v3931 = vunpack.c.h.b16 %v3858
      %v3932 = vunpack.c.l.b16 %v3859
      %v3933 = vunpack.c.l.b16 %v3860
      %v3934 = vunpack.c.h.b16 %v3860
      %v3935 = vunpack.c.l.b16 %v3861
      %v3936 = vunpack.c.l.b16 %v3862
      %v3937 = vunpack.c.h.b16 %v3862
      %v3938 = vunpack.c.l.b16 %v3863
      %v3939 = vunpack.c.l.b16 %v3864
      %v3940 = vunpack.c.h.b16 %v3864
      %v3941 = vunpack.c.l.b16 %v3865
      %v3942 = vunpack.c.l.b16 %v3866
      %v3943 = vunpack.c.h.b16 %v3866
      %v3944 = vunpack.c.l.b16 %v3867
      %v3945 = vunpack.c.l.b16 %v3868
      %v3946 = vunpack.c.h.b16 %v3868
      %v3947 = vunpack.c.l.b16 %v3869
      %v3948 = vunpack.c.l.b16 %v3870
      %v3949 = vunpack.c.h.b16 %v3870
      %v3950 = vunpack.c.l.b16 %v3871
      %v3951 = vunpack.c.l.b16 %v3872
      %v3952 = vunpack.c.h.b16 %v3872
      %v3953 = vunpack.c.l.b16 %v3873
      %v3954 = vpack.c.b16 %v3906, %v3906
      %v3955 = vpack.c.b16 %v3907, %v3907
      %v3956 = vpack.c.b16 %v3908, %v3908
      %v3957 = vpack.c.b16 %v3909, %v3909
      %v3958 = vpack.c.b16 %v3910, %v3910
      %v3959 = vpack.c.b16 %v3911, %v3911
      %v3960 = vpack.c.b16 %v3912, %v3912
      %v3961 = vpack.c.b16 %v3913, %v3913
      %v3962 = vpack.c.b16 %v3914, %v3914
      %v3963 = vpack.c.b16 %v3915, %v3915
      %v3964 = vpack.c.b16 %v3916, %v3916
      %v3965 = vpack.c.b16 %v3917, %v3917
      %v3966 = vpack.c.b16 %v3918, %v3918
      %v3967 = vpack.c.b16 %v3919, %v3919
      %v3968 = vpack.c.b16 %v3920, %v3920
      %v3969 = vpack.c.b16 %v3921, %v3921
      %v3970 = vpack.c.b16 %v3922, %v3922
      %v3971 = vpack.c.b16 %v3923, %v3923
      %v3972 = vpack.c.b16 %v3924, %v3924
      %v3973 = vpack.c.b16 %v3925, %v3925
      %v3974 = vpack.c.b16 %v3926, %v3926
      %v3975 = vpack.c.b16 %v3927, %v3927
      %v3976 = vpack.c.b16 %v3928, %v3928
      %v3977 = vpack.c.b16 %v3929, %v3929
      %v3978 = vpack.c.b16 %v3930, %v3930
      %v3979 = vpack.c.b16 %v3931, %v3931
      %v3980 = vpack.c.b16 %v3932, %v3932
      %v3981 = vpack.c.b16 %v3933, %v3933
      %v3982 = vpack.c.b16 %v3934, %v3934
      %v3983 = vpack.c.b16 %v3935, %v3935
      %v3984 = vpack.c.b16 %v3936, %v3936
      %v3985 = vpack.c.b16 %v3937, %v3937
      %v3986 = vpack.c.b16 %v3938, %v3938
      %v3987 = vpack.c.b16 %v3939, %v3939
      %v3988 = vpack.c.b16 %v3940, %v3940
      %v3989 = vpack.c.b16 %v3941, %v3941
      %v3990 = vpack.c.b16 %v3942, %v3942
      %v3991 = vpack.c.b16 %v3943, %v3943
      %v3992 = vpack.c.b16 %v3944, %v3944
      %v3993 = vpack.c.b16 %v3945, %v3945
      %v3994 = vpack.c.b16 %v3946, %v3946
      %v3995 = vpack.c.b16 %v3947, %v3947
      %v3996 = vpack.c.b16 %v3948, %v3948
      %v3997 = vpack.c.b16 %v3949, %v3949
      %v3998 = vpack.c.b16 %v3950, %v3950
      %v3999 = vpack.c.b16 %v3951, %v3951
      %v4000 = vpack.c.b16 %v3952, %v3952
      %v4001 = vpack.c.b16 %v3953, %v3953
      %4050 = vst [vmem:[%s318] sm:$0xf] %v3954
      %4051 = vst [vmem:[%s318 + $0x4] sm:$0xf] %v3955
      %4052 = vst [vmem:[%s318 + $0x8] sm:$0xf] %v3956
      %4053 = vst [vmem:[%s318 + $0xc] sm:$0xf] %v3957
      %4054 = vst [vmem:[%s318 + $0x10] sm:$0xf] %v3958
      %4055 = vst [vmem:[%s318 + $0x14] sm:$0xf] %v3959
      %4056 = vst [vmem:[%s318 + $0x18] sm:$0xf] %v3960
      %4057 = vst [vmem:[%s318 + $0x1c] sm:$0xf] %v3961
      %4058 = vst [vmem:[%s318 + $0x20] sm:$0xf] %v3962
      %4059 = vst [vmem:[%s318 + $0x24] sm:$0xf] %v3963
      %4060 = vst [vmem:[%s318 + $0x28] sm:$0xf] %v3964
      %4061 = vst [vmem:[%s318 + $0x2c] sm:$0xf] %v3965
      %4062 = vst [vmem:[%s318 + $0x30] sm:$0xf] %v3966
      %4063 = vst [vmem:[%s318 + $0x34] sm:$0xf] %v3967
      %4064 = vst [vmem:[%s318 + $0x38] sm:$0xf] %v3968
      %4065 = vst [vmem:[%s318 + $0x3c] sm:$0xf] %v3969
      %4066 = vst [vmem:[%s318 + $0x40] sm:$0xf] %v3970
      %4067 = vst [vmem:[%s318 + $0x44] sm:$0xf] %v3971
      %4068 = vst [vmem:[%s318 + $0x48] sm:$0xf] %v3972
      %4069 = vst [vmem:[%s318 + $0x4c] sm:$0xf] %v3973
      %4070 = vst [vmem:[%s318 + $0x50] sm:$0xf] %v3974
      %4071 = vst [vmem:[%s318 + $0x54] sm:$0xf] %v3975
      %4072 = vst [vmem:[%s318 + $0x58] sm:$0xf] %v3976
      %4073 = vst [vmem:[%s318 + $0x5c] sm:$0xf] %v3977
      %4074 = vst [vmem:[%s318 + $0x60] sm:$0xf] %v3978
      %4075 = vst [vmem:[%s318 + $0x64] sm:$0xf] %v3979
      %4076 = vst [vmem:[%s318 + $0x68] sm:$0xf] %v3980
      %4077 = vst [vmem:[%s318 + $0x6c] sm:$0xf] %v3981
      %4078 = vst [vmem:[%s318 + $0x70] sm:$0xf] %v3982
      %4079 = vst [vmem:[%s318 + $0x74] sm:$0xf] %v3983
      %4080 = vst [vmem:[%s318 + $0x78] sm:$0xf] %v3984
      %4081 = vst [vmem:[%s318 + $0x7c] sm:$0xf] %v3985
      %4082 = vst [vmem:[%s318 + $0x80] sm:$0xf] %v3986
      %4083 = vst [vmem:[%s318 + $0x84] sm:$0xf] %v3987
      %4084 = vst [vmem:[%s318 + $0x88] sm:$0xf] %v3988
      %4085 = vst [vmem:[%s318 + $0x8c] sm:$0xf] %v3989
      %4086 = vst [vmem:[%s318 + $0x90] sm:$0xf] %v3990
      %4087 = vst [vmem:[%s318 + $0x94] sm:$0xf] %v3991
      %4088 = vst [vmem:[%s318 + $0x98] sm:$0xf] %v3992
      %4089 = vst [vmem:[%s318 + $0x9c] sm:$0xf] %v3993
      %4090 = vst [vmem:[%s318 + $0xa0] sm:$0xf] %v3994
      %4091 = vst [vmem:[%s318 + $0xa4] sm:$0xf] %v3995
      %4092 = vst [vmem:[%s318 + $0xa8] sm:$0xf] %v3996
      %4093 = vst [vmem:[%s318 + $0xac] sm:$0xf] %v3997
      %4094 = vst [vmem:[%s318 + $0xb0] sm:$0xf] %v3998
      %4095 = vst [vmem:[%s318 + $0xb4] sm:$0xf] %v3999
      %4096 = vst [vmem:[%s318 + $0xb8] sm:$0xf] %v4000
      %4097 = vst [vmem:[%s318 + $0xbc] sm:$0xf] %v4001
      %s4098 = smul.u32 16, %s20
      %p4099 = scmp.lt.s32.totalorder %s19, 1
      %s4100 = scalar_select %p4099, %s19, 1
      %p4101 = scmp.lt.s32.totalorder %s4098, 15
      %s4102 = scalar_select %p4101, %s4098, 15
      %s4103 = smul.addr %s4102, 3
      %s4104 = smul.addr %s4100, 48
      %s4105 = sadd.s32 %s4103, %s4104
      %s4106 = smul.addr %s4105, 4
      %s4107 = scalar_lea.vmem %s4, %s4106
      // Predicated region
      $region37: #{up_block_forward.3} parent=35 // pred_check
        %p4108 = pneg %p149
      $region38: #{up_block_forward.3} parent=35 // pred_check_branch
        %4110 = sbr.rel (%p4108) target = $region40
      $region39: #{up_block_forward.3} parent=35 // pred_region
        %s4111 = smul.u32 16, %s20
      $region40: #{up_block_forward.3} parent=35 // pred_fallthru
        _
    $region36: #{up_block_forward.3} parent=5 // pred_fallthru
      _
    %p4112 = scmp.le.s32.totalorder 2, %s10
    // Predicated region
    $region41: #{up_block_forward.3} parent=5 // pred_check
      %p4113 = pneg %p4112
    $region42: #{up_block_forward.3} parent=5 // pred_check_branch
      %4115 = sbr.rel (%p4113) target = $region44
    $region43: #{up_block_forward.3} parent=5 // pred_region
      %s4116 = ssub.s32 %s10, 2
      // Predicated region
      $region45: #{up_block_forward.3} parent=43 // pred_check
        %p4117 = pneg %p155
      $region46: #{up_block_forward.3} parent=43 // pred_check_branch
        %4119 = sbr.rel (%p4117) target = $region48
      $region47: #{up_block_forward.3} parent=43 // pred_region
        %s4120 = smul.u32 16, %s22
        %p4121 = scmp.lt.s32.totalorder %s21, 1
        %s4122 = scalar_select %p4121, %s21, 1
        %p4123 = scmp.lt.s32.totalorder %s4120, 15
        %s4124 = scalar_select %p4123, %s4120, 15
        %s4125 = smul.addr %s4124, 3
        %s4126 = smul.addr %s4122, 48
        %s4127 = sadd.s32 %s4125, %s4126
        %s4128 = smul.addr %s4127, 4
        %s4129 = scalar_lea.vmem %s4, %s4128
      $region48: #{up_block_forward.3} parent=43 // pred_fallthru
        _
    $region44: #{up_block_forward.3} parent=5 // pred_fallthru
      _
  $region6: #{up_block_forward.3} parent=0 // loop_footer
    %s14 = sadd.s32 1, %s10
  $region7: #{up_block_forward.3} parent=0 // loop_footer_branch
    %9 = sbr.rel target = $region3
  $region8: #{up_block_forward.3} parent=0 // loop_exit
    _

</llo_original>
